<compile_context>
chip_gen: v5e
topology: v5e:2x2
jax: 0.10.0
libtpu: 0.0.40
codegen_flags: <defaults>
</compile_context>

<pallas_src>
import jax
import jax.numpy as jnp
import numpy as np
from jax import lax
from jax.experimental import pallas as pl
from jax.experimental.pallas import tpu as pltpu

# Per-step working-set target.  Conservative so the same choice fits v7x
# (64 MiB physical / 32 MiB scoped) as well as v5e/v6e (128 MiB physical);
# raise on v5e/v6e together with vmem_limit_bytes for bigger strips.
VMEM_BUDGET_BYTES = 8 * 1024 * 1024


def _pick_strip_rows(h, w, cin, c4, g, vmem_budget_bytes):
    """Strip height from a VMEM budget (largest divisor of h under the budget)."""
    per_row = (
        2 * w * cin * 4            # x strip block, f32, double-buffered
        + 2 * w * (cin + g) * 4    # fused output block, f32, double-buffered
        + (w + 2) * c4 * 2         # width-padded y scratch, bf16
        + w * c4 * 2               # per-tap matmul operand, bf16
        + 2 * w * g * 4            # f32 accumulator + conv result
    )
    th = int(max(1, min(h, vmem_budget_bytes // max(per_row, 1))))
    # Kernel assumes H % th == 0 (no tail masking) -> round down to a divisor of H.
    while h % th:
        th -= 1
    # Note (v7x): with 2 TCs keep B * (H // th) comfortably above the pipeline depth
    # so both cores stay busy; at DSOD image sizes this is always satisfied.
    return th


# -----------------------------------------------------------------------------
# Fused kernel: one (batch, row-strip) tile per grid step.
#   x_top / x_mid / x_bot : halo row above / strip rows / halo row below (NHWC slices of x)
#   s1, sh1               : BN1 scale / shift                  (1, Cin)    f32
#   w1                    : 1x1 conv weight (transposed)       (Cin, C4)   bf16
#   s2, b_eff             : BN2 scale / (b1*s2 + sh2)          (1, C4)     f32
#   w2                    : 3x3 taps, (ky*3+kx, C4, G)                     bf16
#   b2                    : conv2 bias                         (1, G)      f32
#   out                   : fused [x | conv] strip             (1, th, W, Cin+G) f32
#   yp                    : width-padded y scratch             (th+2, W+2, C4)   bf16
# -----------------------------------------------------------------------------
def _bottleneck_fused_kernel(x_top_ref, x_mid_ref, x_bot_ref,
                             s1_ref, sh1_ref, w1_ref, s2_ref, b_eff_ref,
                             w2_ref, b2_ref, out_ref, yp_ref):
    _, th, wd, cin = x_mid_ref.shape
    c4 = w1_ref.shape[1]
    g = w2_ref.shape[2]

    i = pl.program_id(1)
    n = pl.num_programs(1)

    s1 = s1_ref[...]
    sh1 = sh1_ref[...]
    w1 = w1_ref[...]
    s2 = s2_ref[...]
    b_eff = b_eff_ref[...]

    def conv1(x2d):
        # BN1 + ReLU in f32, bf16 MXU operands, BN2 scale/shift applied in f32.
        xh = jnp.maximum(x2d * s1 + sh1, 0.0).astype(jnp.bfloat16)
        yf = jnp.dot(xh, w1, preferred_element_type=jnp.float32)
        return jnp.maximum(yf * s2 + b_eff, 0.0).astype(jnp.bfloat16)

    # Zero the two width-pad columns (tiny stores; interior is fully rewritten below).
    yp_ref[:, pl.ds(0, 1), :] = jnp.zeros((th + 2, 1, c4), jnp.bfloat16)
    yp_ref[:, pl.ds(wd + 1, 1), :] = jnp.zeros((th + 2, 1, c4), jnp.bfloat16)

    # Strip body: BN1+ReLU + 1x1 conv (+BN2+ReLU) -> interior rows 1..th of yp.
    x_mid = x_mid_ref[0]                                     # (th, W, Cin) f32
    y_mid = conv1(x_mid.reshape(th * wd, cin))               # (th*W, C4)  bf16
    yp_ref[pl.ds(1, th), pl.ds(1, wd), :] = y_mid.reshape(th, wd, c4)

    # Halo rows (recomputed 1x1 path for one row above/below the strip).
    y_top = conv1(x_top_ref[0, 0])                           # (W, C4)
    y_bot = conv1(x_bot_ref[0, 0])
    yp_ref[pl.ds(0, 1), pl.ds(1, wd), :] = y_top.reshape(1, wd, c4)
    yp_ref[pl.ds(th + 1, 1), pl.ds(1, wd), :] = y_bot.reshape(1, wd, c4)

    # conv2's zero padding applies to y: border strips zero their halo row only.
    @pl.when(i == 0)
    def _():
        yp_ref[pl.ds(0, 1), :, :] = jnp.zeros((1, wd + 2, c4), jnp.bfloat16)

    @pl.when(i == n - 1)
    def _():
        yp_ref[pl.ds(th + 1, 1), :, :] = jnp.zeros((1, wd + 2, c4), jnp.bfloat16)

    # 3x3 conv as 9 shifted-window matmuls (K = C4), f32 accumulation.
    # (Copy-light variant; on v6e/v7x the kx/ky taps can be folded into K instead.)
    acc = jnp.zeros((th * wd, g), jnp.float32)
    for ky in range(3):
        for kx in range(3):
            patch = yp_ref[pl.ds(ky, th), pl.ds(kx, wd), :]  # (th, W, C4) bf16
            acc = acc + jnp.dot(patch.reshape(th * wd, c4), w2_ref[ky * 3 + kx],
                                preferred_element_type=jnp.float32)

    z = (acc + b2_ref[...]).reshape(th, wd, g)

    # Fused residual concat: channels [:Cin] are a bit-exact copy of x, [Cin:] the conv.
    out_ref[0] = jnp.concatenate([x_mid, z], axis=-1).astype(out_ref.dtype)


# -----------------------------------------------------------------------------
# Parameter construction + full forward
# -----------------------------------------------------------------------------
def make_params(key, in_channels, growth_rate):
    c4 = 4 * growth_rate
    ks = jax.random.split(key, 10)
    p = {
        # BatchNorm2d(in_channels) — eval-mode stats
        "bn1_gamma": jax.random.uniform(ks[0], (in_channels,), jnp.float32, 0.5, 1.5),
        "bn1_beta": jax.random.normal(ks[1], (in_channels,)) * 0.1,
        "bn1_mean": jax.random.normal(ks[2], (in_channels,)) * 0.1,
        "bn1_var": jax.random.uniform(ks[3], (in_channels,), jnp.float32, 0.5, 1.5),
        # Conv2d(in_channels, 4*growth_rate, 1)
        "w1": jax.random.normal(ks[4], (c4, in_channels, 1, 1)) * 0.1,
        "b1": jax.random.normal(ks[5], (c4,)) * 0.1,
        # BatchNorm2d(4*growth_rate)
        "bn2_gamma": jax.random.uniform(ks[6], (c4,), jnp.float32, 0.5, 1.5),
        "bn2_beta": jax.random.normal(ks[7], (c4,)) * 0.1,
        "bn2_mean": jax.random.normal(ks[8], (c4,)) * 0.1,
        "bn2_var": jax.random.uniform(ks[9], (c4,), jnp.float32, 0.5, 1.5),
        # Conv2d(4*growth_rate, growth_rate, 3, padding=1)
        "w2": jax.random.normal(jax.random.fold_in(key, 100),
                                (growth_rate, c4, 3, 3)) * 0.05,
        "b2": jax.random.normal(jax.random.fold_in(key, 101),
                                (growth_rate,)) * 0.1,
    }
    return p


@jax.jit
def bottleneck_forward(x_nchw, params):
    eps = 1e-5
    B, Cin, H, W = x_nchw.shape
    c4 = params["w1"].shape[0]
    g = params["w2"].shape[0]

    th = _pick_strip_rows(H, W, Cin, c4, g, VMEM_BUDGET_BYTES)
    n_strips = H // th

    # BN1 / BN2 folded into scale+shift.  s2 stays in f32 and is applied to the
    # f32 1x1 accumulator inside the kernel (w1 is quantized to bf16 on its own).
    s1 = params["bn1_gamma"] / jnp.sqrt(params["bn1_var"] + eps)
    sh1 = params["bn1_beta"] - params["bn1_mean"] * s1
    s2 = params["bn2_gamma"] / jnp.sqrt(params["bn2_var"] + eps)
    sh2 = params["bn2_beta"] - params["bn2_mean"] * s2

    w1_t = params["w1"][:, :, 0, 0].T.astype(jnp.bfloat16)                # (Cin, C4)
    b_eff = (params["b1"] * s2 + sh2).reshape(1, c4).astype(jnp.float32)  # BN2 shift+bias

    # 3x3 taps OIHW -> (ky*3+kx, C4, G).
    w2_folded = (jnp.transpose(params["w2"], (2, 3, 1, 0))
                 .reshape(9, c4, g).astype(jnp.bfloat16))
    b2 = params["b2"].reshape(1, g).astype(jnp.float32)

    # NCHW -> NHWC (channels on lanes).  For tiny Cin a (B, H, W*Cin) repack would be
    # lane-denser for the BN stage, but the 1x1 matmul operand needs (pixels, Cin)
    # anyway and real DSOD in_channels grows past 128 quickly — keep NHWC.
    x_nhwc = jnp.transpose(x_nchw, (0, 2, 3, 1)).astype(jnp.float32)

    out_nhwc = pl.pallas_call(
        _bottleneck_fused_kernel,
        out_shape=jax.ShapeDtypeStruct((B, H, W, Cin + g), jnp.float32),
        grid=(B, n_strips),
        in_specs=[
            # Halo row above the strip (clamped at the border; zeroed in-kernel).
            pl.BlockSpec((1, 1, W, Cin),
                         lambda b, i: (b, jnp.maximum(i * th - 1, 0), 0, 0)),
            # Strip body.
            pl.BlockSpec((1, th, W, Cin), lambda b, i: (b, i, 0, 0)),
            # Halo row below the strip.
            pl.BlockSpec((1, 1, W, Cin),
                         lambda b, i: (b, jnp.minimum((i + 1) * th, H - 1), 0, 0)),
            pl.BlockSpec((1, Cin), lambda b, i: (0, 0)),      # s1
            pl.BlockSpec((1, Cin), lambda b, i: (0, 0)),      # sh1
            pl.BlockSpec((Cin, c4), lambda b, i: (0, 0)),     # w1
            pl.BlockSpec((1, c4), lambda b, i: (0, 0)),       # s2
            pl.BlockSpec((1, c4), lambda b, i: (0, 0)),       # b_eff
            pl.BlockSpec((9, c4, g), lambda b, i: (0, 0, 0)), # w2
            pl.BlockSpec((1, g), lambda b, i: (0, 0)),        # b2
        ],
        out_specs=pl.BlockSpec((1, th, W, Cin + g), lambda b, i: (b, i, 0, 0)),
        scratch_shapes=[pltpu.VMEM((th + 2, W + 2, c4), jnp.bfloat16)],
        compiler_params=pltpu.CompilerParams(
            dimension_semantics=("parallel", "parallel"),
            vmem_limit_bytes=64 * 1024 * 1024),
    )(x_nhwc, x_nhwc, x_nhwc,
      s1.reshape(1, Cin).astype(jnp.float32),
      sh1.reshape(1, Cin).astype(jnp.float32),
      w1_t,
      s2.reshape(1, c4).astype(jnp.float32),
      b_eff, w2_folded, b2)

    # TODO(synk): only this layout transpose remains (concat is fused in-kernel);
    #             keeping the network in NHWC would eliminate it entirely.
    return jnp.transpose(out_nhwc, (0, 3, 1, 2))


# -----------------------------------------------------------------------------
# Pure-JAX f32 reference (NCHW) for correctness check.
# -----------------------------------------------------------------------------
def bottleneck_reference(x, p):
    eps = 1e-5

    def bn(x, gamma, beta, mean, var):
        return ((x - mean[None, :, None, None])
                / jnp.sqrt(var[None, :, None, None] + eps)
                * gamma[None, :, None, None] + beta[None, :, None, None])

    h = jax.nn.relu(bn(x, p["bn1_gamma"], p["bn1_beta"], p["bn1_mean"], p["bn1_var"]))
    h = lax.conv_general_dilated(h, p["w1"], (1, 1), "VALID",
                                 dimension_numbers=("NCHW", "OIHW", "NCHW"))
    h = h + p["b1"][None, :, None, None]
    h = jax.nn.relu(bn(h, p["bn2_gamma"], p["bn2_beta"], p["bn2_mean"], p["bn2_var"]))
    h = lax.conv_general_dilated(h, p["w2"], (1, 1), ((1, 1), (1, 1)),
                                 dimension_numbers=("NCHW", "OIHW", "NCHW"))
    h = h + p["b2"][None, :, None, None]
    return jnp.concatenate([x, h], axis=1)


if __name__ == "__main__":
    key = jax.random.PRNGKey(0)
    k_x, k_p = jax.random.split(key)

    B, Cin, H, W = 2, 4, 16, 16
    growth_rate = 8

    x = jax.random.normal(k_x, (B, Cin, H, W), jnp.float32)
    params = make_params(k_p, Cin, growth_rate)

    out = jax.block_until_ready(bottleneck_forward(x, params))
    ref = bottleneck_reference(x, params)

    assert out.shape == (B, Cin + growth_rate, H, W), out.shape
    # Residual channels are a bit-exact copy of the input (written by the kernel).
    np.testing.assert_array_equal(np.asarray(out[:, :Cin]), np.asarray(x))
    # Conv path uses bf16 MXU operands (f32 accumulation) -> loosened tolerance.
    np.testing.assert_allclose(np.asarray(out[:, Cin:]), np.asarray(ref[:, Cin:]),
                               rtol=5e-2, atol=5e-2)

    print("KERNEL_OK")
</pallas_src>

<mosaic_0001>
module attributes {stable_mosaic.version = 11 : i64} {
  func.func @_bottleneck_fused_kernel(%arg0: i32, %arg1: i32, %arg2: memref<1x1x16x4xf32, #tpu.memory_space<vmem>>, %arg3: memref<1x16x16x4xf32, #tpu.memory_space<vmem>>, %arg4: memref<1x1x16x4xf32, #tpu.memory_space<vmem>>, %arg5: memref<1x4xf32, #tpu.memory_space<vmem>>, %arg6: memref<1x4xf32, #tpu.memory_space<vmem>>, %arg7: memref<4x32xbf16, #tpu.memory_space<vmem>>, %arg8: memref<1x32xf32, #tpu.memory_space<vmem>>, %arg9: memref<1x32xf32, #tpu.memory_space<vmem>>, %arg10: memref<9x32x8xbf16, #tpu.memory_space<vmem>>, %arg11: memref<1x8xf32, #tpu.memory_space<vmem>>, %arg12: memref<1x16x16x12xf32, #tpu.memory_space<vmem>>, %arg13: memref<18x18x32xbf16, #tpu.memory_space<vmem>>) attributes {dimension_semantics = [#tpu.dimension_semantics<parallel>, #tpu.dimension_semantics<parallel>], iteration_bounds = array<i64: 2, 1>, scalar_prefetch = 0 : i64, scratch_operands = 1 : i64, tpu.core_type = #tpu.core_type<tc>, window_params = [{transform_indices = @transform_0, window_bounds = array<i64: 1, 1, 16, 4>}, {transform_indices = @transform_1, window_bounds = array<i64: 1, 16, 16, 4>}, {transform_indices = @transform_2, window_bounds = array<i64: 1, 1, 16, 4>}, {pipeline_mode = #tpu.pipeline_mode<synchronous>, transform_indices = @transform_3, window_bounds = array<i64: 1, 4>}, {pipeline_mode = #tpu.pipeline_mode<synchronous>, transform_indices = @transform_4, window_bounds = array<i64: 1, 4>}, {pipeline_mode = #tpu.pipeline_mode<synchronous>, transform_indices = @transform_5, window_bounds = array<i64: 4, 32>}, {pipeline_mode = #tpu.pipeline_mode<synchronous>, transform_indices = @transform_6, window_bounds = array<i64: 1, 32>}, {pipeline_mode = #tpu.pipeline_mode<synchronous>, transform_indices = @transform_7, window_bounds = array<i64: 1, 32>}, {pipeline_mode = #tpu.pipeline_mode<synchronous>, transform_indices = @transform_8, window_bounds = array<i64: 9, 32, 8>}, {pipeline_mode = #tpu.pipeline_mode<synchronous>, transform_indices = @transform_9, window_bounds = array<i64: 1, 8>}, {transform_indices = @transform_10, window_bounds = array<i64: 1, 16, 16, 12>}]} {
    %c0 = arith.constant 0 : index
    %c0_0 = arith.constant 0 : index
    %0 = vector.load %arg5[%c0, %c0_0] : memref<1x4xf32, #tpu.memory_space<vmem>>, vector<1x4xf32>
    %c0_1 = arith.constant 0 : index
    %c0_2 = arith.constant 0 : index
    %1 = vector.load %arg6[%c0_1, %c0_2] : memref<1x4xf32, #tpu.memory_space<vmem>>, vector<1x4xf32>
    %c0_3 = arith.constant 0 : index
    %c0_4 = arith.constant 0 : index
    %2 = vector.load %arg7[%c0_3, %c0_4] : memref<4x32xbf16, #tpu.memory_space<vmem>>, vector<4x32xbf16>
    %c0_5 = arith.constant 0 : index
    %c0_6 = arith.constant 0 : index
    %3 = vector.load %arg8[%c0_5, %c0_6] : memref<1x32xf32, #tpu.memory_space<vmem>>, vector<1x32xf32>
    %c0_7 = arith.constant 0 : index
    %c0_8 = arith.constant 0 : index
    %4 = vector.load %arg9[%c0_7, %c0_8] : memref<1x32xf32, #tpu.memory_space<vmem>>, vector<1x32xf32>
    %cst = arith.constant 0.000000e+00 : bf16
    %5 = vector.broadcast %cst : bf16 to vector<18x1x32xbf16>
    %c0_9 = arith.constant 0 : index
    %c0_10 = arith.constant 0 : index
    %c0_11 = arith.constant 0 : index
    %6 = vector.load %arg13[%c0_9, %c0_10, %c0_11] : memref<18x18x32xbf16, #tpu.memory_space<vmem>>, vector<18x1x32xbf16>
    tpu.vector_store %arg13[%c0_9, %c0_10, %c0_11], %5 {strides = array<i32>} : memref<18x18x32xbf16, #tpu.memory_space<vmem>>, vector<18x1x32xbf16>,
    %cst_12 = arith.constant 0.000000e+00 : bf16
    %7 = vector.broadcast %cst_12 : bf16 to vector<18x1x32xbf16>
    %c0_13 = arith.constant 0 : index
    %c17 = arith.constant 17 : index
    %c0_14 = arith.constant 0 : index
    %8 = vector.load %arg13[%c0_13, %c17, %c0_14] : memref<18x18x32xbf16, #tpu.memory_space<vmem>>, vector<18x1x32xbf16>
    tpu.vector_store %arg13[%c0_13, %c17, %c0_14], %7 {strides = array<i32>} : memref<18x18x32xbf16, #tpu.memory_space<vmem>>, vector<18x1x32xbf16>,
    %c0_15 = arith.constant 0 : index
    %c0_16 = arith.constant 0 : index
    %c0_17 = arith.constant 0 : index
    %c0_18 = arith.constant 0 : index
    %9 = vector.load %arg3[%c0_15, %c0_16, %c0_17, %c0_18] : memref<1x16x16x4xf32, #tpu.memory_space<vmem>>, vector<1x16x16x4xf32>
    %10 = vector.shape_cast %9 : vector<1x16x16x4xf32> to vector<16x16x4xf32>
    %11 = vector.shape_cast %10 : vector<16x16x4xf32> to vector<256x4xf32>
    %12 = vector.broadcast %0 : vector<1x4xf32> to vector<256x4xf32>
    %13 = arith.mulf %11, %12 : vector<256x4xf32>
    %14 = vector.broadcast %1 : vector<1x4xf32> to vector<256x4xf32>
    %15 = arith.addf %13, %14 : vector<256x4xf32>
    %cst_19 = arith.constant 0.000000e+00 : f32
    %16 = vector.broadcast %cst_19 : f32 to vector<256x4xf32>
    %17 = arith.maximumf %15, %16 : vector<256x4xf32>
    %18 = arith.truncf %17 : vector<256x4xf32> to vector<256x4xbf16>
    %cst_20 = arith.constant dense<0.000000e+00> : vector<256x32xf32>
    %19 = tpu.matmul %18, %2, %cst_20 {dimension_numbers = #tpu.dot_dimension_numbers<[1], [0], [0], [1], [0, 0, 1, 1], [], []>} : vector<256x4xbf16>, vector<4x32xbf16>, vector<256x32xf32> -> vector<256x32xf32>
    %20 = vector.broadcast %3 : vector<1x32xf32> to vector<256x32xf32>
    %21 = arith.mulf %19, %20 : vector<256x32xf32>
    %22 = vector.broadcast %4 : vector<1x32xf32> to vector<256x32xf32>
    %23 = arith.addf %21, %22 : vector<256x32xf32>
    %cst_21 = arith.constant 0.000000e+00 : f32
    %24 = vector.broadcast %cst_21 : f32 to vector<256x32xf32>
    %25 = arith.maximumf %23, %24 : vector<256x32xf32>
    %26 = arith.truncf %25 : vector<256x32xf32> to vector<256x32xbf16>
    %27 = vector.shape_cast %26 : vector<256x32xbf16> to vector<16x16x32xbf16>
    %c1 = arith.constant 1 : index
    %c1_22 = arith.constant 1 : index
    %c0_23 = arith.constant 0 : index
    %28 = vector.load %arg13[%c1, %c1_22, %c0_23] : memref<18x18x32xbf16, #tpu.memory_space<vmem>>, vector<16x16x32xbf16>
    tpu.vector_store %arg13[%c1, %c1_22, %c0_23], %27 {strides = array<i32>} : memref<18x18x32xbf16, #tpu.memory_space<vmem>>, vector<16x16x32xbf16>,
    %c0_24 = arith.constant 0 : index
    %c0_25 = arith.constant 0 : index
    %c0_26 = arith.constant 0 : index
    %c0_27 = arith.constant 0 : index
    %29 = vector.load %arg2[%c0_24, %c0_25, %c0_26, %c0_27] : memref<1x1x16x4xf32, #tpu.memory_space<vmem>>, vector<1x1x16x4xf32>
    %30 = vector.shape_cast %29 : vector<1x1x16x4xf32> to vector<16x4xf32>
    %31 = vector.broadcast %0 : vector<1x4xf32> to vector<16x4xf32>
    %32 = arith.mulf %30, %31 : vector<16x4xf32>
    %33 = vector.broadcast %1 : vector<1x4xf32> to vector<16x4xf32>
    %34 = arith.addf %32, %33 : vector<16x4xf32>
    %cst_28 = arith.constant 0.000000e+00 : f32
    %35 = vector.broadcast %cst_28 : f32 to vector<16x4xf32>
    %36 = arith.maximumf %34, %35 : vector<16x4xf32>
    %37 = arith.truncf %36 : vector<16x4xf32> to vector<16x4xbf16>
    %cst_29 = arith.constant dense<0.000000e+00> : vector<16x32xf32>
    %38 = tpu.matmul %37, %2, %cst_29 {dimension_numbers = #tpu.dot_dimension_numbers<[1], [0], [0], [1], [0, 0, 1, 1], [], []>} : vector<16x4xbf16>, vector<4x32xbf16>, vector<16x32xf32> -> vector<16x32xf32>
    %39 = vector.broadcast %3 : vector<1x32xf32> to vector<16x32xf32>
    %40 = arith.mulf %38, %39 : vector<16x32xf32>
    %41 = vector.broadcast %4 : vector<1x32xf32> to vector<16x32xf32>
    %42 = arith.addf %40, %41 : vector<16x32xf32>
    %cst_30 = arith.constant 0.000000e+00 : f32
    %43 = vector.broadcast %cst_30 : f32 to vector<16x32xf32>
    %44 = arith.maximumf %42, %43 : vector<16x32xf32>
    %45 = arith.truncf %44 : vector<16x32xf32> to vector<16x32xbf16>
    %c0_31 = arith.constant 0 : index
    %c0_32 = arith.constant 0 : index
    %c0_33 = arith.constant 0 : index
    %c0_34 = arith.constant 0 : index
    %46 = vector.load %arg4[%c0_31, %c0_32, %c0_33, %c0_34] : memref<1x1x16x4xf32, #tpu.memory_space<vmem>>, vector<1x1x16x4xf32>
    %47 = vector.shape_cast %46 : vector<1x1x16x4xf32> to vector<16x4xf32>
    %48 = vector.broadcast %0 : vector<1x4xf32> to vector<16x4xf32>
    %49 = arith.mulf %47, %48 : vector<16x4xf32>
    %50 = vector.broadcast %1 : vector<1x4xf32> to vector<16x4xf32>
    %51 = arith.addf %49, %50 : vector<16x4xf32>
    %cst_35 = arith.constant 0.000000e+00 : f32
    %52 = vector.broadcast %cst_35 : f32 to vector<16x4xf32>
    %53 = arith.maximumf %51, %52 : vector<16x4xf32>
    %54 = arith.truncf %53 : vector<16x4xf32> to vector<16x4xbf16>
    %cst_36 = arith.constant dense<0.000000e+00> : vector<16x32xf32>
    %55 = tpu.matmul %54, %2, %cst_36 {dimension_numbers = #tpu.dot_dimension_numbers<[1], [0], [0], [1], [0, 0, 1, 1], [], []>} : vector<16x4xbf16>, vector<4x32xbf16>, vector<16x32xf32> -> vector<16x32xf32>
    %56 = vector.broadcast %3 : vector<1x32xf32> to vector<16x32xf32>
    %57 = arith.mulf %55, %56 : vector<16x32xf32>
    %58 = vector.broadcast %4 : vector<1x32xf32> to vector<16x32xf32>
    %59 = arith.addf %57, %58 : vector<16x32xf32>
    %cst_37 = arith.constant 0.000000e+00 : f32
    %60 = vector.broadcast %cst_37 : f32 to vector<16x32xf32>
    %61 = arith.maximumf %59, %60 : vector<16x32xf32>
    %62 = arith.truncf %61 : vector<16x32xf32> to vector<16x32xbf16>
    %63 = vector.shape_cast %45 : vector<16x32xbf16> to vector<1x16x32xbf16>
    %c0_38 = arith.constant 0 : index
    %c1_39 = arith.constant 1 : index
    %c0_40 = arith.constant 0 : index
    %64 = vector.load %arg13[%c0_38, %c1_39, %c0_40] : memref<18x18x32xbf16, #tpu.memory_space<vmem>>, vector<1x16x32xbf16>
    tpu.vector_store %arg13[%c0_38, %c1_39, %c0_40], %63 {strides = array<i32>} : memref<18x18x32xbf16, #tpu.memory_space<vmem>>, vector<1x16x32xbf16>,
    %65 = vector.shape_cast %62 : vector<16x32xbf16> to vector<1x16x32xbf16>
    %c17_41 = arith.constant 17 : index
    %c1_42 = arith.constant 1 : index
    %c0_43 = arith.constant 0 : index
    %66 = vector.load %arg13[%c17_41, %c1_42, %c0_43] : memref<18x18x32xbf16, #tpu.memory_space<vmem>>, vector<1x16x32xbf16>
    tpu.vector_store %arg13[%c17_41, %c1_42, %c0_43], %65 {strides = array<i32>} : memref<18x18x32xbf16, #tpu.memory_space<vmem>>, vector<1x16x32xbf16>,
    %c0_i32 = arith.constant 0 : i32
    %67 = arith.cmpi eq, %arg1, %c0_i32 : i32
    %68 = arith.extui %67 : i1 to i32
    %c0_i32_44 = arith.constant 0 : i32
    %69 = arith.cmpi ne, %68, %c0_i32_44 : i32
    scf.if %69 {
      %cst_110 = arith.constant 0.000000e+00 : bf16
      %136 = vector.broadcast %cst_110 : bf16 to vector<1x18x32xbf16>
      %c0_111 = arith.constant 0 : index
      %c0_112 = arith.constant 0 : index
      %c0_113 = arith.constant 0 : index
      %137 = vector.load %arg13[%c0_111, %c0_112, %c0_113] : memref<18x18x32xbf16, #tpu.memory_space<vmem>>, vector<1x18x32xbf16>
      tpu.vector_store %arg13[%c0_111, %c0_112, %c0_113], %136 {strides = array<i32>} : memref<18x18x32xbf16, #tpu.memory_space<vmem>>, vector<1x18x32xbf16>,
    } else {
    }
    %c0_i32_45 = arith.constant 0 : i32
    %70 = arith.cmpi eq, %arg1, %c0_i32_45 : i32
    %71 = arith.extui %70 : i1 to i32
    %c0_i32_46 = arith.constant 0 : i32
    %72 = arith.cmpi ne, %71, %c0_i32_46 : i32
    scf.if %72 {
      %cst_110 = arith.constant 0.000000e+00 : bf16
      %136 = vector.broadcast %cst_110 : bf16 to vector<1x18x32xbf16>
      %c17_111 = arith.constant 17 : index
      %c0_112 = arith.constant 0 : index
      %c0_113 = arith.constant 0 : index
      %137 = vector.load %arg13[%c17_111, %c0_112, %c0_113] : memref<18x18x32xbf16, #tpu.memory_space<vmem>>, vector<1x18x32xbf16>
      tpu.vector_store %arg13[%c17_111, %c0_112, %c0_113], %136 {strides = array<i32>} : memref<18x18x32xbf16, #tpu.memory_space<vmem>>, vector<1x18x32xbf16>,
    } else {
    }
    %cst_47 = arith.constant 0.000000e+00 : f32
    %73 = vector.broadcast %cst_47 : f32 to vector<256x8xf32>
    %c0_48 = arith.constant 0 : index
    %c0_49 = arith.constant 0 : index
    %c0_50 = arith.constant 0 : index
    %74 = vector.load %arg13[%c0_48, %c0_49, %c0_50] : memref<18x18x32xbf16, #tpu.memory_space<vmem>>, vector<16x16x32xbf16>
    %75 = vector.shape_cast %74 : vector<16x16x32xbf16> to vector<256x32xbf16>
    %c0_51 = arith.constant 0 : index
    %c0_52 = arith.constant 0 : index
    %c0_53 = arith.constant 0 : index
    %76 = vector.load %arg10[%c0_51, %c0_52, %c0_53] : memref<9x32x8xbf16, #tpu.memory_space<vmem>>, vector<1x32x8xbf16>
    %77 = vector.shape_cast %76 : vector<1x32x8xbf16> to vector<32x8xbf16>
    %cst_54 = arith.constant dense<0.000000e+00> : vector<256x8xf32>
    %78 = tpu.matmul %75, %77, %cst_54 {dimension_numbers = #tpu.dot_dimension_numbers<[1], [0], [0], [1], [0, 0, 1, 1], [], []>} : vector<256x32xbf16>, vector<32x8xbf16>, vector<256x8xf32> -> vector<256x8xf32>
    %79 = arith.addf %73, %78 : vector<256x8xf32>
    %c0_55 = arith.constant 0 : index
    %c1_56 = arith.constant 1 : index
    %c0_57 = arith.constant 0 : index
    %80 = vector.load %arg13[%c0_55, %c1_56, %c0_57] : memref<18x18x32xbf16, #tpu.memory_space<vmem>>, vector<16x16x32xbf16>
    %81 = vector.shape_cast %80 : vector<16x16x32xbf16> to vector<256x32xbf16>
    %c1_58 = arith.constant 1 : index
    %c0_59 = arith.constant 0 : index
    %c0_60 = arith.constant 0 : index
    %82 = vector.load %arg10[%c1_58, %c0_59, %c0_60] : memref<9x32x8xbf16, #tpu.memory_space<vmem>>, vector<1x32x8xbf16>
    %83 = vector.shape_cast %82 : vector<1x32x8xbf16> to vector<32x8xbf16>
    %cst_61 = arith.constant dense<0.000000e+00> : vector<256x8xf32>
    %84 = tpu.matmul %81, %83, %cst_61 {dimension_numbers = #tpu.dot_dimension_numbers<[1], [0], [0], [1], [0, 0, 1, 1], [], []>} : vector<256x32xbf16>, vector<32x8xbf16>, vector<256x8xf32> -> vector<256x8xf32>
    %85 = arith.addf %79, %84 : vector<256x8xf32>
    %c0_62 = arith.constant 0 : index
    %c2 = arith.constant 2 : index
    %c0_63 = arith.constant 0 : index
    %86 = vector.load %arg13[%c0_62, %c2, %c0_63] : memref<18x18x32xbf16, #tpu.memory_space<vmem>>, vector<16x16x32xbf16>
    %87 = vector.shape_cast %86 : vector<16x16x32xbf16> to vector<256x32xbf16>
    %c2_64 = arith.constant 2 : index
    %c0_65 = arith.constant 0 : index
    %c0_66 = arith.constant 0 : index
    %88 = vector.load %arg10[%c2_64, %c0_65, %c0_66] : memref<9x32x8xbf16, #tpu.memory_space<vmem>>, vector<1x32x8xbf16>
    %89 = vector.shape_cast %88 : vector<1x32x8xbf16> to vector<32x8xbf16>
    %cst_67 = arith.constant dense<0.000000e+00> : vector<256x8xf32>
    %90 = tpu.matmul %87, %89, %cst_67 {dimension_numbers = #tpu.dot_dimension_numbers<[1], [0], [0], [1], [0, 0, 1, 1], [], []>} : vector<256x32xbf16>, vector<32x8xbf16>, vector<256x8xf32> -> vector<256x8xf32>
    %91 = arith.addf %85, %90 : vector<256x8xf32>
    %c1_68 = arith.constant 1 : index
    %c0_69 = arith.constant 0 : index
    %c0_70 = arith.constant 0 : index
    %92 = vector.load %arg13[%c1_68, %c0_69, %c0_70] : memref<18x18x32xbf16, #tpu.memory_space<vmem>>, vector<16x16x32xbf16>
    %93 = vector.shape_cast %92 : vector<16x16x32xbf16> to vector<256x32xbf16>
    %c3 = arith.constant 3 : index
    %c0_71 = arith.constant 0 : index
    %c0_72 = arith.constant 0 : index
    %94 = vector.load %arg10[%c3, %c0_71, %c0_72] : memref<9x32x8xbf16, #tpu.memory_space<vmem>>, vector<1x32x8xbf16>
    %95 = vector.shape_cast %94 : vector<1x32x8xbf16> to vector<32x8xbf16>
    %cst_73 = arith.constant dense<0.000000e+00> : vector<256x8xf32>
    %96 = tpu.matmul %93, %95, %cst_73 {dimension_numbers = #tpu.dot_dimension_numbers<[1], [0], [0], [1], [0, 0, 1, 1], [], []>} : vector<256x32xbf16>, vector<32x8xbf16>, vector<256x8xf32> -> vector<256x8xf32>
    %97 = arith.addf %91, %96 : vector<256x8xf32>
    %c1_74 = arith.constant 1 : index
    %c1_75 = arith.constant 1 : index
    %c0_76 = arith.constant 0 : index
    %98 = vector.load %arg13[%c1_74, %c1_75, %c0_76] : memref<18x18x32xbf16, #tpu.memory_space<vmem>>, vector<16x16x32xbf16>
    %99 = vector.shape_cast %98 : vector<16x16x32xbf16> to vector<256x32xbf16>
    %c4 = arith.constant 4 : index
    %c0_77 = arith.constant 0 : index
    %c0_78 = arith.constant 0 : index
    %100 = vector.load %arg10[%c4, %c0_77, %c0_78] : memref<9x32x8xbf16, #tpu.memory_space<vmem>>, vector<1x32x8xbf16>
    %101 = vector.shape_cast %100 : vector<1x32x8xbf16> to vector<32x8xbf16>
    %cst_79 = arith.constant dense<0.000000e+00> : vector<256x8xf32>
    %102 = tpu.matmul %99, %101, %cst_79 {dimension_numbers = #tpu.dot_dimension_numbers<[1], [0], [0], [1], [0, 0, 1, 1], [], []>} : vector<256x32xbf16>, vector<32x8xbf16>, vector<256x8xf32> -> vector<256x8xf32>
    %103 = arith.addf %97, %102 : vector<256x8xf32>
    %c1_80 = arith.constant 1 : index
    %c2_81 = arith.constant 2 : index
    %c0_82 = arith.constant 0 : index
    %104 = vector.load %arg13[%c1_80, %c2_81, %c0_82] : memref<18x18x32xbf16, #tpu.memory_space<vmem>>, vector<16x16x32xbf16>
    %105 = vector.shape_cast %104 : vector<16x16x32xbf16> to vector<256x32xbf16>
    %c5 = arith.constant 5 : index
    %c0_83 = arith.constant 0 : index
    %c0_84 = arith.constant 0 : index
    %106 = vector.load %arg10[%c5, %c0_83, %c0_84] : memref<9x32x8xbf16, #tpu.memory_space<vmem>>, vector<1x32x8xbf16>
    %107 = vector.shape_cast %106 : vector<1x32x8xbf16> to vector<32x8xbf16>
    %cst_85 = arith.constant dense<0.000000e+00> : vector<256x8xf32>
    %108 = tpu.matmul %105, %107, %cst_85 {dimension_numbers = #tpu.dot_dimension_numbers<[1], [0], [0], [1], [0, 0, 1, 1], [], []>} : vector<256x32xbf16>, vector<32x8xbf16>, vector<256x8xf32> -> vector<256x8xf32>
    %109 = arith.addf %103, %108 : vector<256x8xf32>
    %c2_86 = arith.constant 2 : index
    %c0_87 = arith.constant 0 : index
    %c0_88 = arith.constant 0 : index
    %110 = vector.load %arg13[%c2_86, %c0_87, %c0_88] : memref<18x18x32xbf16, #tpu.memory_space<vmem>>, vector<16x16x32xbf16>
    %111 = vector.shape_cast %110 : vector<16x16x32xbf16> to vector<256x32xbf16>
    %c6 = arith.constant 6 : index
    %c0_89 = arith.constant 0 : index
    %c0_90 = arith.constant 0 : index
    %112 = vector.load %arg10[%c6, %c0_89, %c0_90] : memref<9x32x8xbf16, #tpu.memory_space<vmem>>, vector<1x32x8xbf16>
    %113 = vector.shape_cast %112 : vector<1x32x8xbf16> to vector<32x8xbf16>
    %cst_91 = arith.constant dense<0.000000e+00> : vector<256x8xf32>
    %114 = tpu.matmul %111, %113, %cst_91 {dimension_numbers = #tpu.dot_dimension_numbers<[1], [0], [0], [1], [0, 0, 1, 1], [], []>} : vector<256x32xbf16>, vector<32x8xbf16>, vector<256x8xf32> -> vector<256x8xf32>
    %115 = arith.addf %109, %114 : vector<256x8xf32>
    %c2_92 = arith.constant 2 : index
    %c1_93 = arith.constant 1 : index
    %c0_94 = arith.constant 0 : index
    %116 = vector.load %arg13[%c2_92, %c1_93, %c0_94] : memref<18x18x32xbf16, #tpu.memory_space<vmem>>, vector<16x16x32xbf16>
    %117 = vector.shape_cast %116 : vector<16x16x32xbf16> to vector<256x32xbf16>
    %c7 = arith.constant 7 : index
    %c0_95 = arith.constant 0 : index
    %c0_96 = arith.constant 0 : index
    %118 = vector.load %arg10[%c7, %c0_95, %c0_96] : memref<9x32x8xbf16, #tpu.memory_space<vmem>>, vector<1x32x8xbf16>
    %119 = vector.shape_cast %118 : vector<1x32x8xbf16> to vector<32x8xbf16>
    %cst_97 = arith.constant dense<0.000000e+00> : vector<256x8xf32>
    %120 = tpu.matmul %117, %119, %cst_97 {dimension_numbers = #tpu.dot_dimension_numbers<[1], [0], [0], [1], [0, 0, 1, 1], [], []>} : vector<256x32xbf16>, vector<32x8xbf16>, vector<256x8xf32> -> vector<256x8xf32>
    %121 = arith.addf %115, %120 : vector<256x8xf32>
    %c2_98 = arith.constant 2 : index
    %c2_99 = arith.constant 2 : index
    %c0_100 = arith.constant 0 : index
    %122 = vector.load %arg13[%c2_98, %c2_99, %c0_100] : memref<18x18x32xbf16, #tpu.memory_space<vmem>>, vector<16x16x32xbf16>
    %123 = vector.shape_cast %122 : vector<16x16x32xbf16> to vector<256x32xbf16>
    %c8 = arith.constant 8 : index
    %c0_101 = arith.constant 0 : index
    %c0_102 = arith.constant 0 : index
    %124 = vector.load %arg10[%c8, %c0_101, %c0_102] : memref<9x32x8xbf16, #tpu.memory_space<vmem>>, vector<1x32x8xbf16>
    %125 = vector.shape_cast %124 : vector<1x32x8xbf16> to vector<32x8xbf16>
    %cst_103 = arith.constant dense<0.000000e+00> : vector<256x8xf32>
    %126 = tpu.matmul %123, %125, %cst_103 {dimension_numbers = #tpu.dot_dimension_numbers<[1], [0], [0], [1], [0, 0, 1, 1], [], []>} : vector<256x32xbf16>, vector<32x8xbf16>, vector<256x8xf32> -> vector<256x8xf32>
    %127 = arith.addf %121, %126 : vector<256x8xf32>
    %c0_104 = arith.constant 0 : index
    %c0_105 = arith.constant 0 : index
    %128 = vector.load %arg11[%c0_104, %c0_105] : memref<1x8xf32, #tpu.memory_space<vmem>>, vector<1x8xf32>
    %129 = vector.broadcast %128 : vector<1x8xf32> to vector<256x8xf32>
    %130 = arith.addf %127, %129 : vector<256x8xf32>
    %131 = vector.shape_cast %130 : vector<256x8xf32> to vector<16x16x8xf32>
    %132 = tpu.concatenate %10, %131 in 2 : vector<16x16x4xf32>, vector<16x16x8xf32> -> vector<16x16x12xf32>
    %c0_106 = arith.constant 0 : index
    %c0_107 = arith.constant 0 : index
    %c0_108 = arith.constant 0 : index
    %c0_109 = arith.constant 0 : index
    %133 = vector.load %arg12[%c0_106, %c0_107, %c0_108, %c0_109] : memref<1x16x16x12xf32, #tpu.memory_space<vmem>>, vector<1x16x16x12xf32>
    %134 = vector.shape_cast %133 : vector<1x16x16x12xf32> to vector<16x16x12xf32>
    %135 = vector.shape_cast %132 : vector<16x16x12xf32> to vector<1x16x16x12xf32>
    tpu.vector_store %arg12[%c0_106, %c0_107, %c0_108, %c0_109], %135 {strides = array<i32>} : memref<1x16x16x12xf32, #tpu.memory_space<vmem>>, vector<1x16x16x12xf32>,
    return
  }
  func.func @transform_0(%arg0: i32, %arg1: i32) -> (i32, i32, i32, i32) {
    %c16_i32 = arith.constant 16 : i32
    %0 = arith.muli %arg1, %c16_i32 : i32
    %c1_i32 = arith.constant 1 : i32
    %1 = arith.subi %0, %c1_i32 : i32
    %c0_i32 = arith.constant 0 : i32
    %2 = arith.maxsi %1, %c0_i32 : i32
    %c0_i32_0 = arith.constant 0 : i32
    %c0_i32_1 = arith.constant 0 : i32
    %c0_i32_2 = arith.constant 0 : i32
    return %arg0, %2, %c0_i32_0, %c0_i32_1 : i32, i32, i32, i32
  }
  func.func @transform_1(%arg0: i32, %arg1: i32) -> (i32, i32, i32, i32) {
    %c0_i32 = arith.constant 0 : i32
    %c0_i32_0 = arith.constant 0 : i32
    %c0_i32_1 = arith.constant 0 : i32
    return %arg0, %arg1, %c0_i32, %c0_i32_0 : i32, i32, i32, i32
  }
  func.func @transform_2(%arg0: i32, %arg1: i32) -> (i32, i32, i32, i32) {
    %c1_i32 = arith.constant 1 : i32
    %0 = arith.addi %arg1, %c1_i32 : i32
    %c16_i32 = arith.constant 16 : i32
    %1 = arith.muli %0, %c16_i32 : i32
    %c15_i32 = arith.constant 15 : i32
    %2 = arith.minsi %1, %c15_i32 : i32
    %c0_i32 = arith.constant 0 : i32
    %c0_i32_0 = arith.constant 0 : i32
    %c0_i32_1 = arith.constant 0 : i32
    return %arg0, %2, %c0_i32, %c0_i32_0 : i32, i32, i32, i32
  }
  func.func @transform_3(%arg0: i32, %arg1: i32) -> (i32, i32) {
    %c0_i32 = arith.constant 0 : i32
    %c0_i32_0 = arith.constant 0 : i32
    %c0_i32_1 = arith.constant 0 : i32
    return %c0_i32, %c0_i32_0 : i32, i32
  }
  func.func @transform_4(%arg0: i32, %arg1: i32) -> (i32, i32) {
    %c0_i32 = arith.constant 0 : i32
    %c0_i32_0 = arith.constant 0 : i32
    %c0_i32_1 = arith.constant 0 : i32
    return %c0_i32, %c0_i32_0 : i32, i32
  }
  func.func @transform_5(%arg0: i32, %arg1: i32) -> (i32, i32) {
    %c0_i32 = arith.constant 0 : i32
    %c0_i32_0 = arith.constant 0 : i32
    %c0_i32_1 = arith.constant 0 : i32
    return %c0_i32, %c0_i32_0 : i32, i32
  }
  func.func @transform_6(%arg0: i32, %arg1: i32) -> (i32, i32) {
    %c0_i32 = arith.constant 0 : i32
    %c0_i32_0 = arith.constant 0 : i32
    %c0_i32_1 = arith.constant 0 : i32
    return %c0_i32, %c0_i32_0 : i32, i32
  }
  func.func @transform_7(%arg0: i32, %arg1: i32) -> (i32, i32) {
    %c0_i32 = arith.constant 0 : i32
    %c0_i32_0 = arith.constant 0 : i32
    %c0_i32_1 = arith.constant 0 : i32
    return %c0_i32, %c0_i32_0 : i32, i32
  }
  func.func @transform_8(%arg0: i32, %arg1: i32) -> (i32, i32, i32) {
    %c0_i32 = arith.constant 0 : i32
    %c0_i32_0 = arith.constant 0 : i32
    %c0_i32_1 = arith.constant 0 : i32
    %c0_i32_2 = arith.constant 0 : i32
    return %c0_i32, %c0_i32_0, %c0_i32_1 : i32, i32, i32
  }
  func.func @transform_9(%arg0: i32, %arg1: i32) -> (i32, i32) {
    %c0_i32 = arith.constant 0 : i32
    %c0_i32_0 = arith.constant 0 : i32
    %c0_i32_1 = arith.constant 0 : i32
    return %c0_i32, %c0_i32_0 : i32, i32
  }
  func.func @transform_10(%arg0: i32, %arg1: i32) -> (i32, i32, i32, i32) {
    %c0_i32 = arith.constant 0 : i32
    %c0_i32_0 = arith.constant 0 : i32
    %c0_i32_1 = arith.constant 0 : i32
    return %arg0, %arg1, %c0_i32, %c0_i32_0 : i32, i32, i32, i32
  }
}

</mosaic_0001>

<llo_original>
// kernel: bottleneck_forward.1
$region0: #{bottleneck_forward.1}
  #allocation0 [shape = 'u32[]', space=smem, size = 0x4, offset = 0x4, fixed_abs, tag = 'smem constant byte address 0x4 - core index']
  #allocation1 [shape = 'u32[72,128]{1,0:T(1,128)}', space=vmem, size = 0x9000, scoped, tag = 'internal scratch']
  #allocation2 [shape = 'bf16[18,18,32]{2,1,0:T(8,128)(2,1)}', space=vmem, size = 0x1b000, scoped, tag = 'scratch operand']
  %s0 = inlined_call_operand.vmem [shape: f32[2,16,16,4], index: 0, kind: input, shape index: {}, may-alias: {0,1,2}]
  %s1 = inlined_call_operand.vmem [shape: f32[2,16,16,4], index: 1, kind: input, shape index: {}, may-alias: {0,1,2}]
  %s2 = inlined_call_operand.vmem [shape: f32[2,16,16,4], index: 2, kind: input, shape index: {}, may-alias: {0,1,2}]
  %s3 = inlined_call_operand.vmem [shape: f32[1,4], index: 3, kind: input, shape index: {}]
  %s4 = inlined_call_operand.vmem [shape: f32[1,4], index: 4, kind: input, shape index: {}]
  %s5 = inlined_call_operand.vmem [shape: bf16[4,32], index: 5, kind: input, shape index: {}]
  %s6 = inlined_call_operand.vmem [shape: f32[1,32], index: 6, kind: input, shape index: {}]
  %s7 = inlined_call_operand.vmem [shape: f32[1,32], index: 7, kind: input, shape index: {}]
  %s8 = inlined_call_operand.vmem [shape: bf16[9,32,8], index: 8, kind: input, shape index: {}]
  %s9 = inlined_call_operand.vmem [shape: f32[1,8], index: 9, kind: input, shape index: {}]
  %s10 = inlined_call_operand.vmem [shape: f32[2,16,16,12], index: 10, kind: output, shape index: {}]
  %s11 = sld [smem:[#allocation0]]
  $region77: #{bottleneck_forward.1} parent=0
    _
  %s13 = ssub.s32 1, %s11
  %s14 = scalar_select 0, %s13, %s11
  loop: start=0, step=1, limit=4
  $region2: #{bottleneck_forward.1} parent=0 // loop_pre_header
    _
  $region3: #{bottleneck_forward.1} parent=0 // loop_header
    %s16 = sphi 0, %s20
    %p17 = scmp.ge.s32.totalorder %s16, 4
    %s23 = sphi 0, %s35
    %s24 = sphi 0, %s31
    %s25 = sphi 0, %s23
    %s26 = sphi 0, %s24
    %s27 = sphi 0, %s25
    %s28 = sphi 0, %s26
    %s48 = sphi 0, %s50
    %s51 = sphi 0, %s48
    %s52 = sphi 0, %s51
    %s68 = sphi 0, %s52
    %s76 = sphi 0, %s78
    %s79 = sphi 0, %s76
    %s80 = sphi 0, %s79
    %s96 = sphi 0, %s80
    %s112 = sphi 0, %s114
    %s115 = sphi 0, %s112
    %s116 = sphi 0, %s115
    %s132 = sphi 0, %s116
    %s136 = sphi 0, %s136
    %s138 = sphi 0, %s136
    %s139 = sphi 0, %s138
    %s153 = sphi 0, %s139
    %s157 = sphi 0, %s157
    %s159 = sphi 0, %s157
    %s160 = sphi 0, %s159
    %s174 = sphi 0, %s160
    %s178 = sphi 0, %s178
    %s180 = sphi 0, %s178
    %s181 = sphi 0, %s180
    %s195 = sphi 0, %s181
    %s199 = sphi 0, %s199
    %s201 = sphi 0, %s199
    %s202 = sphi 0, %s201
    %s216 = sphi 0, %s202
    %s220 = sphi 0, %s220
    %s222 = sphi 0, %s220
    %s223 = sphi 0, %s222
    %s237 = sphi 0, %s223
    %s241 = sphi 0, %s241
    %s243 = sphi 0, %s241
    %s244 = sphi 0, %s243
    %s258 = sphi 0, %s244
    %s262 = sphi 0, %s262
    %s264 = sphi 0, %s262
    %s265 = sphi 0, %s264
    %s279 = sphi 0, %s265
    %s287 = sphi 0, %s289
    %s290 = sphi 0, %s287
    %s291 = sphi 0, %s290
    %s307 = sphi 0, %s291
  $region4: #{bottleneck_forward.1} parent=0 // loop_header_branch
    %19 = sbr.rel (%p17) target = $region8
  $region5: #{bottleneck_forward.1} parent=0 // loop_body
    %s21 = ssub.s32 %s16, 1
    %s22 = ssub.s32 %s16, 2
    %s29 = sadd.s32 1, %s24
    %p30 = scmp.ge.s32.totalorder %s29, 1
    %s31 = scalar_select %p30, 0, %s29
    %s32 = sadd.s32 1, %s23
    %s33 = scalar_select %p30, %s32, %s23
    %p34 = scmp.ge.s32.totalorder %s33, 2
    %s35 = scalar_select %p34, 0, %s33
    %s36 = smul.u32 %s24, 16
    %s37 = ssub.s32 %s36, 1
    %p38 = scmp.gt.s32.totalorder %s37, 0
    %s39 = scalar_select %p38, %s37, 0
    %s40 = smul.u32 %s31, 16
    %s41 = ssub.s32 %s40, 1
    %p42 = scmp.gt.s32.totalorder %s41, 0
    %s43 = scalar_select %p42, %s41, 0
    %s44 = ssub.s32 %s23, %s35
    %s45 = ssub.s32 %s39, %s43
    %s46 = sor.u32 %s44, %s45
    %p47 = scmp.eq.s32.totalorder %s46, 0
    %s49 = sadd.s32 %s48, 1
    %s50 = scalar_select %p47, %s48, %s49
    %p53 = pneg %p47
    %p54 = scmp.eq.s32.totalorder %s16, 1
    %p55 = por %p53, %p54
    %p56 = scmp.ne.s32.totalorder %s48, %s51
    %p57 = scmp.eq.s32.totalorder %s16, 0
    %p58 = por %p56, %p57
    %p59 = scmp.ne.s32.totalorder %s48, %s51
    %p60 = scmp.eq.s32.totalorder %s21, 1
    %p61 = por %p59, %p60
    %p62 = scmp.ne.s32.totalorder %s51, %s52
    %p63 = scmp.eq.s32.totalorder %s21, 0
    %p64 = por %p62, %p63
    %p65 = scmp.ne.s32.totalorder %s51, %s52
    %p66 = scmp.eq.s32.totalorder %s22, 1
    %p67 = por %p65, %p66
    %p69 = scmp.ne.s32.totalorder %s52, %s68
    %p70 = scmp.eq.s32.totalorder %s22, 0
    %p71 = por %p69, %p70
    %s72 = ssub.s32 %s23, %s35
    %s73 = ssub.s32 %s24, %s31
    %s74 = sor.u32 %s72, %s73
    %p75 = scmp.eq.s32.totalorder %s74, 0
    %s77 = sadd.s32 %s76, 1
    %s78 = scalar_select %p75, %s76, %s77
    %p81 = pneg %p75
    %p82 = scmp.eq.s32.totalorder %s16, 1
    %p83 = por %p81, %p82
    %p84 = scmp.ne.s32.totalorder %s76, %s79
    %p85 = scmp.eq.s32.totalorder %s16, 0
    %p86 = por %p84, %p85
    %p87 = scmp.ne.s32.totalorder %s76, %s79
    %p88 = scmp.eq.s32.totalorder %s21, 1
    %p89 = por %p87, %p88
    %p90 = scmp.ne.s32.totalorder %s79, %s80
    %p91 = scmp.eq.s32.totalorder %s21, 0
    %p92 = por %p90, %p91
    %p93 = scmp.ne.s32.totalorder %s79, %s80
    %p94 = scmp.eq.s32.totalorder %s22, 1
    %p95 = por %p93, %p94
    %p97 = scmp.ne.s32.totalorder %s80, %s96
    %p98 = scmp.eq.s32.totalorder %s22, 0
    %p99 = por %p97, %p98
    %s100 = sadd.s32 %s24, 1
    %s101 = smul.u32 %s100, 16
    %p102 = scmp.lt.s32.totalorder %s101, 15
    %s103 = scalar_select %p102, %s101, 15
    %s104 = sadd.s32 %s31, 1
    %s105 = smul.u32 %s104, 16
    %p106 = scmp.lt.s32.totalorder %s105, 15
    %s107 = scalar_select %p106, %s105, 15
    %s108 = ssub.s32 %s23, %s35
    %s109 = ssub.s32 %s103, %s107
    %s110 = sor.u32 %s108, %s109
    %p111 = scmp.eq.s32.totalorder %s110, 0
    %s113 = sadd.s32 %s112, 1
    %s114 = scalar_select %p111, %s112, %s113
    %p117 = pneg %p111
    %p118 = scmp.eq.s32.totalorder %s16, 1
    %p119 = por %p117, %p118
    %p120 = scmp.ne.s32.totalorder %s112, %s115
    %p121 = scmp.eq.s32.totalorder %s16, 0
    %p122 = por %p120, %p121
    %p123 = scmp.ne.s32.totalorder %s112, %s115
    %p124 = scmp.eq.s32.totalorder %s21, 1
    %p125 = por %p123, %p124
    %p126 = scmp.ne.s32.totalorder %s115, %s116
    %p127 = scmp.eq.s32.totalorder %s21, 0
    %p128 = por %p126, %p127
    %p129 = scmp.ne.s32.totalorder %s115, %s116
    %p130 = scmp.eq.s32.totalorder %s22, 1
    %p131 = por %p129, %p130
    %p133 = scmp.ne.s32.totalorder %s116, %s132
    %p134 = scmp.eq.s32.totalorder %s22, 0
    %p135 = por %p133, %p134
    %s137 = sadd.s32 %s136, 1
    %p140 = scmp.eq.s32.totalorder %s16, 1
    %p141 = scmp.ne.s32.totalorder %s136, %s138
    %p142 = scmp.eq.s32.totalorder %s16, 0
    %p143 = por %p141, %p142
    %p144 = scmp.ne.s32.totalorder %s136, %s138
    %p145 = scmp.eq.s32.totalorder %s21, 1
    %p146 = por %p144, %p145
    %p147 = scmp.ne.s32.totalorder %s138, %s139
    %p148 = scmp.eq.s32.totalorder %s21, 0
    %p149 = por %p147, %p148
    %p150 = scmp.ne.s32.totalorder %s138, %s139
    %p151 = scmp.eq.s32.totalorder %s22, 1
    %p152 = por %p150, %p151
    %p154 = scmp.ne.s32.totalorder %s139, %s153
    %p155 = scmp.eq.s32.totalorder %s22, 0
    %p156 = por %p154, %p155
    %s158 = sadd.s32 %s157, 1
    %p161 = scmp.eq.s32.totalorder %s16, 1
    %p162 = scmp.ne.s32.totalorder %s157, %s159
    %p163 = scmp.eq.s32.totalorder %s16, 0
    %p164 = por %p162, %p163
    %p165 = scmp.ne.s32.totalorder %s157, %s159
    %p166 = scmp.eq.s32.totalorder %s21, 1
    %p167 = por %p165, %p166
    %p168 = scmp.ne.s32.totalorder %s159, %s160
    %p169 = scmp.eq.s32.totalorder %s21, 0
    %p170 = por %p168, %p169
    %p171 = scmp.ne.s32.totalorder %s159, %s160
    %p172 = scmp.eq.s32.totalorder %s22, 1
    %p173 = por %p171, %p172
    %p175 = scmp.ne.s32.totalorder %s160, %s174
    %p176 = scmp.eq.s32.totalorder %s22, 0
    %p177 = por %p175, %p176
    %s179 = sadd.s32 %s178, 1
    %p182 = scmp.eq.s32.totalorder %s16, 1
    %p183 = scmp.ne.s32.totalorder %s178, %s180
    %p184 = scmp.eq.s32.totalorder %s16, 0
    %p185 = por %p183, %p184
    %p186 = scmp.ne.s32.totalorder %s178, %s180
    %p187 = scmp.eq.s32.totalorder %s21, 1
    %p188 = por %p186, %p187
    %p189 = scmp.ne.s32.totalorder %s180, %s181
    %p190 = scmp.eq.s32.totalorder %s21, 0
    %p191 = por %p189, %p190
    %p192 = scmp.ne.s32.totalorder %s180, %s181
    %p193 = scmp.eq.s32.totalorder %s22, 1
    %p194 = por %p192, %p193
    %p196 = scmp.ne.s32.totalorder %s181, %s195
    %p197 = scmp.eq.s32.totalorder %s22, 0
    %p198 = por %p196, %p197
    %s200 = sadd.s32 %s199, 1
    %p203 = scmp.eq.s32.totalorder %s16, 1
    %p204 = scmp.ne.s32.totalorder %s199, %s201
    %p205 = scmp.eq.s32.totalorder %s16, 0
    %p206 = por %p204, %p205
    %p207 = scmp.ne.s32.totalorder %s199, %s201
    %p208 = scmp.eq.s32.totalorder %s21, 1
    %p209 = por %p207, %p208
    %p210 = scmp.ne.s32.totalorder %s201, %s202
    %p211 = scmp.eq.s32.totalorder %s21, 0
    %p212 = por %p210, %p211
    %p213 = scmp.ne.s32.totalorder %s201, %s202
    %p214 = scmp.eq.s32.totalorder %s22, 1
    %p215 = por %p213, %p214
    %p217 = scmp.ne.s32.totalorder %s202, %s216
    %p218 = scmp.eq.s32.totalorder %s22, 0
    %p219 = por %p217, %p218
    %s221 = sadd.s32 %s220, 1
    %p224 = scmp.eq.s32.totalorder %s16, 1
    %p225 = scmp.ne.s32.totalorder %s220, %s222
    %p226 = scmp.eq.s32.totalorder %s16, 0
    %p227 = por %p225, %p226
    %p228 = scmp.ne.s32.totalorder %s220, %s222
    %p229 = scmp.eq.s32.totalorder %s21, 1
    %p230 = por %p228, %p229
    %p231 = scmp.ne.s32.totalorder %s222, %s223
    %p232 = scmp.eq.s32.totalorder %s21, 0
    %p233 = por %p231, %p232
    %p234 = scmp.ne.s32.totalorder %s222, %s223
    %p235 = scmp.eq.s32.totalorder %s22, 1
    %p236 = por %p234, %p235
    %p238 = scmp.ne.s32.totalorder %s223, %s237
    %p239 = scmp.eq.s32.totalorder %s22, 0
    %p240 = por %p238, %p239
    %s242 = sadd.s32 %s241, 1
    %p245 = scmp.eq.s32.totalorder %s16, 1
    %p246 = scmp.ne.s32.totalorder %s241, %s243
    %p247 = scmp.eq.s32.totalorder %s16, 0
    %p248 = por %p246, %p247
    %p249 = scmp.ne.s32.totalorder %s241, %s243
    %p250 = scmp.eq.s32.totalorder %s21, 1
    %p251 = por %p249, %p250
    %p252 = scmp.ne.s32.totalorder %s243, %s244
    %p253 = scmp.eq.s32.totalorder %s21, 0
    %p254 = por %p252, %p253
    %p255 = scmp.ne.s32.totalorder %s243, %s244
    %p256 = scmp.eq.s32.totalorder %s22, 1
    %p257 = por %p255, %p256
    %p259 = scmp.ne.s32.totalorder %s244, %s258
    %p260 = scmp.eq.s32.totalorder %s22, 0
    %p261 = por %p259, %p260
    %s263 = sadd.s32 %s262, 1
    %p266 = scmp.eq.s32.totalorder %s16, 1
    %p267 = scmp.ne.s32.totalorder %s262, %s264
    %p268 = scmp.eq.s32.totalorder %s16, 0
    %p269 = por %p267, %p268
    %p270 = scmp.ne.s32.totalorder %s262, %s264
    %p271 = scmp.eq.s32.totalorder %s21, 1
    %p272 = por %p270, %p271
    %p273 = scmp.ne.s32.totalorder %s264, %s265
    %p274 = scmp.eq.s32.totalorder %s21, 0
    %p275 = por %p273, %p274
    %p276 = scmp.ne.s32.totalorder %s264, %s265
    %p277 = scmp.eq.s32.totalorder %s22, 1
    %p278 = por %p276, %p277
    %p280 = scmp.ne.s32.totalorder %s265, %s279
    %p281 = scmp.eq.s32.totalorder %s22, 0
    %p282 = por %p280, %p281
    %s283 = ssub.s32 %s23, %s35
    %s284 = ssub.s32 %s24, %s31
    %s285 = sor.u32 %s283, %s284
    %p286 = scmp.eq.s32.totalorder %s285, 0
    %s288 = sadd.s32 %s287, 1
    %s289 = scalar_select %p286, %s287, %s288
    %p292 = pneg %p286
    %p293 = scmp.eq.s32.totalorder %s16, 1
    %p294 = por %p292, %p293
    %p295 = scmp.ne.s32.totalorder %s287, %s290
    %p296 = scmp.eq.s32.totalorder %s16, 0
    %p297 = por %p295, %p296
    %p298 = scmp.ne.s32.totalorder %s287, %s290
    %p299 = scmp.eq.s32.totalorder %s21, 1
    %p300 = por %p298, %p299
    %p301 = scmp.ne.s32.totalorder %s290, %s291
    %p302 = scmp.eq.s32.totalorder %s21, 0
    %p303 = por %p301, %p302
    %p304 = scmp.ne.s32.totalorder %s290, %s291
    %p305 = scmp.eq.s32.totalorder %s22, 1
    %p306 = por %p304, %p305
    %p308 = scmp.ne.s32.totalorder %s291, %s307
    %p309 = scmp.eq.s32.totalorder %s22, 0
    %p310 = por %p308, %p309
    %p311 = scmp.le.s32.totalorder 1, %s16
    %p312 = scmp.lt.s32.totalorder %s16, 3
    %p313 = pnand %p311, %p312
    %p314 = pneg %p313
    // Predicated region
    $region9: #{bottleneck_forward.1} parent=5 // pred_check
      _
    $region10: #{bottleneck_forward.1} parent=5 // pred_check_branch
      %316 = sbr.rel (%p313) target = $region12
    $region11: #{bottleneck_forward.1} parent=5 // pred_region
      %s317 = ssub.s32 %s16, 1
      // Predicated region
      $region13: #{bottleneck_forward.1} parent=11 // pred_check
        %p318 = pneg %p149
      $region14: #{bottleneck_forward.1} parent=11 // pred_check_branch
        %320 = sbr.rel (%p318) target = $region16
      $region15: #{bottleneck_forward.1} parent=11 // pred_region
        _
      $region16: #{bottleneck_forward.1} parent=11 // pred_fallthru
        _
      // Predicated region
      $region17: #{bottleneck_forward.1} parent=11 // pred_check
        %p321 = pneg %p170
      $region18: #{bottleneck_forward.1} parent=11 // pred_check_branch
        %323 = sbr.rel (%p321) target = $region20
      $region19: #{bottleneck_forward.1} parent=11 // pred_region
        _
      $region20: #{bottleneck_forward.1} parent=11 // pred_fallthru
        _
      // Predicated region
      $region21: #{bottleneck_forward.1} parent=11 // pred_check
        %p324 = pneg %p191
      $region22: #{bottleneck_forward.1} parent=11 // pred_check_branch
        %326 = sbr.rel (%p324) target = $region24
      $region23: #{bottleneck_forward.1} parent=11 // pred_region
        _
      $region24: #{bottleneck_forward.1} parent=11 // pred_fallthru
        _
      // Predicated region
      $region25: #{bottleneck_forward.1} parent=11 // pred_check
        %p327 = pneg %p212
      $region26: #{bottleneck_forward.1} parent=11 // pred_check_branch
        %329 = sbr.rel (%p327) target = $region28
      $region27: #{bottleneck_forward.1} parent=11 // pred_region
        _
      $region28: #{bottleneck_forward.1} parent=11 // pred_fallthru
        _
      // Predicated region
      $region29: #{bottleneck_forward.1} parent=11 // pred_check
        %p330 = pneg %p233
      $region30: #{bottleneck_forward.1} parent=11 // pred_check_branch
        %332 = sbr.rel (%p330) target = $region32
      $region31: #{bottleneck_forward.1} parent=11 // pred_region
        _
      $region32: #{bottleneck_forward.1} parent=11 // pred_fallthru
        _
      // Predicated region
      $region33: #{bottleneck_forward.1} parent=11 // pred_check
        %p333 = pneg %p254
      $region34: #{bottleneck_forward.1} parent=11 // pred_check_branch
        %335 = sbr.rel (%p333) target = $region36
      $region35: #{bottleneck_forward.1} parent=11 // pred_region
        _
      $region36: #{bottleneck_forward.1} parent=11 // pred_fallthru
        _
      // Predicated region
      $region37: #{bottleneck_forward.1} parent=11 // pred_check
        %p336 = pneg %p275
      $region38: #{bottleneck_forward.1} parent=11 // pred_check_branch
        %338 = sbr.rel (%p336) target = $region40
      $region39: #{bottleneck_forward.1} parent=11 // pred_region
        _
      $region40: #{bottleneck_forward.1} parent=11 // pred_fallthru
        _
    $region12: #{bottleneck_forward.1} parent=5 // pred_fallthru
      _
    %p339 = scmp.lt.s32.totalorder %s16, 2
    // Predicated region
    $region41: #{bottleneck_forward.1} parent=5 // pred_check
      %p340 = pneg %p339
    $region42: #{bottleneck_forward.1} parent=5 // pred_check_branch
      %342 = sbr.rel (%p340) target = $region44
    $region43: #{bottleneck_forward.1} parent=5 // pred_region
      // Predicated region
      $region45: #{bottleneck_forward.1} parent=43 // pred_check
        %p343 = pneg %p58
      $region46: #{bottleneck_forward.1} parent=43 // pred_check_branch
        %345 = sbr.rel (%p343) target = $region48
      $region47: #{bottleneck_forward.1} parent=43 // pred_region
        %s346 = smul.u32 %s24, 16
        %s347 = ssub.s32 %s346, 1
        %p348 = scmp.gt.s32.totalorder %s347, 0
        %s349 = scalar_select %p348, %s347, 0
        %p350 = scmp.lt.s32.totalorder %s23, 1
        %s351 = scalar_select %p350, %s23, 1
        %p352 = scmp.lt.s32.totalorder %s349, 15
        %s353 = scalar_select %p352, %s349, 15
        %s354 = smul.addr %s353, 2
        %s355 = smul.addr %s351, 32
        %s356 = sadd.s32 %s354, %s355
        %s357 = smul.addr %s356, 8
        %s358 = scalar_lea.vmem %s0, %s357
        %s359 = smul.u32 %s24, 16
        %s360 = ssub.s32 %s359, 1
        %p361 = scmp.gt.s32.totalorder %s360, 0
        %s362 = scalar_select %p361, %s360, 0
      $region48: #{bottleneck_forward.1} parent=43 // pred_fallthru
        _
      // Predicated region
      $region49: #{bottleneck_forward.1} parent=43 // pred_check
        %p363 = pneg %p86
      $region50: #{bottleneck_forward.1} parent=43 // pred_check_branch
        %365 = sbr.rel (%p363) target = $region52
      $region51: #{bottleneck_forward.1} parent=43 // pred_region
        %s366 = smul.u32 16, %s24
        %p367 = scmp.lt.s32.totalorder %s23, 1
        %s368 = scalar_select %p367, %s23, 1
        %p369 = scmp.lt.s32.totalorder %s366, 15
        %s370 = scalar_select %p369, %s366, 15
        %s371 = smul.addr %s370, 2
        %s372 = smul.addr %s368, 32
        %s373 = sadd.s32 %s371, %s372
        %s374 = smul.addr %s373, 8
        %s375 = scalar_lea.vmem %s1, %s374
        %s376 = smul.u32 16, %s24
      $region52: #{bottleneck_forward.1} parent=43 // pred_fallthru
        _
      // Predicated region
      $region53: #{bottleneck_forward.1} parent=43 // pred_check
        %p377 = pneg %p122
      $region54: #{bottleneck_forward.1} parent=43 // pred_check_branch
        %379 = sbr.rel (%p377) target = $region56
      $region55: #{bottleneck_forward.1} parent=43 // pred_region
        %s380 = sadd.s32 %s24, 1
        %s381 = smul.u32 %s380, 16
        %p382 = scmp.lt.s32.totalorder %s381, 15
        %s383 = scalar_select %p382, %s381, 15
        %p384 = scmp.lt.s32.totalorder %s23, 1
        %s385 = scalar_select %p384, %s23, 1
        %p386 = scmp.lt.s32.totalorder %s383, 15
        %s387 = scalar_select %p386, %s383, 15
        %s388 = smul.addr %s387, 2
        %s389 = smul.addr %s385, 32
        %s390 = sadd.s32 %s388, %s389
        %s391 = smul.addr %s390, 8
        %s392 = scalar_lea.vmem %s2, %s391
        %s393 = sadd.s32 %s24, 1
        %s394 = smul.u32 %s393, 16
        %p395 = scmp.lt.s32.totalorder %s394, 15
        %s396 = scalar_select %p395, %s394, 15
      $region56: #{bottleneck_forward.1} parent=43 // pred_fallthru
        _
    $region44: #{bottleneck_forward.1} parent=5 // pred_fallthru
      _
    %p397 = scmp.le.s32.totalorder 1, %s16
    %p398 = scmp.lt.s32.totalorder %s16, 3
    %p399 = pnand %p397, %p398
    %p400 = pneg %p399
    // Predicated region
    $region57: #{bottleneck_forward.1} parent=5 // pred_check
      _
    $region58: #{bottleneck_forward.1} parent=5 // pred_check_branch
      %402 = sbr.rel (%p399) target = $region60
    $region59: #{bottleneck_forward.1} parent=5 // pred_region
      %s403 = ssub.s32 %s16, 1
      %s404 = smul.u32 %s26, 16
      %s405 = ssub.s32 %s404, 1
      %p406 = scmp.gt.s32.totalorder %s405, 0
      %s407 = scalar_select %p406, %s405, 0
      %p408 = scmp.lt.s32.totalorder %s25, 1
      %s409 = scalar_select %p408, %s25, 1
      %p410 = scmp.lt.s32.totalorder %s407, 15
      %s411 = scalar_select %p410, %s407, 15
      %s412 = smul.addr %s411, 2
      %s413 = smul.addr %s409, 32
      %s414 = sadd.s32 %s412, %s413
      %s415 = smul.addr %s414, 8
      %s416 = scalar_lea.vmem %s0, %s415
      %p417 = pneg %p64
      %p418 = pneg %p61
      %s419 = smul.u32 16, %s26
      %p420 = scmp.lt.s32.totalorder %s25, 1
      %s421 = scalar_select %p420, %s25, 1
      %p422 = scmp.lt.s32.totalorder %s419, 15
      %s423 = scalar_select %p422, %s419, 15
      %s424 = smul.addr %s423, 2
      %s425 = smul.addr %s421, 32
      %s426 = sadd.s32 %s424, %s425
      %s427 = smul.addr %s426, 8
      %s428 = scalar_lea.vmem %s1, %s427
      %p429 = pneg %p92
      %p430 = pneg %p89
      %s431 = sadd.s32 %s26, 1
      %s432 = smul.u32 %s431, 16
      %p433 = scmp.lt.s32.totalorder %s432, 15
      %s434 = scalar_select %p433, %s432, 15
      %p435 = scmp.lt.s32.totalorder %s25, 1
      %s436 = scalar_select %p435, %s25, 1
      %p437 = scmp.lt.s32.totalorder %s434, 15
      %s438 = scalar_select %p437, %s434, 15
      %s439 = smul.addr %s438, 2
      %s440 = smul.addr %s436, 32
      %s441 = sadd.s32 %s439, %s440
      %s442 = smul.addr %s441, 8
      %s443 = scalar_lea.vmem %s2, %s442
      %p444 = pneg %p128
      %p445 = pneg %p125
      %p446 = pneg %p149
      %p447 = pneg %p146
      %p448 = pneg %p170
      %p449 = pneg %p167
      %p450 = pneg %p191
      %p451 = pneg %p188
      %p452 = pneg %p212
      %p453 = pneg %p209
      %p454 = pneg %p233
      %p455 = pneg %p230
      %p456 = pneg %p254
      %p457 = pneg %p251
      %p458 = pneg %p275
      %p459 = pneg %p272
      %p460 = pneg %p303
      %p461 = pneg %p300
      %s462 = smul.u32 16, %s26
      %p463 = scmp.lt.s32.totalorder %s25, 1
      %s464 = scalar_select %p463, %s25, 1
      %p465 = scmp.lt.s32.totalorder %s462, 15
      %s466 = scalar_select %p465, %s462, 15
      %s467 = smul.addr %s466, 2
      %s468 = smul.addr %s464, 32
      %s469 = sadd.s32 %s467, %s468
      %s470 = smul.addr %s469, 8
      %s471 = scalar_lea.vmem %s10, %s470
      %s472 = smul.u32 %s26, 16
      %s473 = ssub.s32 %s472, 1
      %p474 = scmp.gt.s32.totalorder %s473, 0
      %s475 = scalar_select %p474, %s473, 0
      %p476 = scmp.lt.s32.totalorder %s25, 1
      %s477 = scalar_select %p476, %s25, 1
      %p478 = scmp.lt.s32.totalorder %s475, 15
      %s479 = scalar_select %p478, %s475, 15
      %s480 = smul.addr %s479, 2
      %s481 = smul.addr %s477, 32
      %s482 = sadd.s32 %s480, %s481
      %s483 = smul.addr %s482, 8
      %s484 = scalar_lea.vmem %s0, %s483
      %s485 = smul.u32 %s26, 16
      %s486 = ssub.s32 %s485, 1
      %p487 = scmp.gt.s32.totalorder %s486, 0
      %s488 = scalar_select %p487, %s486, 0
      %s489 = smul.u32 16, %s26
      %p490 = scmp.lt.s32.totalorder %s25, 1
      %s491 = scalar_select %p490, %s25, 1
      %p492 = scmp.lt.s32.totalorder %s489, 15
      %s493 = scalar_select %p492, %s489, 15
      %s494 = smul.addr %s493, 2
      %s495 = smul.addr %s491, 32
      %s496 = sadd.s32 %s494, %s495
      %s497 = smul.addr %s496, 8
      %s498 = scalar_lea.vmem %s1, %s497
      %s499 = smul.u32 16, %s26
      %s500 = sadd.s32 %s26, 1
      %s501 = smul.u32 %s500, 16
      %p502 = scmp.lt.s32.totalorder %s501, 15
      %s503 = scalar_select %p502, %s501, 15
      %p504 = scmp.lt.s32.totalorder %s25, 1
      %s505 = scalar_select %p504, %s25, 1
      %p506 = scmp.lt.s32.totalorder %s503, 15
      %s507 = scalar_select %p506, %s503, 15
      %s508 = smul.addr %s507, 2
      %s509 = smul.addr %s505, 32
      %s510 = sadd.s32 %s508, %s509
      %s511 = smul.addr %s510, 8
      %s512 = scalar_lea.vmem %s2, %s511
      %s513 = sadd.s32 %s26, 1
      %s514 = smul.u32 %s513, 16
      %p515 = scmp.lt.s32.totalorder %s514, 15
      %s516 = scalar_select %p515, %s514, 15
      %s517 = smul.u32 16, %s26
      %p518 = scmp.lt.s32.totalorder %s25, 1
      %s519 = scalar_select %p518, %s25, 1
      %p520 = scmp.lt.s32.totalorder %s517, 15
      %s521 = scalar_select %p520, %s517, 15
      %s522 = smul.addr %s521, 2
      %s523 = smul.addr %s519, 32
      %s524 = sadd.s32 %s522, %s523
      %s525 = smul.addr %s524, 8
      %s526 = scalar_lea.vmem %s10, %s525
      %s527 = smul.u32 16, %s26
      %v529 = vld [vmem:[%s3] sm:$0x1]
      %v530 = vld [vmem:[%s4] sm:$0x1]
      %v531 = vld [vmem:[%s5] sm:$0x3]
      %v532 = vld [vmem:[%s6] sm:$0x1]
      %v533 = vld [vmem:[%s7] sm:$0x1]
      %vm534 = vcmask 253952
      %vm535 = vsmask.f32 256
      %vm536 = vmand %vm534, %vm535
      %v537 = vld [vmem:[#allocation2] sm:$0x1]
      %v538 = vsel %vm536, 0, %v537
      %539 = vst [vmem:[#allocation2] sm:$0x1] %v538
      %v540 = vld [vmem:[#allocation2 + $0xc] sm:$0x1]
      %v541 = vsel %vm536, 0, %v540
      %542 = vst [vmem:[#allocation2 + $0xc] sm:$0x1] %v541
      %v543 = vld [vmem:[#allocation2 + $0x18] sm:$0x1]
      %v544 = vsel %vm536, 0, %v543
      %545 = vst [vmem:[#allocation2 + $0x18] sm:$0x1] %v544
      %v546 = vld [vmem:[#allocation2 + $0x24] sm:$0x1]
      %v547 = vsel %vm536, 0, %v546
      %548 = vst [vmem:[#allocation2 + $0x24] sm:$0x1] %v547
      %v549 = vld [vmem:[#allocation2 + $0x30] sm:$0x1]
      %v550 = vsel %vm536, 0, %v549
      %551 = vst [vmem:[#allocation2 + $0x30] sm:$0x1] %v550
      %v552 = vld [vmem:[#allocation2 + $0x3c] sm:$0x1]
      %v553 = vsel %vm536, 0, %v552
      %554 = vst [vmem:[#allocation2 + $0x3c] sm:$0x1] %v553
      %v555 = vld [vmem:[#allocation2 + $0x48] sm:$0x1]
      %v556 = vsel %vm536, 0, %v555
      %557 = vst [vmem:[#allocation2 + $0x48] sm:$0x1] %v556
      %v558 = vld [vmem:[#allocation2 + $0x54] sm:$0x1]
      %v559 = vsel %vm536, 0, %v558
      %560 = vst [vmem:[#allocation2 + $0x54] sm:$0x1] %v559
      %v561 = vld [vmem:[#allocation2 + $0x60] sm:$0x1]
      %v562 = vsel %vm536, 0, %v561
      %563 = vst [vmem:[#allocation2 + $0x60] sm:$0x1] %v562
      %v564 = vld [vmem:[#allocation2 + $0x6c] sm:$0x1]
      %v565 = vsel %vm536, 0, %v564
      %566 = vst [vmem:[#allocation2 + $0x6c] sm:$0x1] %v565
      %v567 = vld [vmem:[#allocation2 + $0x78] sm:$0x1]
      %v568 = vsel %vm536, 0, %v567
      %569 = vst [vmem:[#allocation2 + $0x78] sm:$0x1] %v568
      %v570 = vld [vmem:[#allocation2 + $0x84] sm:$0x1]
      %v571 = vsel %vm536, 0, %v570
      %572 = vst [vmem:[#allocation2 + $0x84] sm:$0x1] %v571
      %v573 = vld [vmem:[#allocation2 + $0x90] sm:$0x1]
      %v574 = vsel %vm536, 0, %v573
      %575 = vst [vmem:[#allocation2 + $0x90] sm:$0x1] %v574
      %v576 = vld [vmem:[#allocation2 + $0x9c] sm:$0x1]
      %v577 = vsel %vm536, 0, %v576
      %578 = vst [vmem:[#allocation2 + $0x9c] sm:$0x1] %v577
      %v579 = vld [vmem:[#allocation2 + $0xa8] sm:$0x1]
      %v580 = vsel %vm536, 0, %v579
      %581 = vst [vmem:[#allocation2 + $0xa8] sm:$0x1] %v580
      %v582 = vld [vmem:[#allocation2 + $0xb4] sm:$0x1]
      %v583 = vsel %vm536, 0, %v582
      %584 = vst [vmem:[#allocation2 + $0xb4] sm:$0x1] %v583
      %v585 = vld [vmem:[#allocation2 + $0xc0] sm:$0x1]
      %v586 = vsel %vm536, 0, %v585
      %587 = vst [vmem:[#allocation2 + $0xc0] sm:$0x1] %v586
      %v588 = vld [vmem:[#allocation2 + $0xcc] sm:$0x1]
      %v589 = vsel %vm536, 0, %v588
      %590 = vst [vmem:[#allocation2 + $0xcc] sm:$0x1] %v589
      %vm591 = vsmask.f32 7938
      %vm592 = vmand %vm534, %vm591
      %v593 = vld [vmem:[#allocation2 + $0x8] sm:$0x1]
      %v594 = vsel %vm592, 0, %v593
      %595 = vst [vmem:[#allocation2 + $0x8] sm:$0x1] %v594
      %v596 = vld [vmem:[#allocation2 + $0x14] sm:$0x1]
      %v597 = vsel %vm592, 0, %v596
      %598 = vst [vmem:[#allocation2 + $0x14] sm:$0x1] %v597
      %v599 = vld [vmem:[#allocation2 + $0x20] sm:$0x1]
      %v600 = vsel %vm592, 0, %v599
      %601 = vst [vmem:[#allocation2 + $0x20] sm:$0x1] %v600
      %v602 = vld [vmem:[#allocation2 + $0x2c] sm:$0x1]
      %v603 = vsel %vm592, 0, %v602
      %604 = vst [vmem:[#allocation2 + $0x2c] sm:$0x1] %v603
      %v605 = vld [vmem:[#allocation2 + $0x38] sm:$0x1]
      %v606 = vsel %vm592, 0, %v605
      %607 = vst [vmem:[#allocation2 + $0x38] sm:$0x1] %v606
      %v608 = vld [vmem:[#allocation2 + $0x44] sm:$0x1]
      %v609 = vsel %vm592, 0, %v608
      %610 = vst [vmem:[#allocation2 + $0x44] sm:$0x1] %v609
      %v611 = vld [vmem:[#allocation2 + $0x50] sm:$0x1]
      %v612 = vsel %vm592, 0, %v611
      %613 = vst [vmem:[#allocation2 + $0x50] sm:$0x1] %v612
      %v614 = vld [vmem:[#allocation2 + $0x5c] sm:$0x1]
      %v615 = vsel %vm592, 0, %v614
      %616 = vst [vmem:[#allocation2 + $0x5c] sm:$0x1] %v615
      %v617 = vld [vmem:[#allocation2 + $0x68] sm:$0x1]
      %v618 = vsel %vm592, 0, %v617
      %619 = vst [vmem:[#allocation2 + $0x68] sm:$0x1] %v618
      %v620 = vld [vmem:[#allocation2 + $0x74] sm:$0x1]
      %v621 = vsel %vm592, 0, %v620
      %622 = vst [vmem:[#allocation2 + $0x74] sm:$0x1] %v621
      %v623 = vld [vmem:[#allocation2 + $0x80] sm:$0x1]
      %v624 = vsel %vm592, 0, %v623
      %625 = vst [vmem:[#allocation2 + $0x80] sm:$0x1] %v624
      %v626 = vld [vmem:[#allocation2 + $0x8c] sm:$0x1]
      %v627 = vsel %vm592, 0, %v626
      %628 = vst [vmem:[#allocation2 + $0x8c] sm:$0x1] %v627
      %v629 = vld [vmem:[#allocation2 + $0x98] sm:$0x1]
      %v630 = vsel %vm592, 0, %v629
      %631 = vst [vmem:[#allocation2 + $0x98] sm:$0x1] %v630
      %v632 = vld [vmem:[#allocation2 + $0xa4] sm:$0x1]
      %v633 = vsel %vm592, 0, %v632
      %634 = vst [vmem:[#allocation2 + $0xa4] sm:$0x1] %v633
      %v635 = vld [vmem:[#allocation2 + $0xb0] sm:$0x1]
      %v636 = vsel %vm592, 0, %v635
      %637 = vst [vmem:[#allocation2 + $0xb0] sm:$0x1] %v636
      %v638 = vld [vmem:[#allocation2 + $0xbc] sm:$0x1]
      %v639 = vsel %vm592, 0, %v638
      %640 = vst [vmem:[#allocation2 + $0xbc] sm:$0x1] %v639
      %v641 = vld [vmem:[#allocation2 + $0xc8] sm:$0x1]
      %v642 = vsel %vm592, 0, %v641
      %643 = vst [vmem:[#allocation2 + $0xc8] sm:$0x1] %v642
      %v644 = vld [vmem:[#allocation2 + $0xd4] sm:$0x1]
      %v645 = vsel %vm592, 0, %v644
      %646 = vst [vmem:[#allocation2 + $0xd4] sm:$0x1] %v645
      %v647 = vld [vmem:[%s498] sm:$0xff]
      %v648 = vld [vmem:[%s498 + $0x8] sm:$0xff]
      %v649 = vld [vmem:[%s498 + $0x10] sm:$0xff]
      %v650 = vld [vmem:[%s498 + $0x18] sm:$0xff]
      %v651 = vld [vmem:[%s498 + $0x20] sm:$0xff]
      %v652 = vld [vmem:[%s498 + $0x28] sm:$0xff]
      %v653 = vld [vmem:[%s498 + $0x30] sm:$0xff]
      %v654 = vld [vmem:[%s498 + $0x38] sm:$0xff]
      %v655 = vld [vmem:[%s498 + $0x40] sm:$0xff]
      %v656 = vld [vmem:[%s498 + $0x48] sm:$0xff]
      %v657 = vld [vmem:[%s498 + $0x50] sm:$0xff]
      %v658 = vld [vmem:[%s498 + $0x58] sm:$0xff]
      %v659 = vld [vmem:[%s498 + $0x60] sm:$0xff]
      %v660 = vld [vmem:[%s498 + $0x68] sm:$0xff]
      %v661 = vld [vmem:[%s498 + $0x70] sm:$0xff]
      %v662 = vld [vmem:[%s498 + $0x78] sm:$0xff]
      %v663 = vld [vmem:[%s498 + $0x80] sm:$0xff]
      %v664 = vld [vmem:[%s498 + $0x88] sm:$0xff]
      %v665 = vld [vmem:[%s498 + $0x90] sm:$0xff]
      %v666 = vld [vmem:[%s498 + $0x98] sm:$0xff]
      %v667 = vld [vmem:[%s498 + $0xa0] sm:$0xff]
      %v668 = vld [vmem:[%s498 + $0xa8] sm:$0xff]
      %v669 = vld [vmem:[%s498 + $0xb0] sm:$0xff]
      %v670 = vld [vmem:[%s498 + $0xb8] sm:$0xff]
      %v671 = vld [vmem:[%s498 + $0xc0] sm:$0xff]
      %v672 = vld [vmem:[%s498 + $0xc8] sm:$0xff]
      %v673 = vld [vmem:[%s498 + $0xd0] sm:$0xff]
      %v674 = vld [vmem:[%s498 + $0xd8] sm:$0xff]
      %v675 = vld [vmem:[%s498 + $0xe0] sm:$0xff]
      %v676 = vld [vmem:[%s498 + $0xe8] sm:$0xff]
      %v677 = vld [vmem:[%s498 + $0xf0] sm:$0xff]
      %v678 = vld [vmem:[%s498 + $0xf8] sm:$0xff]
      %v680 = vperm.slane %v529, 0
      %v682 = vmul.f32 %v647, %v680
      %v683 = vmul.f32 %v648, %v680
      %v684 = vmul.f32 %v649, %v680
      %v685 = vmul.f32 %v650, %v680
      %v686 = vmul.f32 %v651, %v680
      %v687 = vmul.f32 %v652, %v680
      %v688 = vmul.f32 %v653, %v680
      %v689 = vmul.f32 %v654, %v680
      %v690 = vmul.f32 %v655, %v680
      %v691 = vmul.f32 %v656, %v680
      %v692 = vmul.f32 %v657, %v680
      %v693 = vmul.f32 %v658, %v680
      %v694 = vmul.f32 %v659, %v680
      %v695 = vmul.f32 %v660, %v680
      %v696 = vmul.f32 %v661, %v680
      %v697 = vmul.f32 %v662, %v680
      %v698 = vmul.f32 %v663, %v680
      %v699 = vmul.f32 %v664, %v680
      %v700 = vmul.f32 %v665, %v680
      %v701 = vmul.f32 %v666, %v680
      %v702 = vmul.f32 %v667, %v680
      %v703 = vmul.f32 %v668, %v680
      %v704 = vmul.f32 %v669, %v680
      %v705 = vmul.f32 %v670, %v680
      %v706 = vmul.f32 %v671, %v680
      %v707 = vmul.f32 %v672, %v680
      %v708 = vmul.f32 %v673, %v680
      %v709 = vmul.f32 %v674, %v680
      %v710 = vmul.f32 %v675, %v680
      %v711 = vmul.f32 %v676, %v680
      %v712 = vmul.f32 %v677, %v680
      %v713 = vmul.f32 %v678, %v680
      %v715 = vperm.slane %v530, 0
      %v717 = vadd.f32 %v682, %v715
      %v718 = vadd.f32 %v683, %v715
      %v719 = vadd.f32 %v684, %v715
      %v720 = vadd.f32 %v685, %v715
      %v721 = vadd.f32 %v686, %v715
      %v722 = vadd.f32 %v687, %v715
      %v723 = vadd.f32 %v688, %v715
      %v724 = vadd.f32 %v689, %v715
      %v725 = vadd.f32 %v690, %v715
      %v726 = vadd.f32 %v691, %v715
      %v727 = vadd.f32 %v692, %v715
      %v728 = vadd.f32 %v693, %v715
      %v729 = vadd.f32 %v694, %v715
      %v730 = vadd.f32 %v695, %v715
      %v731 = vadd.f32 %v696, %v715
      %v732 = vadd.f32 %v697, %v715
      %v733 = vadd.f32 %v698, %v715
      %v734 = vadd.f32 %v699, %v715
      %v735 = vadd.f32 %v700, %v715
      %v736 = vadd.f32 %v701, %v715
      %v737 = vadd.f32 %v702, %v715
      %v738 = vadd.f32 %v703, %v715
      %v739 = vadd.f32 %v704, %v715
      %v740 = vadd.f32 %v705, %v715
      %v741 = vadd.f32 %v706, %v715
      %v742 = vadd.f32 %v707, %v715
      %v743 = vadd.f32 %v708, %v715
      %v744 = vadd.f32 %v709, %v715
      %v745 = vadd.f32 %v710, %v715
      %v746 = vadd.f32 %v711, %v715
      %v747 = vadd.f32 %v712, %v715
      %v748 = vadd.f32 %v713, %v715
      %v749 = vmax.f32 %v717, 0.0
      %v750 = vmax.f32 %v718, 0.0
      %v751 = vmax.f32 %v719, 0.0
      %v752 = vmax.f32 %v720, 0.0
      %v753 = vmax.f32 %v721, 0.0
      %v754 = vmax.f32 %v722, 0.0
      %v755 = vmax.f32 %v723, 0.0
      %v756 = vmax.f32 %v724, 0.0
      %v757 = vmax.f32 %v725, 0.0
      %v758 = vmax.f32 %v726, 0.0
      %v759 = vmax.f32 %v727, 0.0
      %v760 = vmax.f32 %v728, 0.0
      %v761 = vmax.f32 %v729, 0.0
      %v762 = vmax.f32 %v730, 0.0
      %v763 = vmax.f32 %v731, 0.0
      %v764 = vmax.f32 %v732, 0.0
      %v765 = vmax.f32 %v733, 0.0
      %v766 = vmax.f32 %v734, 0.0
      %v767 = vmax.f32 %v735, 0.0
      %v768 = vmax.f32 %v736, 0.0
      %v769 = vmax.f32 %v737, 0.0
      %v770 = vmax.f32 %v738, 0.0
      %v771 = vmax.f32 %v739, 0.0
      %v772 = vmax.f32 %v740, 0.0
      %v773 = vmax.f32 %v741, 0.0
      %v774 = vmax.f32 %v742, 0.0
      %v775 = vmax.f32 %v743, 0.0
      %v776 = vmax.f32 %v744, 0.0
      %v777 = vmax.f32 %v745, 0.0
      %v778 = vmax.f32 %v746, 0.0
      %v779 = vmax.f32 %v747, 0.0
      %v780 = vmax.f32 %v748, 0.0
      %v781 = vpack.c.bf16 %v750, %v749
      %v782 = vpack.c.bf16 %v752, %v751
      %v783 = vpack.c.bf16 %v754, %v753
      %v784 = vpack.c.bf16 %v756, %v755
      %v785 = vpack.c.bf16 %v758, %v757
      %v786 = vpack.c.bf16 %v760, %v759
      %v787 = vpack.c.bf16 %v762, %v761
      %v788 = vpack.c.bf16 %v764, %v763
      %v789 = vpack.c.bf16 %v766, %v765
      %v790 = vpack.c.bf16 %v768, %v767
      %v791 = vpack.c.bf16 %v770, %v769
      %v792 = vpack.c.bf16 %v772, %v771
      %v793 = vpack.c.bf16 %v774, %v773
      %v794 = vpack.c.bf16 %v776, %v775
      %v795 = vpack.c.bf16 %v778, %v777
      %v796 = vpack.c.bf16 %v780, %v779
      %vm797 = vcmask 31744
      %v799 = vsel %vm797, %v781, 0
      %v802 = vsel %vm797, %v782, 0
      %v805 = vsel %vm797, %v783, 0
      %v808 = vsel %vm797, %v784, 0
      %v811 = vsel %vm797, %v785, 0
      %v814 = vsel %vm797, %v786, 0
      %v817 = vsel %vm797, %v787, 0
      %v820 = vsel %vm797, %v788, 0
      %v823 = vsel %vm797, %v789, 0
      %v826 = vsel %vm797, %v790, 0
      %v829 = vsel %vm797, %v791, 0
      %v832 = vsel %vm797, %v792, 0
      %v835 = vsel %vm797, %v793, 0
      %v838 = vsel %vm797, %v794, 0
      %v841 = vsel %vm797, %v795, 0
      %v844 = vsel %vm797, %v796, 0
      %vm846 = vcmask 1041408
      %v848 = vsel %vm846, %v531, 0
      %850 = vmatpush.bf16.msra.mxu0 0
      %851 = vmatpush.bf16.msra.mxu0 0
      %852 = vmatpush.bf16.msra.mxu0 0
      %853 = vmatpush.bf16.msra.mxu0 0
      %854 = vmatpush.bf16.msra.mxu0 0
      %855 = vmatpush.bf16.msra.mxu0 0
      %856 = vmatpush.bf16.msra.mxu0 0
      %857 = vmatpush.bf16.msra.mxu0 %v848
      %858 = vmatmul.bf16.gmra.mxu0 %v799
      %v859 = vpop.f32.mrf.mxu0
      %v860 = vadd.f32 0.0, %v859
      %v861 = vpop.f32.mrf.mxu0
      %v862 = vadd.f32 0.0, %v861
      %863 = vmatmul.bf16.gmra.mxu0 %v802
      %v864 = vpop.f32.mrf.mxu0
      %v865 = vadd.f32 0.0, %v864
      %v866 = vpop.f32.mrf.mxu0
      %v867 = vadd.f32 0.0, %v866
      %868 = vmatmul.bf16.gmra.mxu0 %v805
      %v869 = vpop.f32.mrf.mxu0
      %v870 = vadd.f32 0.0, %v869
      %v871 = vpop.f32.mrf.mxu0
      %v872 = vadd.f32 0.0, %v871
      %873 = vmatmul.bf16.gmra.mxu0 %v808
      %v874 = vpop.f32.mrf.mxu0
      %v875 = vadd.f32 0.0, %v874
      %v876 = vpop.f32.mrf.mxu0
      %v877 = vadd.f32 0.0, %v876
      %878 = vmatmul.bf16.gmra.mxu0 %v811
      %v879 = vpop.f32.mrf.mxu0
      %v880 = vadd.f32 0.0, %v879
      %v881 = vpop.f32.mrf.mxu0
      %v882 = vadd.f32 0.0, %v881
      %883 = vmatmul.bf16.gmra.mxu0 %v814
      %v884 = vpop.f32.mrf.mxu0
      %v885 = vadd.f32 0.0, %v884
      %v886 = vpop.f32.mrf.mxu0
      %v887 = vadd.f32 0.0, %v886
      %888 = vmatmul.bf16.gmra.mxu0 %v817
      %v889 = vpop.f32.mrf.mxu0
      %v890 = vadd.f32 0.0, %v889
      %v891 = vpop.f32.mrf.mxu0
      %v892 = vadd.f32 0.0, %v891
      %893 = vmatmul.bf16.gmra.mxu0 %v820
      %v894 = vpop.f32.mrf.mxu0
      %v895 = vadd.f32 0.0, %v894
      %v896 = vpop.f32.mrf.mxu0
      %v897 = vadd.f32 0.0, %v896
      %898 = vmatmul.bf16.gmra.mxu0 %v823
      %v899 = vpop.f32.mrf.mxu0
      %v900 = vadd.f32 0.0, %v899
      %v901 = vpop.f32.mrf.mxu0
      %v902 = vadd.f32 0.0, %v901
      %903 = vmatmul.bf16.gmra.mxu0 %v826
      %v904 = vpop.f32.mrf.mxu0
      %v905 = vadd.f32 0.0, %v904
      %v906 = vpop.f32.mrf.mxu0
      %v907 = vadd.f32 0.0, %v906
      %908 = vmatmul.bf16.gmra.mxu0 %v829
      %v909 = vpop.f32.mrf.mxu0
      %v910 = vadd.f32 0.0, %v909
      %v911 = vpop.f32.mrf.mxu0
      %v912 = vadd.f32 0.0, %v911
      %913 = vmatmul.bf16.gmra.mxu0 %v832
      %v914 = vpop.f32.mrf.mxu0
      %v915 = vadd.f32 0.0, %v914
      %v916 = vpop.f32.mrf.mxu0
      %v917 = vadd.f32 0.0, %v916
      %918 = vmatmul.bf16.gmra.mxu0 %v835
      %v919 = vpop.f32.mrf.mxu0
      %v920 = vadd.f32 0.0, %v919
      %v921 = vpop.f32.mrf.mxu0
      %v922 = vadd.f32 0.0, %v921
      %923 = vmatmul.bf16.gmra.mxu0 %v838
      %v924 = vpop.f32.mrf.mxu0
      %v925 = vadd.f32 0.0, %v924
      %v926 = vpop.f32.mrf.mxu0
      %v927 = vadd.f32 0.0, %v926
      %928 = vmatmul.bf16.gmra.mxu0 %v841
      %v929 = vpop.f32.mrf.mxu0
      %v930 = vadd.f32 0.0, %v929
      %v931 = vpop.f32.mrf.mxu0
      %v932 = vadd.f32 0.0, %v931
      %933 = vmatmul.bf16.gmra.mxu0 %v844
      %v934 = vpop.f32.mrf.mxu0
      %v935 = vadd.f32 0.0, %v934
      %v936 = vpop.f32.mrf.mxu0
      %v937 = vadd.f32 0.0, %v936
      %938 = vdwg.mxu0
      %v940 = vperm.slane %v532, 0
      %v942 = vmul.f32 %v860, %v940
      %v943 = vmul.f32 %v862, %v940
      %v944 = vmul.f32 %v865, %v940
      %v945 = vmul.f32 %v867, %v940
      %v946 = vmul.f32 %v870, %v940
      %v947 = vmul.f32 %v872, %v940
      %v948 = vmul.f32 %v875, %v940
      %v949 = vmul.f32 %v877, %v940
      %v950 = vmul.f32 %v880, %v940
      %v951 = vmul.f32 %v882, %v940
      %v952 = vmul.f32 %v885, %v940
      %v953 = vmul.f32 %v887, %v940
      %v954 = vmul.f32 %v890, %v940
      %v955 = vmul.f32 %v892, %v940
      %v956 = vmul.f32 %v895, %v940
      %v957 = vmul.f32 %v897, %v940
      %v958 = vmul.f32 %v900, %v940
      %v959 = vmul.f32 %v902, %v940
      %v960 = vmul.f32 %v905, %v940
      %v961 = vmul.f32 %v907, %v940
      %v962 = vmul.f32 %v910, %v940
      %v963 = vmul.f32 %v912, %v940
      %v964 = vmul.f32 %v915, %v940
      %v965 = vmul.f32 %v917, %v940
      %v966 = vmul.f32 %v920, %v940
      %v967 = vmul.f32 %v922, %v940
      %v968 = vmul.f32 %v925, %v940
      %v969 = vmul.f32 %v927, %v940
      %v970 = vmul.f32 %v930, %v940
      %v971 = vmul.f32 %v932, %v940
      %v972 = vmul.f32 %v935, %v940
      %v973 = vmul.f32 %v937, %v940
      %v975 = vperm.slane %v533, 0
      %v977 = vadd.f32 %v942, %v975
      %v978 = vadd.f32 %v943, %v975
      %v979 = vadd.f32 %v944, %v975
      %v980 = vadd.f32 %v945, %v975
      %v981 = vadd.f32 %v946, %v975
      %v982 = vadd.f32 %v947, %v975
      %v983 = vadd.f32 %v948, %v975
      %v984 = vadd.f32 %v949, %v975
      %v985 = vadd.f32 %v950, %v975
      %v986 = vadd.f32 %v951, %v975
      %v987 = vadd.f32 %v952, %v975
      %v988 = vadd.f32 %v953, %v975
      %v989 = vadd.f32 %v954, %v975
      %v990 = vadd.f32 %v955, %v975
      %v991 = vadd.f32 %v956, %v975
      %v992 = vadd.f32 %v957, %v975
      %v993 = vadd.f32 %v958, %v975
      %v994 = vadd.f32 %v959, %v975
      %v995 = vadd.f32 %v960, %v975
      %v996 = vadd.f32 %v961, %v975
      %v997 = vadd.f32 %v962, %v975
      %v998 = vadd.f32 %v963, %v975
      %v999 = vadd.f32 %v964, %v975
      %v1000 = vadd.f32 %v965, %v975
      %v1001 = vadd.f32 %v966, %v975
      %v1002 = vadd.f32 %v967, %v975
      %v1003 = vadd.f32 %v968, %v975
      %v1004 = vadd.f32 %v969, %v975
      %v1005 = vadd.f32 %v970, %v975
      %v1006 = vadd.f32 %v971, %v975
      %v1007 = vadd.f32 %v972, %v975
      %v1008 = vadd.f32 %v973, %v975
      %v1009 = vmax.f32 %v977, 0.0
      %v1010 = vmax.f32 %v978, 0.0
      %v1011 = vmax.f32 %v979, 0.0
      %v1012 = vmax.f32 %v980, 0.0
      %v1013 = vmax.f32 %v981, 0.0
      %v1014 = vmax.f32 %v982, 0.0
      %v1015 = vmax.f32 %v983, 0.0
      %v1016 = vmax.f32 %v984, 0.0
      %v1017 = vmax.f32 %v985, 0.0
      %v1018 = vmax.f32 %v986, 0.0
      %v1019 = vmax.f32 %v987, 0.0
      %v1020 = vmax.f32 %v988, 0.0
      %v1021 = vmax.f32 %v989, 0.0
      %v1022 = vmax.f32 %v990, 0.0
      %v1023 = vmax.f32 %v991, 0.0
      %v1024 = vmax.f32 %v992, 0.0
      %v1025 = vmax.f32 %v993, 0.0
      %v1026 = vmax.f32 %v994, 0.0
      %v1027 = vmax.f32 %v995, 0.0
      %v1028 = vmax.f32 %v996, 0.0
      %v1029 = vmax.f32 %v997, 0.0
      %v1030 = vmax.f32 %v998, 0.0
      %v1031 = vmax.f32 %v999, 0.0
      %v1032 = vmax.f32 %v1000, 0.0
      %v1033 = vmax.f32 %v1001, 0.0
      %v1034 = vmax.f32 %v1002, 0.0
      %v1035 = vmax.f32 %v1003, 0.0
      %v1036 = vmax.f32 %v1004, 0.0
      %v1037 = vmax.f32 %v1005, 0.0
      %v1038 = vmax.f32 %v1006, 0.0
      %v1039 = vmax.f32 %v1007, 0.0
      %v1040 = vmax.f32 %v1008, 0.0
      %v1041 = vpack.c.bf16 %v1009, %v1009
      %v1042 = vpack.c.bf16 %v1010, %v1010
      %v1043 = vpack.c.bf16 %v1011, %v1011
      %v1044 = vpack.c.bf16 %v1012, %v1012
      %v1045 = vpack.c.bf16 %v1013, %v1013
      %v1046 = vpack.c.bf16 %v1014, %v1014
      %v1047 = vpack.c.bf16 %v1015, %v1015
      %v1048 = vpack.c.bf16 %v1016, %v1016
      %v1049 = vpack.c.bf16 %v1017, %v1017
      %v1050 = vpack.c.bf16 %v1018, %v1018
      %v1051 = vpack.c.bf16 %v1019, %v1019
      %v1052 = vpack.c.bf16 %v1020, %v1020
      %v1053 = vpack.c.bf16 %v1021, %v1021
      %v1054 = vpack.c.bf16 %v1022, %v1022
      %v1055 = vpack.c.bf16 %v1023, %v1023
      %v1056 = vpack.c.bf16 %v1024, %v1024
      %v1057 = vpack.c.bf16 %v1025, %v1025
      %v1058 = vpack.c.bf16 %v1026, %v1026
      %v1059 = vpack.c.bf16 %v1027, %v1027
      %v1060 = vpack.c.bf16 %v1028, %v1028
      %v1061 = vpack.c.bf16 %v1029, %v1029
      %v1062 = vpack.c.bf16 %v1030, %v1030
      %v1063 = vpack.c.bf16 %v1031, %v1031
      %v1064 = vpack.c.bf16 %v1032, %v1032
      %v1065 = vpack.c.bf16 %v1033, %v1033
      %v1066 = vpack.c.bf16 %v1034, %v1034
      %v1067 = vpack.c.bf16 %v1035, %v1035
      %v1068 = vpack.c.bf16 %v1036, %v1036
      %v1069 = vpack.c.bf16 %v1037, %v1037
      %v1070 = vpack.c.bf16 %v1038, %v1038
      %v1071 = vpack.c.bf16 %v1039, %v1039
      %v1072 = vpack.c.bf16 %v1040, %v1040
      %vm1073 = vsmask.f32 4368
      %vm1074 = vmor %vm535, %vm1073
      %v1076 = vshrl.u32 %v1041, 16
      %v1078 = vrot.slane %v1076, 7
      %v1079 = vshll.u32 %v1041, 16
      %v1081 = vor.u32 %v1078, %v1079
      %v1082 = vrot.slane %v1078, 4
      %v1084 = vshrl.u32 %v1042, 16
      %v1086 = vrot.slane %v1084, 7
      %v1087 = vshll.u32 %v1042, 16
      %v1089 = vor.u32 %v1086, %v1087
      %v1090 = vsel %vm1074, %v1082, %v1089
      %v1091 = vrot.slane %v1086, 4
      %v1093 = vshrl.u32 %v1043, 16
      %v1095 = vrot.slane %v1093, 7
      %v1096 = vshll.u32 %v1043, 16
      %v1098 = vor.u32 %v1095, %v1096
      %v1099 = vrot.slane %v1095, 4
      %v1101 = vshrl.u32 %v1044, 16
      %v1103 = vrot.slane %v1101, 7
      %v1104 = vshll.u32 %v1044, 16
      %v1106 = vor.u32 %v1103, %v1104
      %v1107 = vsel %vm1074, %v1099, %v1106
      %v1108 = vrot.slane %v1103, 4
      %v1110 = vshrl.u32 %v1045, 16
      %v1112 = vrot.slane %v1110, 7
      %v1113 = vshll.u32 %v1045, 16
      %v1115 = vor.u32 %v1112, %v1113
      %v1116 = vrot.slane %v1112, 4
      %v1118 = vshrl.u32 %v1046, 16
      %v1120 = vrot.slane %v1118, 7
      %v1121 = vshll.u32 %v1046, 16
      %v1123 = vor.u32 %v1120, %v1121
      %v1124 = vsel %vm1074, %v1116, %v1123
      %v1125 = vrot.slane %v1120, 4
      %v1127 = vshrl.u32 %v1047, 16
      %v1129 = vrot.slane %v1127, 7
      %v1130 = vshll.u32 %v1047, 16
      %v1132 = vor.u32 %v1129, %v1130
      %v1133 = vrot.slane %v1129, 4
      %v1135 = vshrl.u32 %v1048, 16
      %v1137 = vrot.slane %v1135, 7
      %v1138 = vshll.u32 %v1048, 16
      %v1140 = vor.u32 %v1137, %v1138
      %v1141 = vsel %vm1074, %v1133, %v1140
      %v1142 = vrot.slane %v1137, 4
      %v1144 = vshrl.u32 %v1049, 16
      %v1146 = vrot.slane %v1144, 7
      %v1147 = vshll.u32 %v1049, 16
      %v1149 = vor.u32 %v1146, %v1147
      %v1150 = vrot.slane %v1146, 4
      %v1152 = vshrl.u32 %v1050, 16
      %v1154 = vrot.slane %v1152, 7
      %v1155 = vshll.u32 %v1050, 16
      %v1157 = vor.u32 %v1154, %v1155
      %v1158 = vsel %vm1074, %v1150, %v1157
      %v1159 = vrot.slane %v1154, 4
      %v1161 = vshrl.u32 %v1051, 16
      %v1163 = vrot.slane %v1161, 7
      %v1164 = vshll.u32 %v1051, 16
      %v1166 = vor.u32 %v1163, %v1164
      %v1167 = vrot.slane %v1163, 4
      %v1169 = vshrl.u32 %v1052, 16
      %v1171 = vrot.slane %v1169, 7
      %v1172 = vshll.u32 %v1052, 16
      %v1174 = vor.u32 %v1171, %v1172
      %v1175 = vsel %vm1074, %v1167, %v1174
      %v1176 = vrot.slane %v1171, 4
      %v1178 = vshrl.u32 %v1053, 16
      %v1180 = vrot.slane %v1178, 7
      %v1181 = vshll.u32 %v1053, 16
      %v1183 = vor.u32 %v1180, %v1181
      %v1184 = vrot.slane %v1180, 4
      %v1186 = vshrl.u32 %v1054, 16
      %v1188 = vrot.slane %v1186, 7
      %v1189 = vshll.u32 %v1054, 16
      %v1191 = vor.u32 %v1188, %v1189
      %v1192 = vsel %vm1074, %v1184, %v1191
      %v1193 = vrot.slane %v1188, 4
      %v1195 = vshrl.u32 %v1055, 16
      %v1197 = vrot.slane %v1195, 7
      %v1198 = vshll.u32 %v1055, 16
      %v1200 = vor.u32 %v1197, %v1198
      %v1201 = vrot.slane %v1197, 4
      %v1203 = vshrl.u32 %v1056, 16
      %v1205 = vrot.slane %v1203, 7
      %v1206 = vshll.u32 %v1056, 16
      %v1208 = vor.u32 %v1205, %v1206
      %v1209 = vsel %vm1074, %v1201, %v1208
      %v1210 = vrot.slane %v1205, 4
      %v1212 = vshrl.u32 %v1057, 16
      %v1214 = vrot.slane %v1212, 7
      %v1215 = vshll.u32 %v1057, 16
      %v1217 = vor.u32 %v1214, %v1215
      %v1218 = vrot.slane %v1214, 4
      %v1220 = vshrl.u32 %v1058, 16
      %v1222 = vrot.slane %v1220, 7
      %v1223 = vshll.u32 %v1058, 16
      %v1225 = vor.u32 %v1222, %v1223
      %v1226 = vsel %vm1074, %v1218, %v1225
      %v1227 = vrot.slane %v1222, 4
      %v1229 = vshrl.u32 %v1059, 16
      %v1231 = vrot.slane %v1229, 7
      %v1232 = vshll.u32 %v1059, 16
      %v1234 = vor.u32 %v1231, %v1232
      %v1235 = vrot.slane %v1231, 4
      %v1237 = vshrl.u32 %v1060, 16
      %v1239 = vrot.slane %v1237, 7
      %v1240 = vshll.u32 %v1060, 16
      %v1242 = vor.u32 %v1239, %v1240
      %v1243 = vsel %vm1074, %v1235, %v1242
      %v1244 = vrot.slane %v1239, 4
      %v1246 = vshrl.u32 %v1061, 16
      %v1248 = vrot.slane %v1246, 7
      %v1249 = vshll.u32 %v1061, 16
      %v1251 = vor.u32 %v1248, %v1249
      %v1252 = vrot.slane %v1248, 4
      %v1254 = vshrl.u32 %v1062, 16
      %v1256 = vrot.slane %v1254, 7
      %v1257 = vshll.u32 %v1062, 16
      %v1259 = vor.u32 %v1256, %v1257
      %v1260 = vsel %vm1074, %v1252, %v1259
      %v1261 = vrot.slane %v1256, 4
      %v1263 = vshrl.u32 %v1063, 16
      %v1265 = vrot.slane %v1263, 7
      %v1266 = vshll.u32 %v1063, 16
      %v1268 = vor.u32 %v1265, %v1266
      %v1269 = vrot.slane %v1265, 4
      %v1271 = vshrl.u32 %v1064, 16
      %v1273 = vrot.slane %v1271, 7
      %v1274 = vshll.u32 %v1064, 16
      %v1276 = vor.u32 %v1273, %v1274
      %v1277 = vsel %vm1074, %v1269, %v1276
      %v1278 = vrot.slane %v1273, 4
      %v1280 = vshrl.u32 %v1065, 16
      %v1282 = vrot.slane %v1280, 7
      %v1283 = vshll.u32 %v1065, 16
      %v1285 = vor.u32 %v1282, %v1283
      %v1286 = vrot.slane %v1282, 4
      %v1288 = vshrl.u32 %v1066, 16
      %v1290 = vrot.slane %v1288, 7
      %v1291 = vshll.u32 %v1066, 16
      %v1293 = vor.u32 %v1290, %v1291
      %v1294 = vsel %vm1074, %v1286, %v1293
      %v1295 = vrot.slane %v1290, 4
      %v1297 = vshrl.u32 %v1067, 16
      %v1299 = vrot.slane %v1297, 7
      %v1300 = vshll.u32 %v1067, 16
      %v1302 = vor.u32 %v1299, %v1300
      %v1303 = vrot.slane %v1299, 4
      %v1305 = vshrl.u32 %v1068, 16
      %v1307 = vrot.slane %v1305, 7
      %v1308 = vshll.u32 %v1068, 16
      %v1310 = vor.u32 %v1307, %v1308
      %v1311 = vsel %vm1074, %v1303, %v1310
      %v1312 = vrot.slane %v1307, 4
      %v1314 = vshrl.u32 %v1069, 16
      %v1316 = vrot.slane %v1314, 7
      %v1317 = vshll.u32 %v1069, 16
      %v1319 = vor.u32 %v1316, %v1317
      %v1320 = vrot.slane %v1316, 4
      %v1322 = vshrl.u32 %v1070, 16
      %v1324 = vrot.slane %v1322, 7
      %v1325 = vshll.u32 %v1070, 16
      %v1327 = vor.u32 %v1324, %v1325
      %v1328 = vsel %vm1074, %v1320, %v1327
      %v1329 = vrot.slane %v1324, 4
      %v1331 = vshrl.u32 %v1071, 16
      %v1333 = vrot.slane %v1331, 7
      %v1334 = vshll.u32 %v1071, 16
      %v1336 = vor.u32 %v1333, %v1334
      %v1337 = vrot.slane %v1333, 4
      %v1339 = vshrl.u32 %v1072, 16
      %v1341 = vrot.slane %v1339, 7
      %v1342 = vshll.u32 %v1072, 16
      %v1344 = vor.u32 %v1341, %v1342
      %v1345 = vsel %vm1074, %v1337, %v1344
      %v1346 = vrot.slane %v1341, 4
      %s1395 = scalar_lea.vmem [#allocation2], 12
      %vm1396 = vcmask 257024
      %vm1397 = vmand %vm1396, %vm591
      %v1398 = vld [vmem:[%s1395] sm:$0xf]
      %v1399 = vsel %vm1397, %v1081, %v1398
      %1400 = vst [vmem:[%s1395] sm:$0xf] %v1399
      %vm1401 = vcmask 257024
      %1402 = vst.msk [vmem:[%s1395 + $0x4] sm:$0xf] %vm1401, %v1090
      %v1403 = vld [vmem:[%s1395 + $0x8] sm:$0x1]
      %v1404 = vsel %vm536, %v1091, %v1403
      %1405 = vst [vmem:[%s1395 + $0x8] sm:$0x1] %v1404
      %v1406 = vld [vmem:[%s1395 + $0xc] sm:$0xf]
      %v1407 = vsel %vm1397, %v1098, %v1406
      %1408 = vst [vmem:[%s1395 + $0xc] sm:$0xf] %v1407
      %1409 = vst.msk [vmem:[%s1395 + $0x10] sm:$0xf] %vm1401, %v1107
      %v1410 = vld [vmem:[%s1395 + $0x14] sm:$0x1]
      %v1411 = vsel %vm536, %v1108, %v1410
      %1412 = vst [vmem:[%s1395 + $0x14] sm:$0x1] %v1411
      %v1413 = vld [vmem:[%s1395 + $0x18] sm:$0xf]
      %v1414 = vsel %vm1397, %v1115, %v1413
      %1415 = vst [vmem:[%s1395 + $0x18] sm:$0xf] %v1414
      %1416 = vst.msk [vmem:[%s1395 + $0x1c] sm:$0xf] %vm1401, %v1124
      %v1417 = vld [vmem:[%s1395 + $0x20] sm:$0x1]
      %v1418 = vsel %vm536, %v1125, %v1417
      %1419 = vst [vmem:[%s1395 + $0x20] sm:$0x1] %v1418
      %v1420 = vld [vmem:[%s1395 + $0x24] sm:$0xf]
      %v1421 = vsel %vm1397, %v1132, %v1420
      %1422 = vst [vmem:[%s1395 + $0x24] sm:$0xf] %v1421
      %1423 = vst.msk [vmem:[%s1395 + $0x28] sm:$0xf] %vm1401, %v1141
      %v1424 = vld [vmem:[%s1395 + $0x2c] sm:$0x1]
      %v1425 = vsel %vm536, %v1142, %v1424
      %1426 = vst [vmem:[%s1395 + $0x2c] sm:$0x1] %v1425
      %v1427 = vld [vmem:[%s1395 + $0x30] sm:$0xf]
      %v1428 = vsel %vm1397, %v1149, %v1427
      %1429 = vst [vmem:[%s1395 + $0x30] sm:$0xf] %v1428
      %1430 = vst.msk [vmem:[%s1395 + $0x34] sm:$0xf] %vm1401, %v1158
      %v1431 = vld [vmem:[%s1395 + $0x38] sm:$0x1]
      %v1432 = vsel %vm536, %v1159, %v1431
      %1433 = vst [vmem:[%s1395 + $0x38] sm:$0x1] %v1432
      %v1434 = vld [vmem:[%s1395 + $0x3c] sm:$0xf]
      %v1435 = vsel %vm1397, %v1166, %v1434
      %1436 = vst [vmem:[%s1395 + $0x3c] sm:$0xf] %v1435
      %1437 = vst.msk [vmem:[%s1395 + $0x40] sm:$0xf] %vm1401, %v1175
      %v1438 = vld [vmem:[%s1395 + $0x44] sm:$0x1]
      %v1439 = vsel %vm536, %v1176, %v1438
      %1440 = vst [vmem:[%s1395 + $0x44] sm:$0x1] %v1439
      %v1441 = vld [vmem:[%s1395 + $0x48] sm:$0xf]
      %v1442 = vsel %vm1397, %v1183, %v1441
      %1443 = vst [vmem:[%s1395 + $0x48] sm:$0xf] %v1442
      %1444 = vst.msk [vmem:[%s1395 + $0x4c] sm:$0xf] %vm1401, %v1192
      %v1445 = vld [vmem:[%s1395 + $0x50] sm:$0x1]
      %v1446 = vsel %vm536, %v1193, %v1445
      %1447 = vst [vmem:[%s1395 + $0x50] sm:$0x1] %v1446
      %v1448 = vld [vmem:[%s1395 + $0x54] sm:$0xf]
      %v1449 = vsel %vm1397, %v1200, %v1448
      %1450 = vst [vmem:[%s1395 + $0x54] sm:$0xf] %v1449
      %1451 = vst.msk [vmem:[%s1395 + $0x58] sm:$0xf] %vm1401, %v1209
      %v1452 = vld [vmem:[%s1395 + $0x5c] sm:$0x1]
      %v1453 = vsel %vm536, %v1210, %v1452
      %1454 = vst [vmem:[%s1395 + $0x5c] sm:$0x1] %v1453
      %v1455 = vld [vmem:[%s1395 + $0x60] sm:$0xf]
      %v1456 = vsel %vm1397, %v1217, %v1455
      %1457 = vst [vmem:[%s1395 + $0x60] sm:$0xf] %v1456
      %1458 = vst.msk [vmem:[%s1395 + $0x64] sm:$0xf] %vm1401, %v1226
      %v1459 = vld [vmem:[%s1395 + $0x68] sm:$0x1]
      %v1460 = vsel %vm536, %v1227, %v1459
      %1461 = vst [vmem:[%s1395 + $0x68] sm:$0x1] %v1460
      %v1462 = vld [vmem:[%s1395 + $0x6c] sm:$0xf]
      %v1463 = vsel %vm1397, %v1234, %v1462
      %1464 = vst [vmem:[%s1395 + $0x6c] sm:$0xf] %v1463
      %1465 = vst.msk [vmem:[%s1395 + $0x70] sm:$0xf] %vm1401, %v1243
      %v1466 = vld [vmem:[%s1395 + $0x74] sm:$0x1]
      %v1467 = vsel %vm536, %v1244, %v1466
      %1468 = vst [vmem:[%s1395 + $0x74] sm:$0x1] %v1467
      %v1469 = vld [vmem:[%s1395 + $0x78] sm:$0xf]
      %v1470 = vsel %vm1397, %v1251, %v1469
      %1471 = vst [vmem:[%s1395 + $0x78] sm:$0xf] %v1470
      %1472 = vst.msk [vmem:[%s1395 + $0x7c] sm:$0xf] %vm1401, %v1260
      %v1473 = vld [vmem:[%s1395 + $0x80] sm:$0x1]
      %v1474 = vsel %vm536, %v1261, %v1473
      %1475 = vst [vmem:[%s1395 + $0x80] sm:$0x1] %v1474
      %v1476 = vld [vmem:[%s1395 + $0x84] sm:$0xf]
      %v1477 = vsel %vm1397, %v1268, %v1476
      %1478 = vst [vmem:[%s1395 + $0x84] sm:$0xf] %v1477
      %1479 = vst.msk [vmem:[%s1395 + $0x88] sm:$0xf] %vm1401, %v1277
      %v1480 = vld [vmem:[%s1395 + $0x8c] sm:$0x1]
      %v1481 = vsel %vm536, %v1278, %v1480
      %1482 = vst [vmem:[%s1395 + $0x8c] sm:$0x1] %v1481
      %v1483 = vld [vmem:[%s1395 + $0x90] sm:$0xf]
      %v1484 = vsel %vm1397, %v1285, %v1483
      %1485 = vst [vmem:[%s1395 + $0x90] sm:$0xf] %v1484
      %1486 = vst.msk [vmem:[%s1395 + $0x94] sm:$0xf] %vm1401, %v1294
      %v1487 = vld [vmem:[%s1395 + $0x98] sm:$0x1]
      %v1488 = vsel %vm536, %v1295, %v1487
      %1489 = vst [vmem:[%s1395 + $0x98] sm:$0x1] %v1488
      %v1490 = vld [vmem:[%s1395 + $0x9c] sm:$0xf]
      %v1491 = vsel %vm1397, %v1302, %v1490
      %1492 = vst [vmem:[%s1395 + $0x9c] sm:$0xf] %v1491
      %1493 = vst.msk [vmem:[%s1395 + $0xa0] sm:$0xf] %vm1401, %v1311
      %v1494 = vld [vmem:[%s1395 + $0xa4] sm:$0x1]
      %v1495 = vsel %vm536, %v1312, %v1494
      %1496 = vst [vmem:[%s1395 + $0xa4] sm:$0x1] %v1495
      %v1497 = vld [vmem:[%s1395 + $0xa8] sm:$0xf]
      %v1498 = vsel %vm1397, %v1319, %v1497
      %1499 = vst [vmem:[%s1395 + $0xa8] sm:$0xf] %v1498
      %1500 = vst.msk [vmem:[%s1395 + $0xac] sm:$0xf] %vm1401, %v1328
      %v1501 = vld [vmem:[%s1395 + $0xb0] sm:$0x1]
      %v1502 = vsel %vm536, %v1329, %v1501
      %1503 = vst [vmem:[%s1395 + $0xb0] sm:$0x1] %v1502
      %v1504 = vld [vmem:[%s1395 + $0xb4] sm:$0xf]
      %v1505 = vsel %vm1397, %v1336, %v1504
      %1506 = vst [vmem:[%s1395 + $0xb4] sm:$0xf] %v1505
      %1507 = vst.msk [vmem:[%s1395 + $0xb8] sm:$0xf] %vm1401, %v1345
      %v1508 = vld [vmem:[%s1395 + $0xbc] sm:$0x1]
      %v1509 = vsel %vm536, %v1346, %v1508
      %1510 = vst [vmem:[%s1395 + $0xbc] sm:$0x1] %v1509
      %v1511 = vld [vmem:[%s484] sm:$0xff]
      %v1512 = vld [vmem:[%s484 + $0x8] sm:$0xff]
      %v1513 = vmul.f32 %v1511, %v680
      %v1514 = vmul.f32 %v1512, %v680
      %v1515 = vadd.f32 %v1513, %v715
      %v1516 = vadd.f32 %v1514, %v715
      %v1517 = vmax.f32 %v1515, 0.0
      %v1518 = vmax.f32 %v1516, 0.0
      %v1519 = vpack.c.bf16 %v1518, %v1517
      %v1521 = vsel %vm797, %v1519, 0
      %1523 = vmatpush.bf16.msra.mxu0 0
      %1524 = vmatpush.bf16.msra.mxu0 0
      %1525 = vmatpush.bf16.msra.mxu0 0
      %1526 = vmatpush.bf16.msra.mxu0 0
      %1527 = vmatpush.bf16.msra.mxu0 0
      %1528 = vmatpush.bf16.msra.mxu0 0
      %1529 = vmatpush.bf16.msra.mxu0 0
      %1530 = vmatpush.bf16.msra.mxu0 %v848
      %1531 = vmatmul.bf16.gmra.mxu0 %v1521
      %v1532 = vpop.f32.mrf.mxu0
      %v1533 = vadd.f32 0.0, %v1532
      %v1534 = vpop.f32.mrf.mxu0
      %v1535 = vadd.f32 0.0, %v1534
      %1536 = vdwg.mxu0
      %v1537 = vmul.f32 %v1533, %v940
      %v1538 = vmul.f32 %v1535, %v940
      %v1539 = vadd.f32 %v1537, %v975
      %v1540 = vadd.f32 %v1538, %v975
      %v1541 = vmax.f32 %v1539, 0.0
      %v1542 = vmax.f32 %v1540, 0.0
      %v1543 = vpack.c.bf16 %v1541, %v1541
      %v1544 = vpack.c.bf16 %v1542, %v1542
      %v1545 = vld [vmem:[%s512] sm:$0xff]
      %v1546 = vld [vmem:[%s512 + $0x8] sm:$0xff]
      %v1547 = vmul.f32 %v1545, %v680
      %v1548 = vmul.f32 %v1546, %v680
      %v1549 = vadd.f32 %v1547, %v715
      %v1550 = vadd.f32 %v1548, %v715
      %v1551 = vmax.f32 %v1549, 0.0
      %v1552 = vmax.f32 %v1550, 0.0
      %v1553 = vpack.c.bf16 %v1552, %v1551
      %v1555 = vsel %vm797, %v1553, 0
      %1557 = vmatpush.bf16.msra.mxu0 0
      %1558 = vmatpush.bf16.msra.mxu0 0
      %1559 = vmatpush.bf16.msra.mxu0 0
      %1560 = vmatpush.bf16.msra.mxu0 0
      %1561 = vmatpush.bf16.msra.mxu0 0
      %1562 = vmatpush.bf16.msra.mxu0 0
      %1563 = vmatpush.bf16.msra.mxu0 0
      %1564 = vmatpush.bf16.msra.mxu0 %v848
      %1565 = vmatmul.bf16.gmra.mxu0 %v1555
      %v1566 = vpop.f32.mrf.mxu0
      %v1567 = vadd.f32 0.0, %v1566
      %v1568 = vpop.f32.mrf.mxu0
      %v1569 = vadd.f32 0.0, %v1568
      %1570 = vdwg.mxu0
      %v1571 = vmul.f32 %v1567, %v940
      %v1572 = vmul.f32 %v1569, %v940
      %v1573 = vadd.f32 %v1571, %v975
      %v1574 = vadd.f32 %v1572, %v975
      %v1575 = vmax.f32 %v1573, 0.0
      %v1576 = vmax.f32 %v1574, 0.0
      %v1577 = vpack.c.bf16 %v1575, %v1575
      %v1578 = vpack.c.bf16 %v1576, %v1576
      %v1580 = vshrl.u32 %v1543, 16
      %v1582 = vrot.slane %v1580, 7
      %v1583 = vshll.u32 %v1543, 16
      %v1585 = vor.u32 %v1582, %v1583
      %v1586 = vrot.slane %v1582, 4
      %v1588 = vshrl.u32 %v1544, 16
      %v1590 = vrot.slane %v1588, 7
      %v1591 = vshll.u32 %v1544, 16
      %v1593 = vor.u32 %v1590, %v1591
      %v1594 = vsel %vm1074, %v1586, %v1593
      %v1595 = vrot.slane %v1590, 4
      %v1599 = vld [vmem:[#allocation2] sm:$0xf]
      %v1600 = vsel %vm1397, %v1585, %v1599
      %1601 = vst [vmem:[#allocation2] sm:$0xf] %v1600
      %1602 = vst.msk [vmem:[#allocation2 + $0x4] sm:$0xf] %vm1401, %v1594
      %v1603 = vld [vmem:[#allocation2 + $0x8] sm:$0x1]
      %v1604 = vsel %vm536, %v1595, %v1603
      %1605 = vst [vmem:[#allocation2 + $0x8] sm:$0x1] %v1604
      %v1607 = vshrl.u32 %v1577, 16
      %v1609 = vrot.slane %v1607, 7
      %v1610 = vshll.u32 %v1577, 16
      %v1612 = vor.u32 %v1609, %v1610
      %v1613 = vrot.slane %v1609, 4
      %v1615 = vshrl.u32 %v1578, 16
      %v1617 = vrot.slane %v1615, 7
      %v1618 = vshll.u32 %v1578, 16
      %v1620 = vor.u32 %v1617, %v1618
      %v1621 = vsel %vm1074, %v1613, %v1620
      %v1622 = vrot.slane %v1617, 4
      %s1626 = scalar_lea.vmem [#allocation2], 204
      %v1627 = vld [vmem:[%s1626] sm:$0xf]
      %v1628 = vsel %vm1397, %v1612, %v1627
      %1629 = vst [vmem:[%s1626] sm:$0xf] %v1628
      %1630 = vst.msk [vmem:[%s1626 + $0x4] sm:$0xf] %vm1401, %v1621
      %v1631 = vld [vmem:[%s1626 + $0x8] sm:$0x1]
      %v1632 = vsel %vm536, %v1622, %v1631
      %1633 = vst [vmem:[%s1626 + $0x8] sm:$0x1] %v1632
      %p1634 = scmp.eq.s32.totalorder %s26, 0
      // Predicated region
      $region61: #{bottleneck_forward.1} parent=59 // pred_check
        %p1635 = pneg %p1634
      $region62: #{bottleneck_forward.1} parent=59 // pred_check_branch
        %1637 = sbr.rel (%p1635) target = $region64
      $region63: #{bottleneck_forward.1} parent=59 // pred_region
        %1638 = vst.msk [vmem:[#allocation2] sm:$0xf] %vm1401, 0
        %1639 = vst.msk [vmem:[#allocation2 + $0x4] sm:$0xf] %vm1401, 0
        %vm1640 = vcmask 253952
        %1641 = vst.msk [vmem:[#allocation2 + $0x8] sm:$0x1] %vm1640, 0
        %1642 = vst.msk [vmem:[%s1626] sm:$0xf] %vm1401, 0
        %1643 = vst.msk [vmem:[%s1626 + $0x4] sm:$0xf] %vm1401, 0
        %1644 = vst.msk [vmem:[%s1626 + $0x8] sm:$0x1] %vm1640, 0
      $region64: #{bottleneck_forward.1} parent=59 // pred_fallthru
        _
      %v1645 = vld [vmem:[#allocation2] sm:$0xf]
      %v1646 = vld [vmem:[#allocation2 + $0x4] sm:$0xf]
      %v1647 = vld [vmem:[#allocation2 + $0xc] sm:$0xf]
      %v1648 = vld [vmem:[#allocation2 + $0x10] sm:$0xf]
      %v1649 = vld [vmem:[#allocation2 + $0x18] sm:$0xf]
      %v1650 = vld [vmem:[#allocation2 + $0x1c] sm:$0xf]
      %v1651 = vld [vmem:[#allocation2 + $0x24] sm:$0xf]
      %v1652 = vld [vmem:[#allocation2 + $0x28] sm:$0xf]
      %v1653 = vld [vmem:[#allocation2 + $0x30] sm:$0xf]
      %v1654 = vld [vmem:[#allocation2 + $0x34] sm:$0xf]
      %v1655 = vld [vmem:[#allocation2 + $0x3c] sm:$0xf]
      %v1656 = vld [vmem:[#allocation2 + $0x40] sm:$0xf]
      %v1657 = vld [vmem:[#allocation2 + $0x48] sm:$0xf]
      %v1658 = vld [vmem:[#allocation2 + $0x4c] sm:$0xf]
      %v1659 = vld [vmem:[#allocation2 + $0x54] sm:$0xf]
      %v1660 = vld [vmem:[#allocation2 + $0x58] sm:$0xf]
      %v1661 = vld [vmem:[#allocation2 + $0x60] sm:$0xf]
      %v1662 = vld [vmem:[#allocation2 + $0x64] sm:$0xf]
      %v1663 = vld [vmem:[#allocation2 + $0x6c] sm:$0xf]
      %v1664 = vld [vmem:[#allocation2 + $0x70] sm:$0xf]
      %v1665 = vld [vmem:[#allocation2 + $0x78] sm:$0xf]
      %v1666 = vld [vmem:[#allocation2 + $0x7c] sm:$0xf]
      %v1667 = vld [vmem:[#allocation2 + $0x84] sm:$0xf]
      %v1668 = vld [vmem:[#allocation2 + $0x88] sm:$0xf]
      %v1669 = vld [vmem:[#allocation2 + $0x90] sm:$0xf]
      %v1670 = vld [vmem:[#allocation2 + $0x94] sm:$0xf]
      %v1671 = vld [vmem:[#allocation2 + $0x9c] sm:$0xf]
      %v1672 = vld [vmem:[#allocation2 + $0xa0] sm:$0xf]
      %v1673 = vld [vmem:[#allocation2 + $0xa8] sm:$0xf]
      %v1674 = vld [vmem:[#allocation2 + $0xac] sm:$0xf]
      %v1675 = vld [vmem:[#allocation2 + $0xb4] sm:$0xf]
      %v1676 = vld [vmem:[#allocation2 + $0xb8] sm:$0xf]
      %v1677 = vld [vmem:[%s8] sm:$0xf]
      %v1678 = vld [vmem:[%s8 + $0x4] sm:$0xf]
      %v1679 = vld [vmem:[%s8 + $0x8] sm:$0xf]
      %v1680 = vld [vmem:[%s8 + $0xc] sm:$0xf]
      %v1681 = vld [vmem:[#allocation2 + $0x8] sm:$0x1]
      %v1682 = vld [vmem:[#allocation2 + $0x14] sm:$0x1]
      %v1683 = vld [vmem:[#allocation2 + $0x20] sm:$0x1]
      %v1684 = vld [vmem:[#allocation2 + $0x2c] sm:$0x1]
      %v1685 = vld [vmem:[#allocation2 + $0x38] sm:$0x1]
      %v1686 = vld [vmem:[#allocation2 + $0x44] sm:$0x1]
      %v1687 = vld [vmem:[#allocation2 + $0x50] sm:$0x1]
      %v1688 = vld [vmem:[#allocation2 + $0x5c] sm:$0x1]
      %v1689 = vld [vmem:[#allocation2 + $0x68] sm:$0x1]
      %v1690 = vld [vmem:[#allocation2 + $0x74] sm:$0x1]
      %v1691 = vld [vmem:[#allocation2 + $0x80] sm:$0x1]
      %v1692 = vld [vmem:[#allocation2 + $0x8c] sm:$0x1]
      %v1693 = vld [vmem:[#allocation2 + $0x98] sm:$0x1]
      %v1694 = vld [vmem:[#allocation2 + $0xa4] sm:$0x1]
      %v1695 = vld [vmem:[#allocation2 + $0xb0] sm:$0x1]
      %v1696 = vld [vmem:[#allocation2 + $0xbc] sm:$0x1]
      %vm1697 = vsmask.f32 3328
      %vm1698 = vsmask.f32 7440
      %vm1699 = vmor %vm1697, %vm1698
      %v1701 = vshrl.u32 %v1645, 16
      %v1703 = vrot.slane %v1701, 4
      %v1704 = vshll.u32 %v1645, 16
      %v1706 = vrot.slane %v1704, 5
      %v1707 = vor.u32 %v1703, %v1706
      %v1708 = vrot.slane %v1707, 4
      %v1710 = vshll.u32 %v1646, 16
      %v1712 = vrot.slane %v1710, 5
      %v1713 = vsel %vm1699, %v1708, %v1712
      %v1714 = vshrl.u32 %v1646, 16
      %v1716 = vrot.slane %v1714, 4
      %v1717 = vor.u32 %v1716, %v1712
      %v1718 = vrot.slane %v1717, 4
      %v1720 = vshll.u32 %v1681, 16
      %v1722 = vrot.slane %v1720, 5
      %v1723 = vsel %vm1699, %v1718, %v1722
      %v1725 = vshrl.u32 %v1647, 16
      %v1727 = vrot.slane %v1725, 4
      %v1728 = vshll.u32 %v1647, 16
      %v1730 = vrot.slane %v1728, 5
      %v1731 = vor.u32 %v1727, %v1730
      %v1732 = vrot.slane %v1731, 4
      %v1734 = vshll.u32 %v1648, 16
      %v1736 = vrot.slane %v1734, 5
      %v1737 = vsel %vm1699, %v1732, %v1736
      %v1738 = vshrl.u32 %v1648, 16
      %v1740 = vrot.slane %v1738, 4
      %v1741 = vor.u32 %v1740, %v1736
      %v1742 = vrot.slane %v1741, 4
      %v1744 = vshll.u32 %v1682, 16
      %v1746 = vrot.slane %v1744, 5
      %v1747 = vsel %vm1699, %v1742, %v1746
      %v1749 = vshrl.u32 %v1649, 16
      %v1751 = vrot.slane %v1749, 4
      %v1752 = vshll.u32 %v1649, 16
      %v1754 = vrot.slane %v1752, 5
      %v1755 = vor.u32 %v1751, %v1754
      %v1756 = vrot.slane %v1755, 4
      %v1758 = vshll.u32 %v1650, 16
      %v1760 = vrot.slane %v1758, 5
      %v1761 = vsel %vm1699, %v1756, %v1760
      %v1762 = vshrl.u32 %v1650, 16
      %v1764 = vrot.slane %v1762, 4
      %v1765 = vor.u32 %v1764, %v1760
      %v1766 = vrot.slane %v1765, 4
      %v1768 = vshll.u32 %v1683, 16
      %v1770 = vrot.slane %v1768, 5
      %v1771 = vsel %vm1699, %v1766, %v1770
      %v1773 = vshrl.u32 %v1651, 16
      %v1775 = vrot.slane %v1773, 4
      %v1776 = vshll.u32 %v1651, 16
      %v1778 = vrot.slane %v1776, 5
      %v1779 = vor.u32 %v1775, %v1778
      %v1780 = vrot.slane %v1779, 4
      %v1782 = vshll.u32 %v1652, 16
      %v1784 = vrot.slane %v1782, 5
      %v1785 = vsel %vm1699, %v1780, %v1784
      %v1786 = vshrl.u32 %v1652, 16
      %v1788 = vrot.slane %v1786, 4
      %v1789 = vor.u32 %v1788, %v1784
      %v1790 = vrot.slane %v1789, 4
      %v1792 = vshll.u32 %v1684, 16
      %v1794 = vrot.slane %v1792, 5
      %v1795 = vsel %vm1699, %v1790, %v1794
      %v1797 = vshrl.u32 %v1653, 16
      %v1799 = vrot.slane %v1797, 4
      %v1800 = vshll.u32 %v1653, 16
      %v1802 = vrot.slane %v1800, 5
      %v1803 = vor.u32 %v1799, %v1802
      %v1804 = vrot.slane %v1803, 4
      %v1806 = vshll.u32 %v1654, 16
      %v1808 = vrot.slane %v1806, 5
      %v1809 = vsel %vm1699, %v1804, %v1808
      %v1810 = vshrl.u32 %v1654, 16
      %v1812 = vrot.slane %v1810, 4
      %v1813 = vor.u32 %v1812, %v1808
      %v1814 = vrot.slane %v1813, 4
      %v1816 = vshll.u32 %v1685, 16
      %v1818 = vrot.slane %v1816, 5
      %v1819 = vsel %vm1699, %v1814, %v1818
      %v1821 = vshrl.u32 %v1655, 16
      %v1823 = vrot.slane %v1821, 4
      %v1824 = vshll.u32 %v1655, 16
      %v1826 = vrot.slane %v1824, 5
      %v1827 = vor.u32 %v1823, %v1826
      %v1828 = vrot.slane %v1827, 4
      %v1830 = vshll.u32 %v1656, 16
      %v1832 = vrot.slane %v1830, 5
      %v1833 = vsel %vm1699, %v1828, %v1832
      %v1834 = vshrl.u32 %v1656, 16
      %v1836 = vrot.slane %v1834, 4
      %v1837 = vor.u32 %v1836, %v1832
      %v1838 = vrot.slane %v1837, 4
      %v1840 = vshll.u32 %v1686, 16
      %v1842 = vrot.slane %v1840, 5
      %v1843 = vsel %vm1699, %v1838, %v1842
      %v1845 = vshrl.u32 %v1657, 16
      %v1847 = vrot.slane %v1845, 4
      %v1848 = vshll.u32 %v1657, 16
      %v1850 = vrot.slane %v1848, 5
      %v1851 = vor.u32 %v1847, %v1850
      %v1852 = vrot.slane %v1851, 4
      %v1854 = vshll.u32 %v1658, 16
      %v1856 = vrot.slane %v1854, 5
      %v1857 = vsel %vm1699, %v1852, %v1856
      %v1858 = vshrl.u32 %v1658, 16
      %v1860 = vrot.slane %v1858, 4
      %v1861 = vor.u32 %v1860, %v1856
      %v1862 = vrot.slane %v1861, 4
      %v1864 = vshll.u32 %v1687, 16
      %v1866 = vrot.slane %v1864, 5
      %v1867 = vsel %vm1699, %v1862, %v1866
      %v1869 = vshrl.u32 %v1659, 16
      %v1871 = vrot.slane %v1869, 4
      %v1872 = vshll.u32 %v1659, 16
      %v1874 = vrot.slane %v1872, 5
      %v1875 = vor.u32 %v1871, %v1874
      %v1876 = vrot.slane %v1875, 4
      %v1878 = vshll.u32 %v1660, 16
      %v1880 = vrot.slane %v1878, 5
      %v1881 = vsel %vm1699, %v1876, %v1880
      %v1882 = vshrl.u32 %v1660, 16
      %v1884 = vrot.slane %v1882, 4
      %v1885 = vor.u32 %v1884, %v1880
      %v1886 = vrot.slane %v1885, 4
      %v1888 = vshll.u32 %v1688, 16
      %v1890 = vrot.slane %v1888, 5
      %v1891 = vsel %vm1699, %v1886, %v1890
      %v1893 = vshrl.u32 %v1661, 16
      %v1895 = vrot.slane %v1893, 4
      %v1896 = vshll.u32 %v1661, 16
      %v1898 = vrot.slane %v1896, 5
      %v1899 = vor.u32 %v1895, %v1898
      %v1900 = vrot.slane %v1899, 4
      %v1902 = vshll.u32 %v1662, 16
      %v1904 = vrot.slane %v1902, 5
      %v1905 = vsel %vm1699, %v1900, %v1904
      %v1906 = vshrl.u32 %v1662, 16
      %v1908 = vrot.slane %v1906, 4
      %v1909 = vor.u32 %v1908, %v1904
      %v1910 = vrot.slane %v1909, 4
      %v1912 = vshll.u32 %v1689, 16
      %v1914 = vrot.slane %v1912, 5
      %v1915 = vsel %vm1699, %v1910, %v1914
      %v1917 = vshrl.u32 %v1663, 16
      %v1919 = vrot.slane %v1917, 4
      %v1920 = vshll.u32 %v1663, 16
      %v1922 = vrot.slane %v1920, 5
      %v1923 = vor.u32 %v1919, %v1922
      %v1924 = vrot.slane %v1923, 4
      %v1926 = vshll.u32 %v1664, 16
      %v1928 = vrot.slane %v1926, 5
      %v1929 = vsel %vm1699, %v1924, %v1928
      %v1930 = vshrl.u32 %v1664, 16
      %v1932 = vrot.slane %v1930, 4
      %v1933 = vor.u32 %v1932, %v1928
      %v1934 = vrot.slane %v1933, 4
      %v1936 = vshll.u32 %v1690, 16
      %v1938 = vrot.slane %v1936, 5
      %v1939 = vsel %vm1699, %v1934, %v1938
      %v1941 = vshrl.u32 %v1665, 16
      %v1943 = vrot.slane %v1941, 4
      %v1944 = vshll.u32 %v1665, 16
      %v1946 = vrot.slane %v1944, 5
      %v1947 = vor.u32 %v1943, %v1946
      %v1948 = vrot.slane %v1947, 4
      %v1950 = vshll.u32 %v1666, 16
      %v1952 = vrot.slane %v1950, 5
      %v1953 = vsel %vm1699, %v1948, %v1952
      %v1954 = vshrl.u32 %v1666, 16
      %v1956 = vrot.slane %v1954, 4
      %v1957 = vor.u32 %v1956, %v1952
      %v1958 = vrot.slane %v1957, 4
      %v1960 = vshll.u32 %v1691, 16
      %v1962 = vrot.slane %v1960, 5
      %v1963 = vsel %vm1699, %v1958, %v1962
      %v1965 = vshrl.u32 %v1667, 16
      %v1967 = vrot.slane %v1965, 4
      %v1968 = vshll.u32 %v1667, 16
      %v1970 = vrot.slane %v1968, 5
      %v1971 = vor.u32 %v1967, %v1970
      %v1972 = vrot.slane %v1971, 4
      %v1974 = vshll.u32 %v1668, 16
      %v1976 = vrot.slane %v1974, 5
      %v1977 = vsel %vm1699, %v1972, %v1976
      %v1978 = vshrl.u32 %v1668, 16
      %v1980 = vrot.slane %v1978, 4
      %v1981 = vor.u32 %v1980, %v1976
      %v1982 = vrot.slane %v1981, 4
      %v1984 = vshll.u32 %v1692, 16
      %v1986 = vrot.slane %v1984, 5
      %v1987 = vsel %vm1699, %v1982, %v1986
      %v1989 = vshrl.u32 %v1669, 16
      %v1991 = vrot.slane %v1989, 4
      %v1992 = vshll.u32 %v1669, 16
      %v1994 = vrot.slane %v1992, 5
      %v1995 = vor.u32 %v1991, %v1994
      %v1996 = vrot.slane %v1995, 4
      %v1998 = vshll.u32 %v1670, 16
      %v2000 = vrot.slane %v1998, 5
      %v2001 = vsel %vm1699, %v1996, %v2000
      %v2002 = vshrl.u32 %v1670, 16
      %v2004 = vrot.slane %v2002, 4
      %v2005 = vor.u32 %v2004, %v2000
      %v2006 = vrot.slane %v2005, 4
      %v2008 = vshll.u32 %v1693, 16
      %v2010 = vrot.slane %v2008, 5
      %v2011 = vsel %vm1699, %v2006, %v2010
      %v2013 = vshrl.u32 %v1671, 16
      %v2015 = vrot.slane %v2013, 4
      %v2016 = vshll.u32 %v1671, 16
      %v2018 = vrot.slane %v2016, 5
      %v2019 = vor.u32 %v2015, %v2018
      %v2020 = vrot.slane %v2019, 4
      %v2022 = vshll.u32 %v1672, 16
      %v2024 = vrot.slane %v2022, 5
      %v2025 = vsel %vm1699, %v2020, %v2024
      %v2026 = vshrl.u32 %v1672, 16
      %v2028 = vrot.slane %v2026, 4
      %v2029 = vor.u32 %v2028, %v2024
      %v2030 = vrot.slane %v2029, 4
      %v2032 = vshll.u32 %v1694, 16
      %v2034 = vrot.slane %v2032, 5
      %v2035 = vsel %vm1699, %v2030, %v2034
      %v2037 = vshrl.u32 %v1673, 16
      %v2039 = vrot.slane %v2037, 4
      %v2040 = vshll.u32 %v1673, 16
      %v2042 = vrot.slane %v2040, 5
      %v2043 = vor.u32 %v2039, %v2042
      %v2044 = vrot.slane %v2043, 4
      %v2046 = vshll.u32 %v1674, 16
      %v2048 = vrot.slane %v2046, 5
      %v2049 = vsel %vm1699, %v2044, %v2048
      %v2050 = vshrl.u32 %v1674, 16
      %v2052 = vrot.slane %v2050, 4
      %v2053 = vor.u32 %v2052, %v2048
      %v2054 = vrot.slane %v2053, 4
      %v2056 = vshll.u32 %v1695, 16
      %v2058 = vrot.slane %v2056, 5
      %v2059 = vsel %vm1699, %v2054, %v2058
      %v2061 = vshrl.u32 %v1675, 16
      %v2063 = vrot.slane %v2061, 4
      %v2064 = vshll.u32 %v1675, 16
      %v2066 = vrot.slane %v2064, 5
      %v2067 = vor.u32 %v2063, %v2066
      %v2068 = vrot.slane %v2067, 4
      %v2070 = vshll.u32 %v1676, 16
      %v2072 = vrot.slane %v2070, 5
      %v2073 = vsel %vm1699, %v2068, %v2072
      %v2074 = vshrl.u32 %v1676, 16
      %v2076 = vrot.slane %v2074, 4
      %v2077 = vor.u32 %v2076, %v2072
      %v2078 = vrot.slane %v2077, 4
      %v2080 = vshll.u32 %v1696, 16
      %v2082 = vrot.slane %v2080, 5
      %v2083 = vsel %vm1699, %v2078, %v2082
      %s2084 = scalar_lea.vmem %s8, 16
      %v2085 = vld [vmem:[%s2084] sm:$0xf]
      %v2086 = vld [vmem:[%s2084 + $0x4] sm:$0xf]
      %v2087 = vld [vmem:[%s2084 + $0x8] sm:$0xf]
      %v2088 = vld [vmem:[%s2084 + $0xc] sm:$0xf]
      %v2089 = vunpack.c.l.b16 %v1713
      %v2090 = vunpack.c.l.b16 %v1723
      %v2091 = vunpack.c.l.b16 %v1737
      %v2092 = vunpack.c.l.b16 %v1747
      %v2093 = vunpack.c.l.b16 %v1761
      %v2094 = vunpack.c.l.b16 %v1771
      %v2095 = vunpack.c.l.b16 %v1785
      %v2096 = vunpack.c.l.b16 %v1795
      %v2097 = vunpack.c.l.b16 %v1809
      %v2098 = vunpack.c.l.b16 %v1819
      %v2099 = vunpack.c.l.b16 %v1833
      %v2100 = vunpack.c.l.b16 %v1843
      %v2101 = vunpack.c.l.b16 %v1857
      %v2102 = vunpack.c.l.b16 %v1867
      %v2103 = vunpack.c.l.b16 %v1881
      %v2104 = vunpack.c.l.b16 %v1891
      %v2105 = vunpack.c.l.b16 %v1905
      %v2106 = vunpack.c.l.b16 %v1915
      %v2107 = vunpack.c.l.b16 %v1929
      %v2108 = vunpack.c.l.b16 %v1939
      %v2109 = vunpack.c.l.b16 %v1953
      %v2110 = vunpack.c.l.b16 %v1963
      %v2111 = vunpack.c.l.b16 %v1977
      %v2112 = vunpack.c.l.b16 %v1987
      %v2113 = vunpack.c.l.b16 %v2001
      %v2114 = vunpack.c.l.b16 %v2011
      %v2115 = vunpack.c.l.b16 %v2025
      %v2116 = vunpack.c.l.b16 %v2035
      %v2117 = vunpack.c.l.b16 %v2049
      %v2118 = vunpack.c.l.b16 %v2059
      %v2119 = vunpack.c.l.b16 %v2073
      %v2120 = vunpack.c.l.b16 %v2083
      %v2121 = vpack.c.b16 %v2090, %v2089
      %v2122 = vpack.c.b16 %v2092, %v2091
      %v2123 = vpack.c.b16 %v2094, %v2093
      %v2124 = vpack.c.b16 %v2096, %v2095
      %v2125 = vpack.c.b16 %v2098, %v2097
      %v2126 = vpack.c.b16 %v2100, %v2099
      %v2127 = vpack.c.b16 %v2102, %v2101
      %v2128 = vpack.c.b16 %v2104, %v2103
      %v2129 = vpack.c.b16 %v2106, %v2105
      %v2130 = vpack.c.b16 %v2108, %v2107
      %v2131 = vpack.c.b16 %v2110, %v2109
      %v2132 = vpack.c.b16 %v2112, %v2111
      %v2133 = vpack.c.b16 %v2114, %v2113
      %v2134 = vpack.c.b16 %v2116, %v2115
      %v2135 = vpack.c.b16 %v2118, %v2117
      %v2136 = vpack.c.b16 %v2120, %v2119
      %v2141 = vunpack.c.l.b16 %v2085
      %v2142 = vunpack.c.l.b16 %v2086
      %v2143 = vunpack.c.l.b16 %v2087
      %v2144 = vunpack.c.l.b16 %v2088
      %v2145 = vpack.c.b16 %v2142, %v2141
      %v2146 = vpack.c.b16 %v2144, %v2143
      %vm2149 = vcmask 261120
      %v2151 = vsel %vm2149, %v2121, 0
      %v2154 = vsel %vm2149, %v2122, 0
      %v2157 = vsel %vm2149, %v2123, 0
      %v2160 = vsel %vm2149, %v2124, 0
      %v2163 = vsel %vm2149, %v2125, 0
      %v2166 = vsel %vm2149, %v2126, 0
      %v2169 = vsel %vm2149, %v2127, 0
      %v2172 = vsel %vm2149, %v2128, 0
      %v2175 = vsel %vm2149, %v2129, 0
      %v2178 = vsel %vm2149, %v2130, 0
      %v2181 = vsel %vm2149, %v2131, 0
      %v2184 = vsel %vm2149, %v2132, 0
      %v2187 = vsel %vm2149, %v2133, 0
      %v2190 = vsel %vm2149, %v2134, 0
      %v2193 = vsel %vm2149, %v2135, 0
      %v2196 = vsel %vm2149, %v2136, 0
      %2198 = vmatpush.bf16.msra.mxu0 0
      %2199 = vmatpush.bf16.msra.mxu0 0
      %2200 = vmatpush.bf16.msra.mxu0 0
      %2201 = vmatpush.bf16.msra.mxu0 0
      %2202 = vmatpush.bf16.msra.mxu0 0
      %2203 = vmatpush.bf16.msra.mxu0 0
      %2204 = vmatpush.bf16.msra.mxu0 %v2146
      %2205 = vmatpush.bf16.msra.mxu0 %v2145
      %2206 = vmatmul.bf16.gmra.mxu0 %v2151
      %v2207 = vpop.f32.mrf.mxu0
      %v2208 = vadd.f32 0.0, %v2207
      %v2209 = vpop.f32.mrf.mxu0
      %v2210 = vadd.f32 0.0, %v2209
      %2211 = vmatmul.bf16.gmra.mxu0 %v2154
      %v2212 = vpop.f32.mrf.mxu0
      %v2213 = vadd.f32 0.0, %v2212
      %v2214 = vpop.f32.mrf.mxu0
      %v2215 = vadd.f32 0.0, %v2214
      %2216 = vmatmul.bf16.gmra.mxu0 %v2157
      %v2217 = vpop.f32.mrf.mxu0
      %v2218 = vadd.f32 0.0, %v2217
      %v2219 = vpop.f32.mrf.mxu0
      %v2220 = vadd.f32 0.0, %v2219
      %2221 = vmatmul.bf16.gmra.mxu0 %v2160
      %v2222 = vpop.f32.mrf.mxu0
      %v2223 = vadd.f32 0.0, %v2222
      %v2224 = vpop.f32.mrf.mxu0
      %v2225 = vadd.f32 0.0, %v2224
      %2226 = vmatmul.bf16.gmra.mxu0 %v2163
      %v2227 = vpop.f32.mrf.mxu0
      %v2228 = vadd.f32 0.0, %v2227
      %v2229 = vpop.f32.mrf.mxu0
      %v2230 = vadd.f32 0.0, %v2229
      %2231 = vmatmul.bf16.gmra.mxu0 %v2166
      %v2232 = vpop.f32.mrf.mxu0
      %v2233 = vadd.f32 0.0, %v2232
      %v2234 = vpop.f32.mrf.mxu0
      %v2235 = vadd.f32 0.0, %v2234
      %2236 = vmatmul.bf16.gmra.mxu0 %v2169
      %v2237 = vpop.f32.mrf.mxu0
      %v2238 = vadd.f32 0.0, %v2237
      %v2239 = vpop.f32.mrf.mxu0
      %v2240 = vadd.f32 0.0, %v2239
      %2241 = vmatmul.bf16.gmra.mxu0 %v2172
      %v2242 = vpop.f32.mrf.mxu0
      %v2243 = vadd.f32 0.0, %v2242
      %v2244 = vpop.f32.mrf.mxu0
      %v2245 = vadd.f32 0.0, %v2244
      %2246 = vmatmul.bf16.gmra.mxu0 %v2175
      %v2247 = vpop.f32.mrf.mxu0
      %v2248 = vadd.f32 0.0, %v2247
      %v2249 = vpop.f32.mrf.mxu0
      %v2250 = vadd.f32 0.0, %v2249
      %2251 = vmatmul.bf16.gmra.mxu0 %v2178
      %v2252 = vpop.f32.mrf.mxu0
      %v2253 = vadd.f32 0.0, %v2252
      %v2254 = vpop.f32.mrf.mxu0
      %v2255 = vadd.f32 0.0, %v2254
      %2256 = vmatmul.bf16.gmra.mxu0 %v2181
      %v2257 = vpop.f32.mrf.mxu0
      %v2258 = vadd.f32 0.0, %v2257
      %v2259 = vpop.f32.mrf.mxu0
      %v2260 = vadd.f32 0.0, %v2259
      %2261 = vmatmul.bf16.gmra.mxu0 %v2184
      %v2262 = vpop.f32.mrf.mxu0
      %v2263 = vadd.f32 0.0, %v2262
      %v2264 = vpop.f32.mrf.mxu0
      %v2265 = vadd.f32 0.0, %v2264
      %2266 = vmatmul.bf16.gmra.mxu0 %v2187
      %v2267 = vpop.f32.mrf.mxu0
      %v2268 = vadd.f32 0.0, %v2267
      %v2269 = vpop.f32.mrf.mxu0
      %v2270 = vadd.f32 0.0, %v2269
      %2271 = vmatmul.bf16.gmra.mxu0 %v2190
      %v2272 = vpop.f32.mrf.mxu0
      %v2273 = vadd.f32 0.0, %v2272
      %v2274 = vpop.f32.mrf.mxu0
      %v2275 = vadd.f32 0.0, %v2274
      %2276 = vmatmul.bf16.gmra.mxu0 %v2193
      %v2277 = vpop.f32.mrf.mxu0
      %v2278 = vadd.f32 0.0, %v2277
      %v2279 = vpop.f32.mrf.mxu0
      %v2280 = vadd.f32 0.0, %v2279
      %2281 = vmatmul.bf16.gmra.mxu0 %v2196
      %v2282 = vpop.f32.mrf.mxu0
      %v2283 = vadd.f32 0.0, %v2282
      %v2284 = vpop.f32.mrf.mxu0
      %v2285 = vadd.f32 0.0, %v2284
      %2286 = vdwg.mxu0
      %v2319 = vunpack.c.l.b16 %v1645
      %v2320 = vunpack.c.l.b16 %v1646
      %v2321 = vunpack.c.l.b16 %v1647
      %v2322 = vunpack.c.l.b16 %v1648
      %v2323 = vunpack.c.l.b16 %v1649
      %v2324 = vunpack.c.l.b16 %v1650
      %v2325 = vunpack.c.l.b16 %v1651
      %v2326 = vunpack.c.l.b16 %v1652
      %v2327 = vunpack.c.l.b16 %v1653
      %v2328 = vunpack.c.l.b16 %v1654
      %v2329 = vunpack.c.l.b16 %v1655
      %v2330 = vunpack.c.l.b16 %v1656
      %v2331 = vunpack.c.l.b16 %v1657
      %v2332 = vunpack.c.l.b16 %v1658
      %v2333 = vunpack.c.l.b16 %v1659
      %v2334 = vunpack.c.l.b16 %v1660
      %v2335 = vunpack.c.l.b16 %v1661
      %v2336 = vunpack.c.l.b16 %v1662
      %v2337 = vunpack.c.l.b16 %v1663
      %v2338 = vunpack.c.l.b16 %v1664
      %v2339 = vunpack.c.l.b16 %v1665
      %v2340 = vunpack.c.l.b16 %v1666
      %v2341 = vunpack.c.l.b16 %v1667
      %v2342 = vunpack.c.l.b16 %v1668
      %v2343 = vunpack.c.l.b16 %v1669
      %v2344 = vunpack.c.l.b16 %v1670
      %v2345 = vunpack.c.l.b16 %v1671
      %v2346 = vunpack.c.l.b16 %v1672
      %v2347 = vunpack.c.l.b16 %v1673
      %v2348 = vunpack.c.l.b16 %v1674
      %v2349 = vunpack.c.l.b16 %v1675
      %v2350 = vunpack.c.l.b16 %v1676
      %v2351 = vpack.c.b16 %v2320, %v2319
      %v2352 = vpack.c.b16 %v2322, %v2321
      %v2353 = vpack.c.b16 %v2324, %v2323
      %v2354 = vpack.c.b16 %v2326, %v2325
      %v2355 = vpack.c.b16 %v2328, %v2327
      %v2356 = vpack.c.b16 %v2330, %v2329
      %v2357 = vpack.c.b16 %v2332, %v2331
      %v2358 = vpack.c.b16 %v2334, %v2333
      %v2359 = vpack.c.b16 %v2336, %v2335
      %v2360 = vpack.c.b16 %v2338, %v2337
      %v2361 = vpack.c.b16 %v2340, %v2339
      %v2362 = vpack.c.b16 %v2342, %v2341
      %v2363 = vpack.c.b16 %v2344, %v2343
      %v2364 = vpack.c.b16 %v2346, %v2345
      %v2365 = vpack.c.b16 %v2348, %v2347
      %v2366 = vpack.c.b16 %v2350, %v2349
      %v2371 = vunpack.c.l.b16 %v1677
      %v2372 = vunpack.c.l.b16 %v1678
      %v2373 = vunpack.c.l.b16 %v1679
      %v2374 = vunpack.c.l.b16 %v1680
      %v2375 = vpack.c.b16 %v2372, %v2371
      %v2376 = vpack.c.b16 %v2374, %v2373
      %v2380 = vsel %vm2149, %v2351, 0
      %v2383 = vsel %vm2149, %v2352, 0
      %v2386 = vsel %vm2149, %v2353, 0
      %v2389 = vsel %vm2149, %v2354, 0
      %v2392 = vsel %vm2149, %v2355, 0
      %v2395 = vsel %vm2149, %v2356, 0
      %v2398 = vsel %vm2149, %v2357, 0
      %v2401 = vsel %vm2149, %v2358, 0
      %v2404 = vsel %vm2149, %v2359, 0
      %v2407 = vsel %vm2149, %v2360, 0
      %v2410 = vsel %vm2149, %v2361, 0
      %v2413 = vsel %vm2149, %v2362, 0
      %v2416 = vsel %vm2149, %v2363, 0
      %v2419 = vsel %vm2149, %v2364, 0
      %v2422 = vsel %vm2149, %v2365, 0
      %v2425 = vsel %vm2149, %v2366, 0
      %2427 = vmatpush.bf16.msra.mxu0 0
      %2428 = vmatpush.bf16.msra.mxu0 0
      %2429 = vmatpush.bf16.msra.mxu0 0
      %2430 = vmatpush.bf16.msra.mxu0 0
      %2431 = vmatpush.bf16.msra.mxu0 0
      %2432 = vmatpush.bf16.msra.mxu0 0
      %2433 = vmatpush.bf16.msra.mxu0 %v2376
      %2434 = vmatpush.bf16.msra.mxu0 %v2375
      %2435 = vmatmul.bf16.gmra.mxu0 %v2380
      %v2436 = vpop.f32.mrf.mxu0
      %v2437 = vadd.f32 %v2208, %v2436
      %v2438 = vpop.f32.mrf.mxu0
      %v2439 = vadd.f32 %v2210, %v2438
      %2440 = vmatmul.bf16.gmra.mxu0 %v2383
      %v2441 = vpop.f32.mrf.mxu0
      %v2442 = vadd.f32 %v2213, %v2441
      %v2443 = vpop.f32.mrf.mxu0
      %v2444 = vadd.f32 %v2215, %v2443
      %2445 = vmatmul.bf16.gmra.mxu0 %v2386
      %v2446 = vpop.f32.mrf.mxu0
      %v2447 = vadd.f32 %v2218, %v2446
      %v2448 = vpop.f32.mrf.mxu0
      %v2449 = vadd.f32 %v2220, %v2448
      %2450 = vmatmul.bf16.gmra.mxu0 %v2389
      %v2451 = vpop.f32.mrf.mxu0
      %v2452 = vadd.f32 %v2223, %v2451
      %v2453 = vpop.f32.mrf.mxu0
      %v2454 = vadd.f32 %v2225, %v2453
      %2455 = vmatmul.bf16.gmra.mxu0 %v2392
      %v2456 = vpop.f32.mrf.mxu0
      %v2457 = vadd.f32 %v2228, %v2456
      %v2458 = vpop.f32.mrf.mxu0
      %v2459 = vadd.f32 %v2230, %v2458
      %2460 = vmatmul.bf16.gmra.mxu0 %v2395
      %v2461 = vpop.f32.mrf.mxu0
      %v2462 = vadd.f32 %v2233, %v2461
      %v2463 = vpop.f32.mrf.mxu0
      %v2464 = vadd.f32 %v2235, %v2463
      %2465 = vmatmul.bf16.gmra.mxu0 %v2398
      %v2466 = vpop.f32.mrf.mxu0
      %v2467 = vadd.f32 %v2238, %v2466
      %v2468 = vpop.f32.mrf.mxu0
      %v2469 = vadd.f32 %v2240, %v2468
      %2470 = vmatmul.bf16.gmra.mxu0 %v2401
      %v2471 = vpop.f32.mrf.mxu0
      %v2472 = vadd.f32 %v2243, %v2471
      %v2473 = vpop.f32.mrf.mxu0
      %v2474 = vadd.f32 %v2245, %v2473
      %2475 = vmatmul.bf16.gmra.mxu0 %v2404
      %v2476 = vpop.f32.mrf.mxu0
      %v2477 = vadd.f32 %v2248, %v2476
      %v2478 = vpop.f32.mrf.mxu0
      %v2479 = vadd.f32 %v2250, %v2478
      %2480 = vmatmul.bf16.gmra.mxu0 %v2407
      %v2481 = vpop.f32.mrf.mxu0
      %v2482 = vadd.f32 %v2253, %v2481
      %v2483 = vpop.f32.mrf.mxu0
      %v2484 = vadd.f32 %v2255, %v2483
      %2485 = vmatmul.bf16.gmra.mxu0 %v2410
      %v2486 = vpop.f32.mrf.mxu0
      %v2487 = vadd.f32 %v2258, %v2486
      %v2488 = vpop.f32.mrf.mxu0
      %v2489 = vadd.f32 %v2260, %v2488
      %2490 = vmatmul.bf16.gmra.mxu0 %v2413
      %v2491 = vpop.f32.mrf.mxu0
      %v2492 = vadd.f32 %v2263, %v2491
      %v2493 = vpop.f32.mrf.mxu0
      %v2494 = vadd.f32 %v2265, %v2493
      %2495 = vmatmul.bf16.gmra.mxu0 %v2416
      %v2496 = vpop.f32.mrf.mxu0
      %v2497 = vadd.f32 %v2268, %v2496
      %v2498 = vpop.f32.mrf.mxu0
      %v2499 = vadd.f32 %v2270, %v2498
      %2500 = vmatmul.bf16.gmra.mxu0 %v2419
      %v2501 = vpop.f32.mrf.mxu0
      %v2502 = vadd.f32 %v2273, %v2501
      %v2503 = vpop.f32.mrf.mxu0
      %v2504 = vadd.f32 %v2275, %v2503
      %2505 = vmatmul.bf16.gmra.mxu0 %v2422
      %v2506 = vpop.f32.mrf.mxu0
      %v2507 = vadd.f32 %v2278, %v2506
      %v2508 = vpop.f32.mrf.mxu0
      %v2509 = vadd.f32 %v2280, %v2508
      %2510 = vmatmul.bf16.gmra.mxu0 %v2425
      %v2511 = vpop.f32.mrf.mxu0
      %v2512 = vadd.f32 %v2283, %v2511
      %v2513 = vpop.f32.mrf.mxu0
      %v2514 = vadd.f32 %v2285, %v2513
      %2515 = vdwg.mxu0
      %v2516 = vld [vmem:[#allocation2] sm:$0xe]
      %v2517 = vld [vmem:[#allocation2 + $0xc] sm:$0xe]
      %v2518 = vld [vmem:[#allocation2 + $0x18] sm:$0xe]
      %v2519 = vld [vmem:[#allocation2 + $0x24] sm:$0xe]
      %v2520 = vld [vmem:[#allocation2 + $0x30] sm:$0xe]
      %v2521 = vld [vmem:[#allocation2 + $0x3c] sm:$0xe]
      %v2522 = vld [vmem:[#allocation2 + $0x48] sm:$0xe]
      %v2523 = vld [vmem:[#allocation2 + $0x54] sm:$0xe]
      %v2524 = vld [vmem:[#allocation2 + $0x60] sm:$0xe]
      %v2525 = vld [vmem:[#allocation2 + $0x6c] sm:$0xe]
      %v2526 = vld [vmem:[#allocation2 + $0x78] sm:$0xe]
      %v2527 = vld [vmem:[#allocation2 + $0x84] sm:$0xe]
      %v2528 = vld [vmem:[#allocation2 + $0x90] sm:$0xe]
      %v2529 = vld [vmem:[#allocation2 + $0x9c] sm:$0xe]
      %v2530 = vld [vmem:[#allocation2 + $0xa8] sm:$0xe]
      %v2531 = vld [vmem:[#allocation2 + $0xb4] sm:$0xe]
      %vm2564 = vcmask 1042432
      %vm2565 = vcmask 1046532
      %vm2566 = vmor %vm2564, %vm2565
      %v2567 = vrot.slane %v2516, 5
      %v2568 = vrot.slane %v2567, 4
      %v2569 = vrot.slane %v1646, 5
      %v2570 = vsel %vm2566, %v2568, %v2569
      %v2571 = vrot.slane %v2569, 4
      %v2572 = vrot.slane %v1681, 5
      %v2573 = vsel %vm2566, %v2571, %v2572
      %v2574 = vrot.slane %v2517, 5
      %v2575 = vrot.slane %v2574, 4
      %v2576 = vrot.slane %v1648, 5
      %v2577 = vsel %vm2566, %v2575, %v2576
      %v2578 = vrot.slane %v2576, 4
      %v2579 = vrot.slane %v1682, 5
      %v2580 = vsel %vm2566, %v2578, %v2579
      %v2581 = vrot.slane %v2518, 5
      %v2582 = vrot.slane %v2581, 4
      %v2583 = vrot.slane %v1650, 5
      %v2584 = vsel %vm2566, %v2582, %v2583
      %v2585 = vrot.slane %v2583, 4
      %v2586 = vrot.slane %v1683, 5
      %v2587 = vsel %vm2566, %v2585, %v2586
      %v2588 = vrot.slane %v2519, 5
      %v2589 = vrot.slane %v2588, 4
      %v2590 = vrot.slane %v1652, 5
      %v2591 = vsel %vm2566, %v2589, %v2590
      %v2592 = vrot.slane %v2590, 4
      %v2593 = vrot.slane %v1684, 5
      %v2594 = vsel %vm2566, %v2592, %v2593
      %v2595 = vrot.slane %v2520, 5
      %v2596 = vrot.slane %v2595, 4
      %v2597 = vrot.slane %v1654, 5
      %v2598 = vsel %vm2566, %v2596, %v2597
      %v2599 = vrot.slane %v2597, 4
      %v2600 = vrot.slane %v1685, 5
      %v2601 = vsel %vm2566, %v2599, %v2600
      %v2602 = vrot.slane %v2521, 5
      %v2603 = vrot.slane %v2602, 4
      %v2604 = vrot.slane %v1656, 5
      %v2605 = vsel %vm2566, %v2603, %v2604
      %v2606 = vrot.slane %v2604, 4
      %v2607 = vrot.slane %v1686, 5
      %v2608 = vsel %vm2566, %v2606, %v2607
      %v2609 = vrot.slane %v2522, 5
      %v2610 = vrot.slane %v2609, 4
      %v2611 = vrot.slane %v1658, 5
      %v2612 = vsel %vm2566, %v2610, %v2611
      %v2613 = vrot.slane %v2611, 4
      %v2614 = vrot.slane %v1687, 5
      %v2615 = vsel %vm2566, %v2613, %v2614
      %v2616 = vrot.slane %v2523, 5
      %v2617 = vrot.slane %v2616, 4
      %v2618 = vrot.slane %v1660, 5
      %v2619 = vsel %vm2566, %v2617, %v2618
      %v2620 = vrot.slane %v2618, 4
      %v2621 = vrot.slane %v1688, 5
      %v2622 = vsel %vm2566, %v2620, %v2621
      %v2623 = vrot.slane %v2524, 5
      %v2624 = vrot.slane %v2623, 4
      %v2625 = vrot.slane %v1662, 5
      %v2626 = vsel %vm2566, %v2624, %v2625
      %v2627 = vrot.slane %v2625, 4
      %v2628 = vrot.slane %v1689, 5
      %v2629 = vsel %vm2566, %v2627, %v2628
      %v2630 = vrot.slane %v2525, 5
      %v2631 = vrot.slane %v2630, 4
      %v2632 = vrot.slane %v1664, 5
      %v2633 = vsel %vm2566, %v2631, %v2632
      %v2634 = vrot.slane %v2632, 4
      %v2635 = vrot.slane %v1690, 5
      %v2636 = vsel %vm2566, %v2634, %v2635
      %v2637 = vrot.slane %v2526, 5
      %v2638 = vrot.slane %v2637, 4
      %v2639 = vrot.slane %v1666, 5
      %v2640 = vsel %vm2566, %v2638, %v2639
      %v2641 = vrot.slane %v2639, 4
      %v2642 = vrot.slane %v1691, 5
      %v2643 = vsel %vm2566, %v2641, %v2642
      %v2644 = vrot.slane %v2527, 5
      %v2645 = vrot.slane %v2644, 4
      %v2646 = vrot.slane %v1668, 5
      %v2647 = vsel %vm2566, %v2645, %v2646
      %v2648 = vrot.slane %v2646, 4
      %v2649 = vrot.slane %v1692, 5
      %v2650 = vsel %vm2566, %v2648, %v2649
      %v2651 = vrot.slane %v2528, 5
      %v2652 = vrot.slane %v2651, 4
      %v2653 = vrot.slane %v1670, 5
      %v2654 = vsel %vm2566, %v2652, %v2653
      %v2655 = vrot.slane %v2653, 4
      %v2656 = vrot.slane %v1693, 5
      %v2657 = vsel %vm2566, %v2655, %v2656
      %v2658 = vrot.slane %v2529, 5
      %v2659 = vrot.slane %v2658, 4
      %v2660 = vrot.slane %v1672, 5
      %v2661 = vsel %vm2566, %v2659, %v2660
      %v2662 = vrot.slane %v2660, 4
      %v2663 = vrot.slane %v1694, 5
      %v2664 = vsel %vm2566, %v2662, %v2663
      %v2665 = vrot.slane %v2530, 5
      %v2666 = vrot.slane %v2665, 4
      %v2667 = vrot.slane %v1674, 5
      %v2668 = vsel %vm2566, %v2666, %v2667
      %v2669 = vrot.slane %v2667, 4
      %v2670 = vrot.slane %v1695, 5
      %v2671 = vsel %vm2566, %v2669, %v2670
      %v2672 = vrot.slane %v2531, 5
      %v2673 = vrot.slane %v2672, 4
      %v2674 = vrot.slane %v1676, 5
      %v2675 = vsel %vm2566, %v2673, %v2674
      %v2676 = vrot.slane %v2674, 4
      %v2677 = vrot.slane %v1696, 5
      %v2678 = vsel %vm2566, %v2676, %v2677
      %s2679 = scalar_lea.vmem %s8, 32
      %v2680 = vld [vmem:[%s2679] sm:$0xf]
      %v2681 = vld [vmem:[%s2679 + $0x4] sm:$0xf]
      %v2682 = vld [vmem:[%s2679 + $0x8] sm:$0xf]
      %v2683 = vld [vmem:[%s2679 + $0xc] sm:$0xf]
      %v2684 = vunpack.c.l.b16 %v2570
      %v2685 = vunpack.c.l.b16 %v2573
      %v2686 = vunpack.c.l.b16 %v2577
      %v2687 = vunpack.c.l.b16 %v2580
      %v2688 = vunpack.c.l.b16 %v2584
      %v2689 = vunpack.c.l.b16 %v2587
      %v2690 = vunpack.c.l.b16 %v2591
      %v2691 = vunpack.c.l.b16 %v2594
      %v2692 = vunpack.c.l.b16 %v2598
      %v2693 = vunpack.c.l.b16 %v2601
      %v2694 = vunpack.c.l.b16 %v2605
      %v2695 = vunpack.c.l.b16 %v2608
      %v2696 = vunpack.c.l.b16 %v2612
      %v2697 = vunpack.c.l.b16 %v2615
      %v2698 = vunpack.c.l.b16 %v2619
      %v2699 = vunpack.c.l.b16 %v2622
      %v2700 = vunpack.c.l.b16 %v2626
      %v2701 = vunpack.c.l.b16 %v2629
      %v2702 = vunpack.c.l.b16 %v2633
      %v2703 = vunpack.c.l.b16 %v2636
      %v2704 = vunpack.c.l.b16 %v2640
      %v2705 = vunpack.c.l.b16 %v2643
      %v2706 = vunpack.c.l.b16 %v2647
      %v2707 = vunpack.c.l.b16 %v2650
      %v2708 = vunpack.c.l.b16 %v2654
      %v2709 = vunpack.c.l.b16 %v2657
      %v2710 = vunpack.c.l.b16 %v2661
      %v2711 = vunpack.c.l.b16 %v2664
      %v2712 = vunpack.c.l.b16 %v2668
      %v2713 = vunpack.c.l.b16 %v2671
      %v2714 = vunpack.c.l.b16 %v2675
      %v2715 = vunpack.c.l.b16 %v2678
      %v2716 = vpack.c.b16 %v2685, %v2684
      %v2717 = vpack.c.b16 %v2687, %v2686
      %v2718 = vpack.c.b16 %v2689, %v2688
      %v2719 = vpack.c.b16 %v2691, %v2690
      %v2720 = vpack.c.b16 %v2693, %v2692
      %v2721 = vpack.c.b16 %v2695, %v2694
      %v2722 = vpack.c.b16 %v2697, %v2696
      %v2723 = vpack.c.b16 %v2699, %v2698
      %v2724 = vpack.c.b16 %v2701, %v2700
      %v2725 = vpack.c.b16 %v2703, %v2702
      %v2726 = vpack.c.b16 %v2705, %v2704
      %v2727 = vpack.c.b16 %v2707, %v2706
      %v2728 = vpack.c.b16 %v2709, %v2708
      %v2729 = vpack.c.b16 %v2711, %v2710
      %v2730 = vpack.c.b16 %v2713, %v2712
      %v2731 = vpack.c.b16 %v2715, %v2714
      %v2736 = vunpack.c.l.b16 %v2680
      %v2737 = vunpack.c.l.b16 %v2681
      %v2738 = vunpack.c.l.b16 %v2682
      %v2739 = vunpack.c.l.b16 %v2683
      %v2740 = vpack.c.b16 %v2737, %v2736
      %v2741 = vpack.c.b16 %v2739, %v2738
      %v2745 = vsel %vm2149, %v2716, 0
      %v2748 = vsel %vm2149, %v2717, 0
      %v2751 = vsel %vm2149, %v2718, 0
      %v2754 = vsel %vm2149, %v2719, 0
      %v2757 = vsel %vm2149, %v2720, 0
      %v2760 = vsel %vm2149, %v2721, 0
      %v2763 = vsel %vm2149, %v2722, 0
      %v2766 = vsel %vm2149, %v2723, 0
      %v2769 = vsel %vm2149, %v2724, 0
      %v2772 = vsel %vm2149, %v2725, 0
      %v2775 = vsel %vm2149, %v2726, 0
      %v2778 = vsel %vm2149, %v2727, 0
      %v2781 = vsel %vm2149, %v2728, 0
      %v2784 = vsel %vm2149, %v2729, 0
      %v2787 = vsel %vm2149, %v2730, 0
      %v2790 = vsel %vm2149, %v2731, 0
      %2792 = vmatpush.bf16.msra.mxu0 0
      %2793 = vmatpush.bf16.msra.mxu0 0
      %2794 = vmatpush.bf16.msra.mxu0 0
      %2795 = vmatpush.bf16.msra.mxu0 0
      %2796 = vmatpush.bf16.msra.mxu0 0
      %2797 = vmatpush.bf16.msra.mxu0 0
      %2798 = vmatpush.bf16.msra.mxu0 %v2741
      %2799 = vmatpush.bf16.msra.mxu0 %v2740
      %2800 = vmatmul.bf16.gmra.mxu0 %v2745
      %v2801 = vpop.f32.mrf.mxu0
      %v2802 = vadd.f32 0.0, %v2801
      %v2803 = vpop.f32.mrf.mxu0
      %v2804 = vadd.f32 0.0, %v2803
      %2805 = vmatmul.bf16.gmra.mxu0 %v2748
      %v2806 = vpop.f32.mrf.mxu0
      %v2807 = vadd.f32 0.0, %v2806
      %v2808 = vpop.f32.mrf.mxu0
      %v2809 = vadd.f32 0.0, %v2808
      %2810 = vmatmul.bf16.gmra.mxu0 %v2751
      %v2811 = vpop.f32.mrf.mxu0
      %v2812 = vadd.f32 0.0, %v2811
      %v2813 = vpop.f32.mrf.mxu0
      %v2814 = vadd.f32 0.0, %v2813
      %2815 = vmatmul.bf16.gmra.mxu0 %v2754
      %v2816 = vpop.f32.mrf.mxu0
      %v2817 = vadd.f32 0.0, %v2816
      %v2818 = vpop.f32.mrf.mxu0
      %v2819 = vadd.f32 0.0, %v2818
      %2820 = vmatmul.bf16.gmra.mxu0 %v2757
      %v2821 = vpop.f32.mrf.mxu0
      %v2822 = vadd.f32 0.0, %v2821
      %v2823 = vpop.f32.mrf.mxu0
      %v2824 = vadd.f32 0.0, %v2823
      %2825 = vmatmul.bf16.gmra.mxu0 %v2760
      %v2826 = vpop.f32.mrf.mxu0
      %v2827 = vadd.f32 0.0, %v2826
      %v2828 = vpop.f32.mrf.mxu0
      %v2829 = vadd.f32 0.0, %v2828
      %2830 = vmatmul.bf16.gmra.mxu0 %v2763
      %v2831 = vpop.f32.mrf.mxu0
      %v2832 = vadd.f32 0.0, %v2831
      %v2833 = vpop.f32.mrf.mxu0
      %v2834 = vadd.f32 0.0, %v2833
      %2835 = vmatmul.bf16.gmra.mxu0 %v2766
      %v2836 = vpop.f32.mrf.mxu0
      %v2837 = vadd.f32 0.0, %v2836
      %v2838 = vpop.f32.mrf.mxu0
      %v2839 = vadd.f32 0.0, %v2838
      %2840 = vmatmul.bf16.gmra.mxu0 %v2769
      %v2841 = vpop.f32.mrf.mxu0
      %v2842 = vadd.f32 0.0, %v2841
      %v2843 = vpop.f32.mrf.mxu0
      %v2844 = vadd.f32 0.0, %v2843
      %2845 = vmatmul.bf16.gmra.mxu0 %v2772
      %v2846 = vpop.f32.mrf.mxu0
      %v2847 = vadd.f32 0.0, %v2846
      %v2848 = vpop.f32.mrf.mxu0
      %v2849 = vadd.f32 0.0, %v2848
      %2850 = vmatmul.bf16.gmra.mxu0 %v2775
      %v2851 = vpop.f32.mrf.mxu0
      %v2852 = vadd.f32 0.0, %v2851
      %v2853 = vpop.f32.mrf.mxu0
      %v2854 = vadd.f32 0.0, %v2853
      %2855 = vmatmul.bf16.gmra.mxu0 %v2778
      %v2856 = vpop.f32.mrf.mxu0
      %v2857 = vadd.f32 0.0, %v2856
      %v2858 = vpop.f32.mrf.mxu0
      %v2859 = vadd.f32 0.0, %v2858
      %2860 = vmatmul.bf16.gmra.mxu0 %v2781
      %v2861 = vpop.f32.mrf.mxu0
      %v2862 = vadd.f32 0.0, %v2861
      %v2863 = vpop.f32.mrf.mxu0
      %v2864 = vadd.f32 0.0, %v2863
      %2865 = vmatmul.bf16.gmra.mxu0 %v2784
      %v2866 = vpop.f32.mrf.mxu0
      %v2867 = vadd.f32 0.0, %v2866
      %v2868 = vpop.f32.mrf.mxu0
      %v2869 = vadd.f32 0.0, %v2868
      %2870 = vmatmul.bf16.gmra.mxu0 %v2787
      %v2871 = vpop.f32.mrf.mxu0
      %v2872 = vadd.f32 0.0, %v2871
      %v2873 = vpop.f32.mrf.mxu0
      %v2874 = vadd.f32 0.0, %v2873
      %2875 = vmatmul.bf16.gmra.mxu0 %v2790
      %v2876 = vpop.f32.mrf.mxu0
      %v2877 = vadd.f32 0.0, %v2876
      %v2878 = vpop.f32.mrf.mxu0
      %v2879 = vadd.f32 0.0, %v2878
      %2880 = vdwg.mxu0
      %v2881 = vadd.f32 %v2437, %v2802
      %v2882 = vadd.f32 %v2439, %v2804
      %v2883 = vadd.f32 %v2442, %v2807
      %v2884 = vadd.f32 %v2444, %v2809
      %v2885 = vadd.f32 %v2447, %v2812
      %v2886 = vadd.f32 %v2449, %v2814
      %v2887 = vadd.f32 %v2452, %v2817
      %v2888 = vadd.f32 %v2454, %v2819
      %v2889 = vadd.f32 %v2457, %v2822
      %v2890 = vadd.f32 %v2459, %v2824
      %v2891 = vadd.f32 %v2462, %v2827
      %v2892 = vadd.f32 %v2464, %v2829
      %v2893 = vadd.f32 %v2467, %v2832
      %v2894 = vadd.f32 %v2469, %v2834
      %v2895 = vadd.f32 %v2472, %v2837
      %v2896 = vadd.f32 %v2474, %v2839
      %v2897 = vadd.f32 %v2477, %v2842
      %v2898 = vadd.f32 %v2479, %v2844
      %v2899 = vadd.f32 %v2482, %v2847
      %v2900 = vadd.f32 %v2484, %v2849
      %v2901 = vadd.f32 %v2487, %v2852
      %v2902 = vadd.f32 %v2489, %v2854
      %v2903 = vadd.f32 %v2492, %v2857
      %v2904 = vadd.f32 %v2494, %v2859
      %v2905 = vadd.f32 %v2497, %v2862
      %v2906 = vadd.f32 %v2499, %v2864
      %v2907 = vadd.f32 %v2502, %v2867
      %v2908 = vadd.f32 %v2504, %v2869
      %v2909 = vadd.f32 %v2507, %v2872
      %v2910 = vadd.f32 %v2509, %v2874
      %v2911 = vadd.f32 %v2512, %v2877
      %v2912 = vadd.f32 %v2514, %v2879
      %v2913 = vld [vmem:[%s1395] sm:$0xf]
      %v2914 = vld [vmem:[%s1395 + $0x4] sm:$0xf]
      %v2915 = vld [vmem:[%s1395 + $0xc] sm:$0xf]
      %v2916 = vld [vmem:[%s1395 + $0x10] sm:$0xf]
      %v2917 = vld [vmem:[%s1395 + $0x18] sm:$0xf]
      %v2918 = vld [vmem:[%s1395 + $0x1c] sm:$0xf]
      %v2919 = vld [vmem:[%s1395 + $0x24] sm:$0xf]
      %v2920 = vld [vmem:[%s1395 + $0x28] sm:$0xf]
      %v2921 = vld [vmem:[%s1395 + $0x30] sm:$0xf]
      %v2922 = vld [vmem:[%s1395 + $0x34] sm:$0xf]
      %v2923 = vld [vmem:[%s1395 + $0x3c] sm:$0xf]
      %v2924 = vld [vmem:[%s1395 + $0x40] sm:$0xf]
      %v2925 = vld [vmem:[%s1395 + $0x48] sm:$0xf]
      %v2926 = vld [vmem:[%s1395 + $0x4c] sm:$0xf]
      %v2927 = vld [vmem:[%s1395 + $0x54] sm:$0xf]
      %v2928 = vld [vmem:[%s1395 + $0x58] sm:$0xf]
      %v2929 = vld [vmem:[%s1395 + $0x60] sm:$0xf]
      %v2930 = vld [vmem:[%s1395 + $0x64] sm:$0xf]
      %v2931 = vld [vmem:[%s1395 + $0x6c] sm:$0xf]
      %v2932 = vld [vmem:[%s1395 + $0x70] sm:$0xf]
      %v2933 = vld [vmem:[%s1395 + $0x78] sm:$0xf]
      %v2934 = vld [vmem:[%s1395 + $0x7c] sm:$0xf]
      %v2935 = vld [vmem:[%s1395 + $0x84] sm:$0xf]
      %v2936 = vld [vmem:[%s1395 + $0x88] sm:$0xf]
      %v2937 = vld [vmem:[%s1395 + $0x90] sm:$0xf]
      %v2938 = vld [vmem:[%s1395 + $0x94] sm:$0xf]
      %v2939 = vld [vmem:[%s1395 + $0x9c] sm:$0xf]
      %v2940 = vld [vmem:[%s1395 + $0xa0] sm:$0xf]
      %v2941 = vld [vmem:[%s1395 + $0xa8] sm:$0xf]
      %v2942 = vld [vmem:[%s1395 + $0xac] sm:$0xf]
      %v2943 = vld [vmem:[%s1395 + $0xb4] sm:$0xf]
      %v2944 = vld [vmem:[%s1395 + $0xb8] sm:$0xf]
      %s2945 = scalar_lea.vmem %s8, 48
      %v2946 = vld [vmem:[%s2945] sm:$0xf]
      %v2947 = vld [vmem:[%s2945 + $0x4] sm:$0xf]
      %v2948 = vld [vmem:[%s2945 + $0x8] sm:$0xf]
      %v2949 = vld [vmem:[%s2945 + $0xc] sm:$0xf]
      %v2982 = vunpack.c.l.b16 %v2913
      %v2983 = vunpack.c.l.b16 %v2914
      %v2984 = vunpack.c.l.b16 %v2915
      %v2985 = vunpack.c.l.b16 %v2916
      %v2986 = vunpack.c.l.b16 %v2917
      %v2987 = vunpack.c.l.b16 %v2918
      %v2988 = vunpack.c.l.b16 %v2919
      %v2989 = vunpack.c.l.b16 %v2920
      %v2990 = vunpack.c.l.b16 %v2921
      %v2991 = vunpack.c.l.b16 %v2922
      %v2992 = vunpack.c.l.b16 %v2923
      %v2993 = vunpack.c.l.b16 %v2924
      %v2994 = vunpack.c.l.b16 %v2925
      %v2995 = vunpack.c.l.b16 %v2926
      %v2996 = vunpack.c.l.b16 %v2927
      %v2997 = vunpack.c.l.b16 %v2928
      %v2998 = vunpack.c.l.b16 %v2929
      %v2999 = vunpack.c.l.b16 %v2930
      %v3000 = vunpack.c.l.b16 %v2931
      %v3001 = vunpack.c.l.b16 %v2932
      %v3002 = vunpack.c.l.b16 %v2933
      %v3003 = vunpack.c.l.b16 %v2934
      %v3004 = vunpack.c.l.b16 %v2935
      %v3005 = vunpack.c.l.b16 %v2936
      %v3006 = vunpack.c.l.b16 %v2937
      %v3007 = vunpack.c.l.b16 %v2938
      %v3008 = vunpack.c.l.b16 %v2939
      %v3009 = vunpack.c.l.b16 %v2940
      %v3010 = vunpack.c.l.b16 %v2941
      %v3011 = vunpack.c.l.b16 %v2942
      %v3012 = vunpack.c.l.b16 %v2943
      %v3013 = vunpack.c.l.b16 %v2944
      %v3014 = vpack.c.b16 %v2983, %v2982
      %v3015 = vpack.c.b16 %v2985, %v2984
      %v3016 = vpack.c.b16 %v2987, %v2986
      %v3017 = vpack.c.b16 %v2989, %v2988
      %v3018 = vpack.c.b16 %v2991, %v2990
      %v3019 = vpack.c.b16 %v2993, %v2992
      %v3020 = vpack.c.b16 %v2995, %v2994
      %v3021 = vpack.c.b16 %v2997, %v2996
      %v3022 = vpack.c.b16 %v2999, %v2998
      %v3023 = vpack.c.b16 %v3001, %v3000
      %v3024 = vpack.c.b16 %v3003, %v3002
      %v3025 = vpack.c.b16 %v3005, %v3004
      %v3026 = vpack.c.b16 %v3007, %v3006
      %v3027 = vpack.c.b16 %v3009, %v3008
      %v3028 = vpack.c.b16 %v3011, %v3010
      %v3029 = vpack.c.b16 %v3013, %v3012
      %v3034 = vunpack.c.l.b16 %v2946
      %v3035 = vunpack.c.l.b16 %v2947
      %v3036 = vunpack.c.l.b16 %v2948
      %v3037 = vunpack.c.l.b16 %v2949
      %v3038 = vpack.c.b16 %v3035, %v3034
      %v3039 = vpack.c.b16 %v3037, %v3036
      %v3043 = vsel %vm2149, %v3014, 0
      %v3046 = vsel %vm2149, %v3015, 0
      %v3049 = vsel %vm2149, %v3016, 0
      %v3052 = vsel %vm2149, %v3017, 0
      %v3055 = vsel %vm2149, %v3018, 0
      %v3058 = vsel %vm2149, %v3019, 0
      %v3061 = vsel %vm2149, %v3020, 0
      %v3064 = vsel %vm2149, %v3021, 0
      %v3067 = vsel %vm2149, %v3022, 0
      %v3070 = vsel %vm2149, %v3023, 0
      %v3073 = vsel %vm2149, %v3024, 0
      %v3076 = vsel %vm2149, %v3025, 0
      %v3079 = vsel %vm2149, %v3026, 0
      %v3082 = vsel %vm2149, %v3027, 0
      %v3085 = vsel %vm2149, %v3028, 0
      %v3088 = vsel %vm2149, %v3029, 0
      %3090 = vmatpush.bf16.msra.mxu0 0
      %3091 = vmatpush.bf16.msra.mxu0 0
      %3092 = vmatpush.bf16.msra.mxu0 0
      %3093 = vmatpush.bf16.msra.mxu0 0
      %3094 = vmatpush.bf16.msra.mxu0 0
      %3095 = vmatpush.bf16.msra.mxu0 0
      %3096 = vmatpush.bf16.msra.mxu0 %v3039
      %3097 = vmatpush.bf16.msra.mxu0 %v3038
      %3098 = vmatmul.bf16.gmra.mxu0 %v3043
      %v3099 = vpop.f32.mrf.mxu0
      %v3100 = vadd.f32 0.0, %v3099
      %v3101 = vpop.f32.mrf.mxu0
      %v3102 = vadd.f32 0.0, %v3101
      %3103 = vmatmul.bf16.gmra.mxu0 %v3046
      %v3104 = vpop.f32.mrf.mxu0
      %v3105 = vadd.f32 0.0, %v3104
      %v3106 = vpop.f32.mrf.mxu0
      %v3107 = vadd.f32 0.0, %v3106
      %3108 = vmatmul.bf16.gmra.mxu0 %v3049
      %v3109 = vpop.f32.mrf.mxu0
      %v3110 = vadd.f32 0.0, %v3109
      %v3111 = vpop.f32.mrf.mxu0
      %v3112 = vadd.f32 0.0, %v3111
      %3113 = vmatmul.bf16.gmra.mxu0 %v3052
      %v3114 = vpop.f32.mrf.mxu0
      %v3115 = vadd.f32 0.0, %v3114
      %v3116 = vpop.f32.mrf.mxu0
      %v3117 = vadd.f32 0.0, %v3116
      %3118 = vmatmul.bf16.gmra.mxu0 %v3055
      %v3119 = vpop.f32.mrf.mxu0
      %v3120 = vadd.f32 0.0, %v3119
      %v3121 = vpop.f32.mrf.mxu0
      %v3122 = vadd.f32 0.0, %v3121
      %3123 = vmatmul.bf16.gmra.mxu0 %v3058
      %v3124 = vpop.f32.mrf.mxu0
      %v3125 = vadd.f32 0.0, %v3124
      %v3126 = vpop.f32.mrf.mxu0
      %v3127 = vadd.f32 0.0, %v3126
      %3128 = vmatmul.bf16.gmra.mxu0 %v3061
      %v3129 = vpop.f32.mrf.mxu0
      %v3130 = vadd.f32 0.0, %v3129
      %v3131 = vpop.f32.mrf.mxu0
      %v3132 = vadd.f32 0.0, %v3131
      %3133 = vmatmul.bf16.gmra.mxu0 %v3064
      %v3134 = vpop.f32.mrf.mxu0
      %v3135 = vadd.f32 0.0, %v3134
      %v3136 = vpop.f32.mrf.mxu0
      %v3137 = vadd.f32 0.0, %v3136
      %3138 = vmatmul.bf16.gmra.mxu0 %v3067
      %v3139 = vpop.f32.mrf.mxu0
      %v3140 = vadd.f32 0.0, %v3139
      %v3141 = vpop.f32.mrf.mxu0
      %v3142 = vadd.f32 0.0, %v3141
      %3143 = vmatmul.bf16.gmra.mxu0 %v3070
      %v3144 = vpop.f32.mrf.mxu0
      %v3145 = vadd.f32 0.0, %v3144
      %v3146 = vpop.f32.mrf.mxu0
      %v3147 = vadd.f32 0.0, %v3146
      %3148 = vmatmul.bf16.gmra.mxu0 %v3073
      %v3149 = vpop.f32.mrf.mxu0
      %v3150 = vadd.f32 0.0, %v3149
      %v3151 = vpop.f32.mrf.mxu0
      %v3152 = vadd.f32 0.0, %v3151
      %3153 = vmatmul.bf16.gmra.mxu0 %v3076
      %v3154 = vpop.f32.mrf.mxu0
      %v3155 = vadd.f32 0.0, %v3154
      %v3156 = vpop.f32.mrf.mxu0
      %v3157 = vadd.f32 0.0, %v3156
      %3158 = vmatmul.bf16.gmra.mxu0 %v3079
      %v3159 = vpop.f32.mrf.mxu0
      %v3160 = vadd.f32 0.0, %v3159
      %v3161 = vpop.f32.mrf.mxu0
      %v3162 = vadd.f32 0.0, %v3161
      %3163 = vmatmul.bf16.gmra.mxu0 %v3082
      %v3164 = vpop.f32.mrf.mxu0
      %v3165 = vadd.f32 0.0, %v3164
      %v3166 = vpop.f32.mrf.mxu0
      %v3167 = vadd.f32 0.0, %v3166
      %3168 = vmatmul.bf16.gmra.mxu0 %v3085
      %v3169 = vpop.f32.mrf.mxu0
      %v3170 = vadd.f32 0.0, %v3169
      %v3171 = vpop.f32.mrf.mxu0
      %v3172 = vadd.f32 0.0, %v3171
      %3173 = vmatmul.bf16.gmra.mxu0 %v3088
      %v3174 = vpop.f32.mrf.mxu0
      %v3175 = vadd.f32 0.0, %v3174
      %v3176 = vpop.f32.mrf.mxu0
      %v3177 = vadd.f32 0.0, %v3176
      %3178 = vdwg.mxu0
      %v3179 = vadd.f32 %v2881, %v3100
      %v3180 = vadd.f32 %v2882, %v3102
      %v3181 = vadd.f32 %v2883, %v3105
      %v3182 = vadd.f32 %v2884, %v3107
      %v3183 = vadd.f32 %v2885, %v3110
      %v3184 = vadd.f32 %v2886, %v3112
      %v3185 = vadd.f32 %v2887, %v3115
      %v3186 = vadd.f32 %v2888, %v3117
      %v3187 = vadd.f32 %v2889, %v3120
      %v3188 = vadd.f32 %v2890, %v3122
      %v3189 = vadd.f32 %v2891, %v3125
      %v3190 = vadd.f32 %v2892, %v3127
      %v3191 = vadd.f32 %v2893, %v3130
      %v3192 = vadd.f32 %v2894, %v3132
      %v3193 = vadd.f32 %v2895, %v3135
      %v3194 = vadd.f32 %v2896, %v3137
      %v3195 = vadd.f32 %v2897, %v3140
      %v3196 = vadd.f32 %v2898, %v3142
      %v3197 = vadd.f32 %v2899, %v3145
      %v3198 = vadd.f32 %v2900, %v3147
      %v3199 = vadd.f32 %v2901, %v3150
      %v3200 = vadd.f32 %v2902, %v3152
      %v3201 = vadd.f32 %v2903, %v3155
      %v3202 = vadd.f32 %v2904, %v3157
      %v3203 = vadd.f32 %v2905, %v3160
      %v3204 = vadd.f32 %v2906, %v3162
      %v3205 = vadd.f32 %v2907, %v3165
      %v3206 = vadd.f32 %v2908, %v3167
      %v3207 = vadd.f32 %v2909, %v3170
      %v3208 = vadd.f32 %v2910, %v3172
      %v3209 = vadd.f32 %v2911, %v3175
      %v3210 = vadd.f32 %v2912, %v3177
      %v3211 = vld [vmem:[%s1395] sm:$0xf]
      %v3212 = vld [vmem:[%s1395 + $0x4] sm:$0xf]
      %v3213 = vld [vmem:[%s1395 + $0x8] sm:$0x1]
      %v3214 = vld [vmem:[%s1395 + $0xc] sm:$0xf]
      %v3215 = vld [vmem:[%s1395 + $0x10] sm:$0xf]
      %v3216 = vld [vmem:[%s1395 + $0x14] sm:$0x1]
      %v3217 = vld [vmem:[%s1395 + $0x18] sm:$0xf]
      %v3218 = vld [vmem:[%s1395 + $0x1c] sm:$0xf]
      %v3219 = vld [vmem:[%s1395 + $0x20] sm:$0x1]
      %v3220 = vld [vmem:[%s1395 + $0x24] sm:$0xf]
      %v3221 = vld [vmem:[%s1395 + $0x28] sm:$0xf]
      %v3222 = vld [vmem:[%s1395 + $0x2c] sm:$0x1]
      %v3223 = vld [vmem:[%s1395 + $0x30] sm:$0xf]
      %v3224 = vld [vmem:[%s1395 + $0x34] sm:$0xf]
      %v3225 = vld [vmem:[%s1395 + $0x38] sm:$0x1]
      %v3226 = vld [vmem:[%s1395 + $0x3c] sm:$0xf]
      %v3227 = vld [vmem:[%s1395 + $0x40] sm:$0xf]
      %v3228 = vld [vmem:[%s1395 + $0x44] sm:$0x1]
      %v3229 = vld [vmem:[%s1395 + $0x48] sm:$0xf]
      %v3230 = vld [vmem:[%s1395 + $0x4c] sm:$0xf]
      %v3231 = vld [vmem:[%s1395 + $0x50] sm:$0x1]
      %v3232 = vld [vmem:[%s1395 + $0x54] sm:$0xf]
      %v3233 = vld [vmem:[%s1395 + $0x58] sm:$0xf]
      %v3234 = vld [vmem:[%s1395 + $0x5c] sm:$0x1]
      %v3235 = vld [vmem:[%s1395 + $0x60] sm:$0xf]
      %v3236 = vld [vmem:[%s1395 + $0x64] sm:$0xf]
      %v3237 = vld [vmem:[%s1395 + $0x68] sm:$0x1]
      %v3238 = vld [vmem:[%s1395 + $0x6c] sm:$0xf]
      %v3239 = vld [vmem:[%s1395 + $0x70] sm:$0xf]
      %v3240 = vld [vmem:[%s1395 + $0x74] sm:$0x1]
      %v3241 = vld [vmem:[%s1395 + $0x78] sm:$0xf]
      %v3242 = vld [vmem:[%s1395 + $0x7c] sm:$0xf]
      %v3243 = vld [vmem:[%s1395 + $0x80] sm:$0x1]
      %v3244 = vld [vmem:[%s1395 + $0x84] sm:$0xf]
      %v3245 = vld [vmem:[%s1395 + $0x88] sm:$0xf]
      %v3246 = vld [vmem:[%s1395 + $0x8c] sm:$0x1]
      %v3247 = vld [vmem:[%s1395 + $0x90] sm:$0xf]
      %v3248 = vld [vmem:[%s1395 + $0x94] sm:$0xf]
      %v3249 = vld [vmem:[%s1395 + $0x98] sm:$0x1]
      %v3250 = vld [vmem:[%s1395 + $0x9c] sm:$0xf]
      %v3251 = vld [vmem:[%s1395 + $0xa0] sm:$0xf]
      %v3252 = vld [vmem:[%s1395 + $0xa4] sm:$0x1]
      %v3253 = vld [vmem:[%s1395 + $0xa8] sm:$0xf]
      %v3254 = vld [vmem:[%s1395 + $0xac] sm:$0xf]
      %v3255 = vld [vmem:[%s1395 + $0xb0] sm:$0x1]
      %v3256 = vld [vmem:[%s1395 + $0xb4] sm:$0xf]
      %v3257 = vld [vmem:[%s1395 + $0xb8] sm:$0xf]
      %v3258 = vld [vmem:[%s1395 + $0xbc] sm:$0x1]
      %v3260 = vshrl.u32 %v3211, 16
      %v3262 = vrot.slane %v3260, 4
      %v3263 = vshll.u32 %v3211, 16
      %v3265 = vrot.slane %v3263, 5
      %v3266 = vor.u32 %v3262, %v3265
      %v3267 = vrot.slane %v3266, 4
      %v3269 = vshll.u32 %v3212, 16
      %v3271 = vrot.slane %v3269, 5
      %v3272 = vsel %vm1699, %v3267, %v3271
      %v3273 = vshrl.u32 %v3212, 16
      %v3275 = vrot.slane %v3273, 4
      %v3276 = vor.u32 %v3275, %v3271
      %v3277 = vrot.slane %v3276, 4
      %v3279 = vshll.u32 %v3213, 16
      %v3281 = vrot.slane %v3279, 5
      %v3282 = vsel %vm1699, %v3277, %v3281
      %v3284 = vshrl.u32 %v3214, 16
      %v3286 = vrot.slane %v3284, 4
      %v3287 = vshll.u32 %v3214, 16
      %v3289 = vrot.slane %v3287, 5
      %v3290 = vor.u32 %v3286, %v3289
      %v3291 = vrot.slane %v3290, 4
      %v3293 = vshll.u32 %v3215, 16
      %v3295 = vrot.slane %v3293, 5
      %v3296 = vsel %vm1699, %v3291, %v3295
      %v3297 = vshrl.u32 %v3215, 16
      %v3299 = vrot.slane %v3297, 4
      %v3300 = vor.u32 %v3299, %v3295
      %v3301 = vrot.slane %v3300, 4
      %v3303 = vshll.u32 %v3216, 16
      %v3305 = vrot.slane %v3303, 5
      %v3306 = vsel %vm1699, %v3301, %v3305
      %v3308 = vshrl.u32 %v3217, 16
      %v3310 = vrot.slane %v3308, 4
      %v3311 = vshll.u32 %v3217, 16
      %v3313 = vrot.slane %v3311, 5
      %v3314 = vor.u32 %v3310, %v3313
      %v3315 = vrot.slane %v3314, 4
      %v3317 = vshll.u32 %v3218, 16
      %v3319 = vrot.slane %v3317, 5
      %v3320 = vsel %vm1699, %v3315, %v3319
      %v3321 = vshrl.u32 %v3218, 16
      %v3323 = vrot.slane %v3321, 4
      %v3324 = vor.u32 %v3323, %v3319
      %v3325 = vrot.slane %v3324, 4
      %v3327 = vshll.u32 %v3219, 16
      %v3329 = vrot.slane %v3327, 5
      %v3330 = vsel %vm1699, %v3325, %v3329
      %v3332 = vshrl.u32 %v3220, 16
      %v3334 = vrot.slane %v3332, 4
      %v3335 = vshll.u32 %v3220, 16
      %v3337 = vrot.slane %v3335, 5
      %v3338 = vor.u32 %v3334, %v3337
      %v3339 = vrot.slane %v3338, 4
      %v3341 = vshll.u32 %v3221, 16
      %v3343 = vrot.slane %v3341, 5
      %v3344 = vsel %vm1699, %v3339, %v3343
      %v3345 = vshrl.u32 %v3221, 16
      %v3347 = vrot.slane %v3345, 4
      %v3348 = vor.u32 %v3347, %v3343
      %v3349 = vrot.slane %v3348, 4
      %v3351 = vshll.u32 %v3222, 16
      %v3353 = vrot.slane %v3351, 5
      %v3354 = vsel %vm1699, %v3349, %v3353
      %v3356 = vshrl.u32 %v3223, 16
      %v3358 = vrot.slane %v3356, 4
      %v3359 = vshll.u32 %v3223, 16
      %v3361 = vrot.slane %v3359, 5
      %v3362 = vor.u32 %v3358, %v3361
      %v3363 = vrot.slane %v3362, 4
      %v3365 = vshll.u32 %v3224, 16
      %v3367 = vrot.slane %v3365, 5
      %v3368 = vsel %vm1699, %v3363, %v3367
      %v3369 = vshrl.u32 %v3224, 16
      %v3371 = vrot.slane %v3369, 4
      %v3372 = vor.u32 %v3371, %v3367
      %v3373 = vrot.slane %v3372, 4
      %v3375 = vshll.u32 %v3225, 16
      %v3377 = vrot.slane %v3375, 5
      %v3378 = vsel %vm1699, %v3373, %v3377
      %v3380 = vshrl.u32 %v3226, 16
      %v3382 = vrot.slane %v3380, 4
      %v3383 = vshll.u32 %v3226, 16
      %v3385 = vrot.slane %v3383, 5
      %v3386 = vor.u32 %v3382, %v3385
      %v3387 = vrot.slane %v3386, 4
      %v3389 = vshll.u32 %v3227, 16
      %v3391 = vrot.slane %v3389, 5
      %v3392 = vsel %vm1699, %v3387, %v3391
      %v3393 = vshrl.u32 %v3227, 16
      %v3395 = vrot.slane %v3393, 4
      %v3396 = vor.u32 %v3395, %v3391
      %v3397 = vrot.slane %v3396, 4
      %v3399 = vshll.u32 %v3228, 16
      %v3401 = vrot.slane %v3399, 5
      %v3402 = vsel %vm1699, %v3397, %v3401
      %v3404 = vshrl.u32 %v3229, 16
      %v3406 = vrot.slane %v3404, 4
      %v3407 = vshll.u32 %v3229, 16
      %v3409 = vrot.slane %v3407, 5
      %v3410 = vor.u32 %v3406, %v3409
      %v3411 = vrot.slane %v3410, 4
      %v3413 = vshll.u32 %v3230, 16
      %v3415 = vrot.slane %v3413, 5
      %v3416 = vsel %vm1699, %v3411, %v3415
      %v3417 = vshrl.u32 %v3230, 16
      %v3419 = vrot.slane %v3417, 4
      %v3420 = vor.u32 %v3419, %v3415
      %v3421 = vrot.slane %v3420, 4
      %v3423 = vshll.u32 %v3231, 16
      %v3425 = vrot.slane %v3423, 5
      %v3426 = vsel %vm1699, %v3421, %v3425
      %v3428 = vshrl.u32 %v3232, 16
      %v3430 = vrot.slane %v3428, 4
      %v3431 = vshll.u32 %v3232, 16
      %v3433 = vrot.slane %v3431, 5
      %v3434 = vor.u32 %v3430, %v3433
      %v3435 = vrot.slane %v3434, 4
      %v3437 = vshll.u32 %v3233, 16
      %v3439 = vrot.slane %v3437, 5
      %v3440 = vsel %vm1699, %v3435, %v3439
      %v3441 = vshrl.u32 %v3233, 16
      %v3443 = vrot.slane %v3441, 4
      %v3444 = vor.u32 %v3443, %v3439
      %v3445 = vrot.slane %v3444, 4
      %v3447 = vshll.u32 %v3234, 16
      %v3449 = vrot.slane %v3447, 5
      %v3450 = vsel %vm1699, %v3445, %v3449
      %v3452 = vshrl.u32 %v3235, 16
      %v3454 = vrot.slane %v3452, 4
      %v3455 = vshll.u32 %v3235, 16
      %v3457 = vrot.slane %v3455, 5
      %v3458 = vor.u32 %v3454, %v3457
      %v3459 = vrot.slane %v3458, 4
      %v3461 = vshll.u32 %v3236, 16
      %v3463 = vrot.slane %v3461, 5
      %v3464 = vsel %vm1699, %v3459, %v3463
      %v3465 = vshrl.u32 %v3236, 16
      %v3467 = vrot.slane %v3465, 4
      %v3468 = vor.u32 %v3467, %v3463
      %v3469 = vrot.slane %v3468, 4
      %v3471 = vshll.u32 %v3237, 16
      %v3473 = vrot.slane %v3471, 5
      %v3474 = vsel %vm1699, %v3469, %v3473
      %v3476 = vshrl.u32 %v3238, 16
      %v3478 = vrot.slane %v3476, 4
      %v3479 = vshll.u32 %v3238, 16
      %v3481 = vrot.slane %v3479, 5
      %v3482 = vor.u32 %v3478, %v3481
      %v3483 = vrot.slane %v3482, 4
      %v3485 = vshll.u32 %v3239, 16
      %v3487 = vrot.slane %v3485, 5
      %v3488 = vsel %vm1699, %v3483, %v3487
      %v3489 = vshrl.u32 %v3239, 16
      %v3491 = vrot.slane %v3489, 4
      %v3492 = vor.u32 %v3491, %v3487
      %v3493 = vrot.slane %v3492, 4
      %v3495 = vshll.u32 %v3240, 16
      %v3497 = vrot.slane %v3495, 5
      %v3498 = vsel %vm1699, %v3493, %v3497
      %v3500 = vshrl.u32 %v3241, 16
      %v3502 = vrot.slane %v3500, 4
      %v3503 = vshll.u32 %v3241, 16
      %v3505 = vrot.slane %v3503, 5
      %v3506 = vor.u32 %v3502, %v3505
      %v3507 = vrot.slane %v3506, 4
      %v3509 = vshll.u32 %v3242, 16
      %v3511 = vrot.slane %v3509, 5
      %v3512 = vsel %vm1699, %v3507, %v3511
      %v3513 = vshrl.u32 %v3242, 16
      %v3515 = vrot.slane %v3513, 4
      %v3516 = vor.u32 %v3515, %v3511
      %v3517 = vrot.slane %v3516, 4
      %v3519 = vshll.u32 %v3243, 16
      %v3521 = vrot.slane %v3519, 5
      %v3522 = vsel %vm1699, %v3517, %v3521
      %v3524 = vshrl.u32 %v3244, 16
      %v3526 = vrot.slane %v3524, 4
      %v3527 = vshll.u32 %v3244, 16
      %v3529 = vrot.slane %v3527, 5
      %v3530 = vor.u32 %v3526, %v3529
      %v3531 = vrot.slane %v3530, 4
      %v3533 = vshll.u32 %v3245, 16
      %v3535 = vrot.slane %v3533, 5
      %v3536 = vsel %vm1699, %v3531, %v3535
      %v3537 = vshrl.u32 %v3245, 16
      %v3539 = vrot.slane %v3537, 4
      %v3540 = vor.u32 %v3539, %v3535
      %v3541 = vrot.slane %v3540, 4
      %v3543 = vshll.u32 %v3246, 16
      %v3545 = vrot.slane %v3543, 5
      %v3546 = vsel %vm1699, %v3541, %v3545
      %v3548 = vshrl.u32 %v3247, 16
      %v3550 = vrot.slane %v3548, 4
      %v3551 = vshll.u32 %v3247, 16
      %v3553 = vrot.slane %v3551, 5
      %v3554 = vor.u32 %v3550, %v3553
      %v3555 = vrot.slane %v3554, 4
      %v3557 = vshll.u32 %v3248, 16
      %v3559 = vrot.slane %v3557, 5
      %v3560 = vsel %vm1699, %v3555, %v3559
      %v3561 = vshrl.u32 %v3248, 16
      %v3563 = vrot.slane %v3561, 4
      %v3564 = vor.u32 %v3563, %v3559
      %v3565 = vrot.slane %v3564, 4
      %v3567 = vshll.u32 %v3249, 16
      %v3569 = vrot.slane %v3567, 5
      %v3570 = vsel %vm1699, %v3565, %v3569
      %v3572 = vshrl.u32 %v3250, 16
      %v3574 = vrot.slane %v3572, 4
      %v3575 = vshll.u32 %v3250, 16
      %v3577 = vrot.slane %v3575, 5
      %v3578 = vor.u32 %v3574, %v3577
      %v3579 = vrot.slane %v3578, 4
      %v3581 = vshll.u32 %v3251, 16
      %v3583 = vrot.slane %v3581, 5
      %v3584 = vsel %vm1699, %v3579, %v3583
      %v3585 = vshrl.u32 %v3251, 16
      %v3587 = vrot.slane %v3585, 4
      %v3588 = vor.u32 %v3587, %v3583
      %v3589 = vrot.slane %v3588, 4
      %v3591 = vshll.u32 %v3252, 16
      %v3593 = vrot.slane %v3591, 5
      %v3594 = vsel %vm1699, %v3589, %v3593
      %v3596 = vshrl.u32 %v3253, 16
      %v3598 = vrot.slane %v3596, 4
      %v3599 = vshll.u32 %v3253, 16
      %v3601 = vrot.slane %v3599, 5
      %v3602 = vor.u32 %v3598, %v3601
      %v3603 = vrot.slane %v3602, 4
      %v3605 = vshll.u32 %v3254, 16
      %v3607 = vrot.slane %v3605, 5
      %v3608 = vsel %vm1699, %v3603, %v3607
      %v3609 = vshrl.u32 %v3254, 16
      %v3611 = vrot.slane %v3609, 4
      %v3612 = vor.u32 %v3611, %v3607
      %v3613 = vrot.slane %v3612, 4
      %v3615 = vshll.u32 %v3255, 16
      %v3617 = vrot.slane %v3615, 5
      %v3618 = vsel %vm1699, %v3613, %v3617
      %v3620 = vshrl.u32 %v3256, 16
      %v3622 = vrot.slane %v3620, 4
      %v3623 = vshll.u32 %v3256, 16
      %v3625 = vrot.slane %v3623, 5
      %v3626 = vor.u32 %v3622, %v3625
      %v3627 = vrot.slane %v3626, 4
      %v3629 = vshll.u32 %v3257, 16
      %v3631 = vrot.slane %v3629, 5
      %v3632 = vsel %vm1699, %v3627, %v3631
      %v3633 = vshrl.u32 %v3257, 16
      %v3635 = vrot.slane %v3633, 4
      %v3636 = vor.u32 %v3635, %v3631
      %v3637 = vrot.slane %v3636, 4
      %v3639 = vshll.u32 %v3258, 16
      %v3641 = vrot.slane %v3639, 5
      %v3642 = vsel %vm1699, %v3637, %v3641
      %s3643 = scalar_lea.vmem %s8, 64
      %v3644 = vld [vmem:[%s3643] sm:$0xf]
      %v3645 = vld [vmem:[%s3643 + $0x4] sm:$0xf]
      %v3646 = vld [vmem:[%s3643 + $0x8] sm:$0xf]
      %v3647 = vld [vmem:[%s3643 + $0xc] sm:$0xf]
      %v3648 = vunpack.c.l.b16 %v3272
      %v3649 = vunpack.c.l.b16 %v3282
      %v3650 = vunpack.c.l.b16 %v3296
      %v3651 = vunpack.c.l.b16 %v3306
      %v3652 = vunpack.c.l.b16 %v3320
      %v3653 = vunpack.c.l.b16 %v3330
      %v3654 = vunpack.c.l.b16 %v3344
      %v3655 = vunpack.c.l.b16 %v3354
      %v3656 = vunpack.c.l.b16 %v3368
      %v3657 = vunpack.c.l.b16 %v3378
      %v3658 = vunpack.c.l.b16 %v3392
      %v3659 = vunpack.c.l.b16 %v3402
      %v3660 = vunpack.c.l.b16 %v3416
      %v3661 = vunpack.c.l.b16 %v3426
      %v3662 = vunpack.c.l.b16 %v3440
      %v3663 = vunpack.c.l.b16 %v3450
      %v3664 = vunpack.c.l.b16 %v3464
      %v3665 = vunpack.c.l.b16 %v3474
      %v3666 = vunpack.c.l.b16 %v3488
      %v3667 = vunpack.c.l.b16 %v3498
      %v3668 = vunpack.c.l.b16 %v3512
      %v3669 = vunpack.c.l.b16 %v3522
      %v3670 = vunpack.c.l.b16 %v3536
      %v3671 = vunpack.c.l.b16 %v3546
      %v3672 = vunpack.c.l.b16 %v3560
      %v3673 = vunpack.c.l.b16 %v3570
      %v3674 = vunpack.c.l.b16 %v3584
      %v3675 = vunpack.c.l.b16 %v3594
      %v3676 = vunpack.c.l.b16 %v3608
      %v3677 = vunpack.c.l.b16 %v3618
      %v3678 = vunpack.c.l.b16 %v3632
      %v3679 = vunpack.c.l.b16 %v3642
      %v3680 = vpack.c.b16 %v3649, %v3648
      %v3681 = vpack.c.b16 %v3651, %v3650
      %v3682 = vpack.c.b16 %v3653, %v3652
      %v3683 = vpack.c.b16 %v3655, %v3654
      %v3684 = vpack.c.b16 %v3657, %v3656
      %v3685 = vpack.c.b16 %v3659, %v3658
      %v3686 = vpack.c.b16 %v3661, %v3660
      %v3687 = vpack.c.b16 %v3663, %v3662
      %v3688 = vpack.c.b16 %v3665, %v3664
      %v3689 = vpack.c.b16 %v3667, %v3666
      %v3690 = vpack.c.b16 %v3669, %v3668
      %v3691 = vpack.c.b16 %v3671, %v3670
      %v3692 = vpack.c.b16 %v3673, %v3672
      %v3693 = vpack.c.b16 %v3675, %v3674
      %v3694 = vpack.c.b16 %v3677, %v3676
      %v3695 = vpack.c.b16 %v3679, %v3678
      %v3700 = vunpack.c.l.b16 %v3644
      %v3701 = vunpack.c.l.b16 %v3645
      %v3702 = vunpack.c.l.b16 %v3646
      %v3703 = vunpack.c.l.b16 %v3647
      %v3704 = vpack.c.b16 %v3701, %v3700
      %v3705 = vpack.c.b16 %v3703, %v3702
      %v3709 = vsel %vm2149, %v3680, 0
      %v3712 = vsel %vm2149, %v3681, 0
      %v3715 = vsel %vm2149, %v3682, 0
      %v3718 = vsel %vm2149, %v3683, 0
      %v3721 = vsel %vm2149, %v3684, 0
      %v3724 = vsel %vm2149, %v3685, 0
      %v3727 = vsel %vm2149, %v3686, 0
      %v3730 = vsel %vm2149, %v3687, 0
      %v3733 = vsel %vm2149, %v3688, 0
      %v3736 = vsel %vm2149, %v3689, 0
      %v3739 = vsel %vm2149, %v3690, 0
      %v3742 = vsel %vm2149, %v3691, 0
      %v3745 = vsel %vm2149, %v3692, 0
      %v3748 = vsel %vm2149, %v3693, 0
      %v3751 = vsel %vm2149, %v3694, 0
      %v3754 = vsel %vm2149, %v3695, 0
      %3756 = vmatpush.bf16.msra.mxu0 0
      %3757 = vmatpush.bf16.msra.mxu0 0
      %3758 = vmatpush.bf16.msra.mxu0 0
      %3759 = vmatpush.bf16.msra.mxu0 0
      %3760 = vmatpush.bf16.msra.mxu0 0
      %3761 = vmatpush.bf16.msra.mxu0 0
      %3762 = vmatpush.bf16.msra.mxu0 %v3705
      %3763 = vmatpush.bf16.msra.mxu0 %v3704
      %3764 = vmatmul.bf16.gmra.mxu0 %v3709
      %v3765 = vpop.f32.mrf.mxu0
      %v3766 = vadd.f32 0.0, %v3765
      %v3767 = vpop.f32.mrf.mxu0
      %v3768 = vadd.f32 0.0, %v3767
      %3769 = vmatmul.bf16.gmra.mxu0 %v3712
      %v3770 = vpop.f32.mrf.mxu0
      %v3771 = vadd.f32 0.0, %v3770
      %v3772 = vpop.f32.mrf.mxu0
      %v3773 = vadd.f32 0.0, %v3772
      %3774 = vmatmul.bf16.gmra.mxu0 %v3715
      %v3775 = vpop.f32.mrf.mxu0
      %v3776 = vadd.f32 0.0, %v3775
      %v3777 = vpop.f32.mrf.mxu0
      %v3778 = vadd.f32 0.0, %v3777
      %3779 = vmatmul.bf16.gmra.mxu0 %v3718
      %v3780 = vpop.f32.mrf.mxu0
      %v3781 = vadd.f32 0.0, %v3780
      %v3782 = vpop.f32.mrf.mxu0
      %v3783 = vadd.f32 0.0, %v3782
      %3784 = vmatmul.bf16.gmra.mxu0 %v3721
      %v3785 = vpop.f32.mrf.mxu0
      %v3786 = vadd.f32 0.0, %v3785
      %v3787 = vpop.f32.mrf.mxu0
      %v3788 = vadd.f32 0.0, %v3787
      %3789 = vmatmul.bf16.gmra.mxu0 %v3724
      %v3790 = vpop.f32.mrf.mxu0
      %v3791 = vadd.f32 0.0, %v3790
      %v3792 = vpop.f32.mrf.mxu0
      %v3793 = vadd.f32 0.0, %v3792
      %3794 = vmatmul.bf16.gmra.mxu0 %v3727
      %v3795 = vpop.f32.mrf.mxu0
      %v3796 = vadd.f32 0.0, %v3795
      %v3797 = vpop.f32.mrf.mxu0
      %v3798 = vadd.f32 0.0, %v3797
      %3799 = vmatmul.bf16.gmra.mxu0 %v3730
      %v3800 = vpop.f32.mrf.mxu0
      %v3801 = vadd.f32 0.0, %v3800
      %v3802 = vpop.f32.mrf.mxu0
      %v3803 = vadd.f32 0.0, %v3802
      %3804 = vmatmul.bf16.gmra.mxu0 %v3733
      %v3805 = vpop.f32.mrf.mxu0
      %v3806 = vadd.f32 0.0, %v3805
      %v3807 = vpop.f32.mrf.mxu0
      %v3808 = vadd.f32 0.0, %v3807
      %3809 = vmatmul.bf16.gmra.mxu0 %v3736
      %v3810 = vpop.f32.mrf.mxu0
      %v3811 = vadd.f32 0.0, %v3810
      %v3812 = vpop.f32.mrf.mxu0
      %v3813 = vadd.f32 0.0, %v3812
      %3814 = vmatmul.bf16.gmra.mxu0 %v3739
      %v3815 = vpop.f32.mrf.mxu0
      %v3816 = vadd.f32 0.0, %v3815
      %v3817 = vpop.f32.mrf.mxu0
      %v3818 = vadd.f32 0.0, %v3817
      %3819 = vmatmul.bf16.gmra.mxu0 %v3742
      %v3820 = vpop.f32.mrf.mxu0
      %v3821 = vadd.f32 0.0, %v3820
      %v3822 = vpop.f32.mrf.mxu0
      %v3823 = vadd.f32 0.0, %v3822
      %3824 = vmatmul.bf16.gmra.mxu0 %v3745
      %v3825 = vpop.f32.mrf.mxu0
      %v3826 = vadd.f32 0.0, %v3825
      %v3827 = vpop.f32.mrf.mxu0
      %v3828 = vadd.f32 0.0, %v3827
      %3829 = vmatmul.bf16.gmra.mxu0 %v3748
      %v3830 = vpop.f32.mrf.mxu0
      %v3831 = vadd.f32 0.0, %v3830
      %v3832 = vpop.f32.mrf.mxu0
      %v3833 = vadd.f32 0.0, %v3832
      %3834 = vmatmul.bf16.gmra.mxu0 %v3751
      %v3835 = vpop.f32.mrf.mxu0
      %v3836 = vadd.f32 0.0, %v3835
      %v3837 = vpop.f32.mrf.mxu0
      %v3838 = vadd.f32 0.0, %v3837
      %3839 = vmatmul.bf16.gmra.mxu0 %v3754
      %v3840 = vpop.f32.mrf.mxu0
      %v3841 = vadd.f32 0.0, %v3840
      %v3842 = vpop.f32.mrf.mxu0
      %v3843 = vadd.f32 0.0, %v3842
      %3844 = vdwg.mxu0
      %v3845 = vadd.f32 %v3179, %v3766
      %v3846 = vadd.f32 %v3180, %v3768
      %v3847 = vadd.f32 %v3181, %v3771
      %v3848 = vadd.f32 %v3182, %v3773
      %v3849 = vadd.f32 %v3183, %v3776
      %v3850 = vadd.f32 %v3184, %v3778
      %v3851 = vadd.f32 %v3185, %v3781
      %v3852 = vadd.f32 %v3186, %v3783
      %v3853 = vadd.f32 %v3187, %v3786
      %v3854 = vadd.f32 %v3188, %v3788
      %v3855 = vadd.f32 %v3189, %v3791
      %v3856 = vadd.f32 %v3190, %v3793
      %v3857 = vadd.f32 %v3191, %v3796
      %v3858 = vadd.f32 %v3192, %v3798
      %v3859 = vadd.f32 %v3193, %v3801
      %v3860 = vadd.f32 %v3194, %v3803
      %v3861 = vadd.f32 %v3195, %v3806
      %v3862 = vadd.f32 %v3196, %v3808
      %v3863 = vadd.f32 %v3197, %v3811
      %v3864 = vadd.f32 %v3198, %v3813
      %v3865 = vadd.f32 %v3199, %v3816
      %v3866 = vadd.f32 %v3200, %v3818
      %v3867 = vadd.f32 %v3201, %v3821
      %v3868 = vadd.f32 %v3202, %v3823
      %v3869 = vadd.f32 %v3203, %v3826
      %v3870 = vadd.f32 %v3204, %v3828
      %v3871 = vadd.f32 %v3205, %v3831
      %v3872 = vadd.f32 %v3206, %v3833
      %v3873 = vadd.f32 %v3207, %v3836
      %v3874 = vadd.f32 %v3208, %v3838
      %v3875 = vadd.f32 %v3209, %v3841
      %v3876 = vadd.f32 %v3210, %v3843
      %v3877 = vld [vmem:[%s1395] sm:$0xe]
      %v3878 = vld [vmem:[%s1395 + $0xc] sm:$0xe]
      %v3879 = vld [vmem:[%s1395 + $0x18] sm:$0xe]
      %v3880 = vld [vmem:[%s1395 + $0x24] sm:$0xe]
      %v3881 = vld [vmem:[%s1395 + $0x30] sm:$0xe]
      %v3882 = vld [vmem:[%s1395 + $0x3c] sm:$0xe]
      %v3883 = vld [vmem:[%s1395 + $0x48] sm:$0xe]
      %v3884 = vld [vmem:[%s1395 + $0x54] sm:$0xe]
      %v3885 = vld [vmem:[%s1395 + $0x60] sm:$0xe]
      %v3886 = vld [vmem:[%s1395 + $0x6c] sm:$0xe]
      %v3887 = vld [vmem:[%s1395 + $0x78] sm:$0xe]
      %v3888 = vld [vmem:[%s1395 + $0x84] sm:$0xe]
      %v3889 = vld [vmem:[%s1395 + $0x90] sm:$0xe]
      %v3890 = vld [vmem:[%s1395 + $0x9c] sm:$0xe]
      %v3891 = vld [vmem:[%s1395 + $0xa8] sm:$0xe]
      %v3892 = vld [vmem:[%s1395 + $0xb4] sm:$0xe]
      %v3941 = vrot.slane %v3877, 5
      %v3942 = vrot.slane %v3941, 4
      %v3943 = vrot.slane %v3212, 5
      %v3944 = vsel %vm2566, %v3942, %v3943
      %v3945 = vrot.slane %v3943, 4
      %v3946 = vrot.slane %v3213, 5
      %v3947 = vsel %vm2566, %v3945, %v3946
      %v3948 = vrot.slane %v3878, 5
      %v3949 = vrot.slane %v3948, 4
      %v3950 = vrot.slane %v3215, 5
      %v3951 = vsel %vm2566, %v3949, %v3950
      %v3952 = vrot.slane %v3950, 4
      %v3953 = vrot.slane %v3216, 5
      %v3954 = vsel %vm2566, %v3952, %v3953
      %v3955 = vrot.slane %v3879, 5
      %v3956 = vrot.slane %v3955, 4
      %v3957 = vrot.slane %v3218, 5
      %v3958 = vsel %vm2566, %v3956, %v3957
      %v3959 = vrot.slane %v3957, 4
      %v3960 = vrot.slane %v3219, 5
      %v3961 = vsel %vm2566, %v3959, %v3960
      %v3962 = vrot.slane %v3880, 5
      %v3963 = vrot.slane %v3962, 4
      %v3964 = vrot.slane %v3221, 5
      %v3965 = vsel %vm2566, %v3963, %v3964
      %v3966 = vrot.slane %v3964, 4
      %v3967 = vrot.slane %v3222, 5
      %v3968 = vsel %vm2566, %v3966, %v3967
      %v3969 = vrot.slane %v3881, 5
      %v3970 = vrot.slane %v3969, 4
      %v3971 = vrot.slane %v3224, 5
      %v3972 = vsel %vm2566, %v3970, %v3971
      %v3973 = vrot.slane %v3971, 4
      %v3974 = vrot.slane %v3225, 5
      %v3975 = vsel %vm2566, %v3973, %v3974
      %v3976 = vrot.slane %v3882, 5
      %v3977 = vrot.slane %v3976, 4
      %v3978 = vrot.slane %v3227, 5
      %v3979 = vsel %vm2566, %v3977, %v3978
      %v3980 = vrot.slane %v3978, 4
      %v3981 = vrot.slane %v3228, 5
      %v3982 = vsel %vm2566, %v3980, %v3981
      %v3983 = vrot.slane %v3883, 5
      %v3984 = vrot.slane %v3983, 4
      %v3985 = vrot.slane %v3230, 5
      %v3986 = vsel %vm2566, %v3984, %v3985
      %v3987 = vrot.slane %v3985, 4
      %v3988 = vrot.slane %v3231, 5
      %v3989 = vsel %vm2566, %v3987, %v3988
      %v3990 = vrot.slane %v3884, 5
      %v3991 = vrot.slane %v3990, 4
      %v3992 = vrot.slane %v3233, 5
      %v3993 = vsel %vm2566, %v3991, %v3992
      %v3994 = vrot.slane %v3992, 4
      %v3995 = vrot.slane %v3234, 5
      %v3996 = vsel %vm2566, %v3994, %v3995
      %v3997 = vrot.slane %v3885, 5
      %v3998 = vrot.slane %v3997, 4
      %v3999 = vrot.slane %v3236, 5
      %v4000 = vsel %vm2566, %v3998, %v3999
      %v4001 = vrot.slane %v3999, 4
      %v4002 = vrot.slane %v3237, 5
      %v4003 = vsel %vm2566, %v4001, %v4002
      %v4004 = vrot.slane %v3886, 5
      %v4005 = vrot.slane %v4004, 4
      %v4006 = vrot.slane %v3239, 5
      %v4007 = vsel %vm2566, %v4005, %v4006
      %v4008 = vrot.slane %v4006, 4
      %v4009 = vrot.slane %v3240, 5
      %v4010 = vsel %vm2566, %v4008, %v4009
      %v4011 = vrot.slane %v3887, 5
      %v4012 = vrot.slane %v4011, 4
      %v4013 = vrot.slane %v3242, 5
      %v4014 = vsel %vm2566, %v4012, %v4013
      %v4015 = vrot.slane %v4013, 4
      %v4016 = vrot.slane %v3243, 5
      %v4017 = vsel %vm2566, %v4015, %v4016
      %v4018 = vrot.slane %v3888, 5
      %v4019 = vrot.slane %v4018, 4
      %v4020 = vrot.slane %v3245, 5
      %v4021 = vsel %vm2566, %v4019, %v4020
      %v4022 = vrot.slane %v4020, 4
      %v4023 = vrot.slane %v3246, 5
      %v4024 = vsel %vm2566, %v4022, %v4023
      %v4025 = vrot.slane %v3889, 5
      %v4026 = vrot.slane %v4025, 4
      %v4027 = vrot.slane %v3248, 5
      %v4028 = vsel %vm2566, %v4026, %v4027
      %v4029 = vrot.slane %v4027, 4
      %v4030 = vrot.slane %v3249, 5
      %v4031 = vsel %vm2566, %v4029, %v4030
      %v4032 = vrot.slane %v3890, 5
      %v4033 = vrot.slane %v4032, 4
      %v4034 = vrot.slane %v3251, 5
      %v4035 = vsel %vm2566, %v4033, %v4034
      %v4036 = vrot.slane %v4034, 4
      %v4037 = vrot.slane %v3252, 5
      %v4038 = vsel %vm2566, %v4036, %v4037
      %v4039 = vrot.slane %v3891, 5
      %v4040 = vrot.slane %v4039, 4
      %v4041 = vrot.slane %v3254, 5
      %v4042 = vsel %vm2566, %v4040, %v4041
      %v4043 = vrot.slane %v4041, 4
      %v4044 = vrot.slane %v3255, 5
      %v4045 = vsel %vm2566, %v4043, %v4044
      %v4046 = vrot.slane %v3892, 5
      %v4047 = vrot.slane %v4046, 4
      %v4048 = vrot.slane %v3257, 5
      %v4049 = vsel %vm2566, %v4047, %v4048
      %v4050 = vrot.slane %v4048, 4
      %v4051 = vrot.slane %v3258, 5
      %v4052 = vsel %vm2566, %v4050, %v4051
      %s4053 = scalar_lea.vmem %s8, 80
      %v4054 = vld [vmem:[%s4053] sm:$0xf]
      %v4055 = vld [vmem:[%s4053 + $0x4] sm:$0xf]
      %v4056 = vld [vmem:[%s4053 + $0x8] sm:$0xf]
      %v4057 = vld [vmem:[%s4053 + $0xc] sm:$0xf]
      %v4058 = vunpack.c.l.b16 %v3944
      %v4059 = vunpack.c.l.b16 %v3947
      %v4060 = vunpack.c.l.b16 %v3951
      %v4061 = vunpack.c.l.b16 %v3954
      %v4062 = vunpack.c.l.b16 %v3958
      %v4063 = vunpack.c.l.b16 %v3961
      %v4064 = vunpack.c.l.b16 %v3965
      %v4065 = vunpack.c.l.b16 %v3968
      %v4066 = vunpack.c.l.b16 %v3972
      %v4067 = vunpack.c.l.b16 %v3975
      %v4068 = vunpack.c.l.b16 %v3979
      %v4069 = vunpack.c.l.b16 %v3982
      %v4070 = vunpack.c.l.b16 %v3986
      %v4071 = vunpack.c.l.b16 %v3989
      %v4072 = vunpack.c.l.b16 %v3993
      %v4073 = vunpack.c.l.b16 %v3996
      %v4074 = vunpack.c.l.b16 %v4000
      %v4075 = vunpack.c.l.b16 %v4003
      %v4076 = vunpack.c.l.b16 %v4007
      %v4077 = vunpack.c.l.b16 %v4010
      %v4078 = vunpack.c.l.b16 %v4014
      %v4079 = vunpack.c.l.b16 %v4017
      %v4080 = vunpack.c.l.b16 %v4021
      %v4081 = vunpack.c.l.b16 %v4024
      %v4082 = vunpack.c.l.b16 %v4028
      %v4083 = vunpack.c.l.b16 %v4031
      %v4084 = vunpack.c.l.b16 %v4035
      %v4085 = vunpack.c.l.b16 %v4038
      %v4086 = vunpack.c.l.b16 %v4042
      %v4087 = vunpack.c.l.b16 %v4045
      %v4088 = vunpack.c.l.b16 %v4049
      %v4089 = vunpack.c.l.b16 %v4052
      %v4090 = vpack.c.b16 %v4059, %v4058
      %v4091 = vpack.c.b16 %v4061, %v4060
      %v4092 = vpack.c.b16 %v4063, %v4062
      %v4093 = vpack.c.b16 %v4065, %v4064
      %v4094 = vpack.c.b16 %v4067, %v4066
      %v4095 = vpack.c.b16 %v4069, %v4068
      %v4096 = vpack.c.b16 %v4071, %v4070
      %v4097 = vpack.c.b16 %v4073, %v4072
      %v4098 = vpack.c.b16 %v4075, %v4074
      %v4099 = vpack.c.b16 %v4077, %v4076
      %v4100 = vpack.c.b16 %v4079, %v4078
      %v4101 = vpack.c.b16 %v4081, %v4080
      %v4102 = vpack.c.b16 %v4083, %v4082
      %v4103 = vpack.c.b16 %v4085, %v4084
      %v4104 = vpack.c.b16 %v4087, %v4086
      %v4105 = vpack.c.b16 %v4089, %v4088
      %v4110 = vunpack.c.l.b16 %v4054
      %v4111 = vunpack.c.l.b16 %v4055
      %v4112 = vunpack.c.l.b16 %v4056
      %v4113 = vunpack.c.l.b16 %v4057
      %v4114 = vpack.c.b16 %v4111, %v4110
      %v4115 = vpack.c.b16 %v4113, %v4112
      %v4119 = vsel %vm2149, %v4090, 0
      %v4122 = vsel %vm2149, %v4091, 0
      %v4125 = vsel %vm2149, %v4092, 0
      %v4128 = vsel %vm2149, %v4093, 0
      %v4131 = vsel %vm2149, %v4094, 0
      %v4134 = vsel %vm2149, %v4095, 0
      %v4137 = vsel %vm2149, %v4096, 0
      %v4140 = vsel %vm2149, %v4097, 0
      %v4143 = vsel %vm2149, %v4098, 0
      %v4146 = vsel %vm2149, %v4099, 0
      %v4149 = vsel %vm2149, %v4100, 0
      %v4152 = vsel %vm2149, %v4101, 0
      %v4155 = vsel %vm2149, %v4102, 0
      %v4158 = vsel %vm2149, %v4103, 0
      %v4161 = vsel %vm2149, %v4104, 0
      %v4164 = vsel %vm2149, %v4105, 0
      %4166 = vmatpush.bf16.msra.mxu0 0
      %4167 = vmatpush.bf16.msra.mxu0 0
      %4168 = vmatpush.bf16.msra.mxu0 0
      %4169 = vmatpush.bf16.msra.mxu0 0
      %4170 = vmatpush.bf16.msra.mxu0 0
      %4171 = vmatpush.bf16.msra.mxu0 0
      %4172 = vmatpush.bf16.msra.mxu0 %v4115
      %4173 = vmatpush.bf16.msra.mxu0 %v4114
      %4174 = vmatmul.bf16.gmra.mxu0 %v4119
      %v4175 = vpop.f32.mrf.mxu0
      %v4176 = vadd.f32 0.0, %v4175
      %v4177 = vpop.f32.mrf.mxu0
      %v4178 = vadd.f32 0.0, %v4177
      %4179 = vmatmul.bf16.gmra.mxu0 %v4122
      %v4180 = vpop.f32.mrf.mxu0
      %v4181 = vadd.f32 0.0, %v4180
      %v4182 = vpop.f32.mrf.mxu0
      %v4183 = vadd.f32 0.0, %v4182
      %4184 = vmatmul.bf16.gmra.mxu0 %v4125
      %v4185 = vpop.f32.mrf.mxu0
      %v4186 = vadd.f32 0.0, %v4185
      %v4187 = vpop.f32.mrf.mxu0
      %v4188 = vadd.f32 0.0, %v4187
      %4189 = vmatmul.bf16.gmra.mxu0 %v4128
      %v4190 = vpop.f32.mrf.mxu0
      %v4191 = vadd.f32 0.0, %v4190
      %v4192 = vpop.f32.mrf.mxu0
      %v4193 = vadd.f32 0.0, %v4192
      %4194 = vmatmul.bf16.gmra.mxu0 %v4131
      %v4195 = vpop.f32.mrf.mxu0
      %v4196 = vadd.f32 0.0, %v4195
      %v4197 = vpop.f32.mrf.mxu0
      %v4198 = vadd.f32 0.0, %v4197
      %4199 = vmatmul.bf16.gmra.mxu0 %v4134
      %v4200 = vpop.f32.mrf.mxu0
      %v4201 = vadd.f32 0.0, %v4200
      %v4202 = vpop.f32.mrf.mxu0
      %v4203 = vadd.f32 0.0, %v4202
      %4204 = vmatmul.bf16.gmra.mxu0 %v4137
      %v4205 = vpop.f32.mrf.mxu0
      %v4206 = vadd.f32 0.0, %v4205
      %v4207 = vpop.f32.mrf.mxu0
      %v4208 = vadd.f32 0.0, %v4207
      %4209 = vmatmul.bf16.gmra.mxu0 %v4140
      %v4210 = vpop.f32.mrf.mxu0
      %v4211 = vadd.f32 0.0, %v4210
      %v4212 = vpop.f32.mrf.mxu0
      %v4213 = vadd.f32 0.0, %v4212
      %4214 = vmatmul.bf16.gmra.mxu0 %v4143
      %v4215 = vpop.f32.mrf.mxu0
      %v4216 = vadd.f32 0.0, %v4215
      %v4217 = vpop.f32.mrf.mxu0
      %v4218 = vadd.f32 0.0, %v4217
      %4219 = vmatmul.bf16.gmra.mxu0 %v4146
      %v4220 = vpop.f32.mrf.mxu0
      %v4221 = vadd.f32 0.0, %v4220
      %v4222 = vpop.f32.mrf.mxu0
      %v4223 = vadd.f32 0.0, %v4222
      %4224 = vmatmul.bf16.gmra.mxu0 %v4149
      %v4225 = vpop.f32.mrf.mxu0
      %v4226 = vadd.f32 0.0, %v4225
      %v4227 = vpop.f32.mrf.mxu0
      %v4228 = vadd.f32 0.0, %v4227
      %4229 = vmatmul.bf16.gmra.mxu0 %v4152
      %v4230 = vpop.f32.mrf.mxu0
      %v4231 = vadd.f32 0.0, %v4230
      %v4232 = vpop.f32.mrf.mxu0
      %v4233 = vadd.f32 0.0, %v4232
      %4234 = vmatmul.bf16.gmra.mxu0 %v4155
      %v4235 = vpop.f32.mrf.mxu0
      %v4236 = vadd.f32 0.0, %v4235
      %v4237 = vpop.f32.mrf.mxu0
      %v4238 = vadd.f32 0.0, %v4237
      %4239 = vmatmul.bf16.gmra.mxu0 %v4158
      %v4240 = vpop.f32.mrf.mxu0
      %v4241 = vadd.f32 0.0, %v4240
      %v4242 = vpop.f32.mrf.mxu0
      %v4243 = vadd.f32 0.0, %v4242
      %4244 = vmatmul.bf16.gmra.mxu0 %v4161
      %v4245 = vpop.f32.mrf.mxu0
      %v4246 = vadd.f32 0.0, %v4245
      %v4247 = vpop.f32.mrf.mxu0
      %v4248 = vadd.f32 0.0, %v4247
      %4249 = vmatmul.bf16.gmra.mxu0 %v4164
      %v4250 = vpop.f32.mrf.mxu0
      %v4251 = vadd.f32 0.0, %v4250
      %v4252 = vpop.f32.mrf.mxu0
      %v4253 = vadd.f32 0.0, %v4252
      %4254 = vdwg.mxu0
      %v4255 = vadd.f32 %v3845, %v4176
      %v4256 = vadd.f32 %v3846, %v4178
      %v4257 = vadd.f32 %v3847, %v4181
      %v4258 = vadd.f32 %v3848, %v4183
      %v4259 = vadd.f32 %v3849, %v4186
      %v4260 = vadd.f32 %v3850, %v4188
      %v4261 = vadd.f32 %v3851, %v4191
      %v4262 = vadd.f32 %v3852, %v4193
      %v4263 = vadd.f32 %v3853, %v4196
      %v4264 = vadd.f32 %v3854, %v4198
      %v4265 = vadd.f32 %v3855, %v4201
      %v4266 = vadd.f32 %v3856, %v4203
      %v4267 = vadd.f32 %v3857, %v4206
      %v4268 = vadd.f32 %v3858, %v4208
      %v4269 = vadd.f32 %v3859, %v4211
      %v4270 = vadd.f32 %v3860, %v4213
      %v4271 = vadd.f32 %v3861, %v4216
      %v4272 = vadd.f32 %v3862, %v4218
      %v4273 = vadd.f32 %v3863, %v4221
      %v4274 = vadd.f32 %v3864, %v4223
      %v4275 = vadd.f32 %v3865, %v4226
      %v4276 = vadd.f32 %v3866, %v4228
      %v4277 = vadd.f32 %v3867, %v4231
      %v4278 = vadd.f32 %v3868, %v4233
      %v4279 = vadd.f32 %v3869, %v4236
      %v4280 = vadd.f32 %v3870, %v4238
      %v4281 = vadd.f32 %v3871, %v4241
      %v4282 = vadd.f32 %v3872, %v4243
      %v4283 = vadd.f32 %v3873, %v4246
      %v4284 = vadd.f32 %v3874, %v4248
      %v4285 = vadd.f32 %v3875, %v4251
      %v4286 = vadd.f32 %v3876, %v4253
      %s4287 = scalar_lea.vmem [#allocation2], 24
      %v4288 = vld [vmem:[%s4287] sm:$0xf]
      %v4289 = vld [vmem:[%s4287 + $0x4] sm:$0xf]
      %v4290 = vld [vmem:[%s4287 + $0xc] sm:$0xf]
      %v4291 = vld [vmem:[%s4287 + $0x10] sm:$0xf]
      %v4292 = vld [vmem:[%s4287 + $0x18] sm:$0xf]
      %v4293 = vld [vmem:[%s4287 + $0x1c] sm:$0xf]
      %v4294 = vld [vmem:[%s4287 + $0x24] sm:$0xf]
      %v4295 = vld [vmem:[%s4287 + $0x28] sm:$0xf]
      %v4296 = vld [vmem:[%s4287 + $0x30] sm:$0xf]
      %v4297 = vld [vmem:[%s4287 + $0x34] sm:$0xf]
      %v4298 = vld [vmem:[%s4287 + $0x3c] sm:$0xf]
      %v4299 = vld [vmem:[%s4287 + $0x40] sm:$0xf]
      %v4300 = vld [vmem:[%s4287 + $0x48] sm:$0xf]
      %v4301 = vld [vmem:[%s4287 + $0x4c] sm:$0xf]
      %v4302 = vld [vmem:[%s4287 + $0x54] sm:$0xf]
      %v4303 = vld [vmem:[%s4287 + $0x58] sm:$0xf]
      %v4304 = vld [vmem:[%s4287 + $0x60] sm:$0xf]
      %v4305 = vld [vmem:[%s4287 + $0x64] sm:$0xf]
      %v4306 = vld [vmem:[%s4287 + $0x6c] sm:$0xf]
      %v4307 = vld [vmem:[%s4287 + $0x70] sm:$0xf]
      %v4308 = vld [vmem:[%s4287 + $0x78] sm:$0xf]
      %v4309 = vld [vmem:[%s4287 + $0x7c] sm:$0xf]
      %v4310 = vld [vmem:[%s4287 + $0x84] sm:$0xf]
      %v4311 = vld [vmem:[%s4287 + $0x88] sm:$0xf]
      %v4312 = vld [vmem:[%s4287 + $0x90] sm:$0xf]
      %v4313 = vld [vmem:[%s4287 + $0x94] sm:$0xf]
      %v4314 = vld [vmem:[%s4287 + $0x9c] sm:$0xf]
      %v4315 = vld [vmem:[%s4287 + $0xa0] sm:$0xf]
      %v4316 = vld [vmem:[%s4287 + $0xa8] sm:$0xf]
      %v4317 = vld [vmem:[%s4287 + $0xac] sm:$0xf]
      %v4318 = vld [vmem:[%s4287 + $0xb4] sm:$0xf]
      %v4319 = vld [vmem:[%s4287 + $0xb8] sm:$0xf]
      %s4320 = scalar_lea.vmem %s8, 96
      %v4321 = vld [vmem:[%s4320] sm:$0xf]
      %v4322 = vld [vmem:[%s4320 + $0x4] sm:$0xf]
      %v4323 = vld [vmem:[%s4320 + $0x8] sm:$0xf]
      %v4324 = vld [vmem:[%s4320 + $0xc] sm:$0xf]
      %v4357 = vunpack.c.l.b16 %v4288
      %v4358 = vunpack.c.l.b16 %v4289
      %v4359 = vunpack.c.l.b16 %v4290
      %v4360 = vunpack.c.l.b16 %v4291
      %v4361 = vunpack.c.l.b16 %v4292
      %v4362 = vunpack.c.l.b16 %v4293
      %v4363 = vunpack.c.l.b16 %v4294
      %v4364 = vunpack.c.l.b16 %v4295
      %v4365 = vunpack.c.l.b16 %v4296
      %v4366 = vunpack.c.l.b16 %v4297
      %v4367 = vunpack.c.l.b16 %v4298
      %v4368 = vunpack.c.l.b16 %v4299
      %v4369 = vunpack.c.l.b16 %v4300
      %v4370 = vunpack.c.l.b16 %v4301
      %v4371 = vunpack.c.l.b16 %v4302
      %v4372 = vunpack.c.l.b16 %v4303
      %v4373 = vunpack.c.l.b16 %v4304
      %v4374 = vunpack.c.l.b16 %v4305
      %v4375 = vunpack.c.l.b16 %v4306
      %v4376 = vunpack.c.l.b16 %v4307
      %v4377 = vunpack.c.l.b16 %v4308
      %v4378 = vunpack.c.l.b16 %v4309
      %v4379 = vunpack.c.l.b16 %v4310
      %v4380 = vunpack.c.l.b16 %v4311
      %v4381 = vunpack.c.l.b16 %v4312
      %v4382 = vunpack.c.l.b16 %v4313
      %v4383 = vunpack.c.l.b16 %v4314
      %v4384 = vunpack.c.l.b16 %v4315
      %v4385 = vunpack.c.l.b16 %v4316
      %v4386 = vunpack.c.l.b16 %v4317
      %v4387 = vunpack.c.l.b16 %v4318
      %v4388 = vunpack.c.l.b16 %v4319
      %v4389 = vpack.c.b16 %v4358, %v4357
      %v4390 = vpack.c.b16 %v4360, %v4359
      %v4391 = vpack.c.b16 %v4362, %v4361
      %v4392 = vpack.c.b16 %v4364, %v4363
      %v4393 = vpack.c.b16 %v4366, %v4365
      %v4394 = vpack.c.b16 %v4368, %v4367
      %v4395 = vpack.c.b16 %v4370, %v4369
      %v4396 = vpack.c.b16 %v4372, %v4371
      %v4397 = vpack.c.b16 %v4374, %v4373
      %v4398 = vpack.c.b16 %v4376, %v4375
      %v4399 = vpack.c.b16 %v4378, %v4377
      %v4400 = vpack.c.b16 %v4380, %v4379
      %v4401 = vpack.c.b16 %v4382, %v4381
      %v4402 = vpack.c.b16 %v4384, %v4383
      %v4403 = vpack.c.b16 %v4386, %v4385
      %v4404 = vpack.c.b16 %v4388, %v4387
      %v4409 = vunpack.c.l.b16 %v4321
      %v4410 = vunpack.c.l.b16 %v4322
      %v4411 = vunpack.c.l.b16 %v4323
      %v4412 = vunpack.c.l.b16 %v4324
      %v4413 = vpack.c.b16 %v4410, %v4409
      %v4414 = vpack.c.b16 %v4412, %v4411
      %v4418 = vsel %vm2149, %v4389, 0
      %v4421 = vsel %vm2149, %v4390, 0
      %v4424 = vsel %vm2149, %v4391, 0
      %v4427 = vsel %vm2149, %v4392, 0
      %v4430 = vsel %vm2149, %v4393, 0
      %v4433 = vsel %vm2149, %v4394, 0
      %v4436 = vsel %vm2149, %v4395, 0
      %v4439 = vsel %vm2149, %v4396, 0
      %v4442 = vsel %vm2149, %v4397, 0
      %v4445 = vsel %vm2149, %v4398, 0
      %v4448 = vsel %vm2149, %v4399, 0
      %v4451 = vsel %vm2149, %v4400, 0
      %v4454 = vsel %vm2149, %v4401, 0
      %v4457 = vsel %vm2149, %v4402, 0
      %v4460 = vsel %vm2149, %v4403, 0
      %v4463 = vsel %vm2149, %v4404, 0
      %4465 = vmatpush.bf16.msra.mxu0 0
      %4466 = vmatpush.bf16.msra.mxu0 0
      %4467 = vmatpush.bf16.msra.mxu0 0
      %4468 = vmatpush.bf16.msra.mxu0 0
      %4469 = vmatpush.bf16.msra.mxu0 0
      %4470 = vmatpush.bf16.msra.mxu0 0
      %4471 = vmatpush.bf16.msra.mxu0 %v4414
      %4472 = vmatpush.bf16.msra.mxu0 %v4413
      %4473 = vmatmul.bf16.gmra.mxu0 %v4418
      %v4474 = vpop.f32.mrf.mxu0
      %v4475 = vadd.f32 0.0, %v4474
      %v4476 = vpop.f32.mrf.mxu0
      %v4477 = vadd.f32 0.0, %v4476
      %4478 = vmatmul.bf16.gmra.mxu0 %v4421
      %v4479 = vpop.f32.mrf.mxu0
      %v4480 = vadd.f32 0.0, %v4479
      %v4481 = vpop.f32.mrf.mxu0
      %v4482 = vadd.f32 0.0, %v4481
      %4483 = vmatmul.bf16.gmra.mxu0 %v4424
      %v4484 = vpop.f32.mrf.mxu0
      %v4485 = vadd.f32 0.0, %v4484
      %v4486 = vpop.f32.mrf.mxu0
      %v4487 = vadd.f32 0.0, %v4486
      %4488 = vmatmul.bf16.gmra.mxu0 %v4427
      %v4489 = vpop.f32.mrf.mxu0
      %v4490 = vadd.f32 0.0, %v4489
      %v4491 = vpop.f32.mrf.mxu0
      %v4492 = vadd.f32 0.0, %v4491
      %4493 = vmatmul.bf16.gmra.mxu0 %v4430
      %v4494 = vpop.f32.mrf.mxu0
      %v4495 = vadd.f32 0.0, %v4494
      %v4496 = vpop.f32.mrf.mxu0
      %v4497 = vadd.f32 0.0, %v4496
      %4498 = vmatmul.bf16.gmra.mxu0 %v4433
      %v4499 = vpop.f32.mrf.mxu0
      %v4500 = vadd.f32 0.0, %v4499
      %v4501 = vpop.f32.mrf.mxu0
      %v4502 = vadd.f32 0.0, %v4501
      %4503 = vmatmul.bf16.gmra.mxu0 %v4436
      %v4504 = vpop.f32.mrf.mxu0
      %v4505 = vadd.f32 0.0, %v4504
      %v4506 = vpop.f32.mrf.mxu0
      %v4507 = vadd.f32 0.0, %v4506
      %4508 = vmatmul.bf16.gmra.mxu0 %v4439
      %v4509 = vpop.f32.mrf.mxu0
      %v4510 = vadd.f32 0.0, %v4509
      %v4511 = vpop.f32.mrf.mxu0
      %v4512 = vadd.f32 0.0, %v4511
      %4513 = vmatmul.bf16.gmra.mxu0 %v4442
      %v4514 = vpop.f32.mrf.mxu0
      %v4515 = vadd.f32 0.0, %v4514
      %v4516 = vpop.f32.mrf.mxu0
      %v4517 = vadd.f32 0.0, %v4516
      %4518 = vmatmul.bf16.gmra.mxu0 %v4445
      %v4519 = vpop.f32.mrf.mxu0
      %v4520 = vadd.f32 0.0, %v4519
      %v4521 = vpop.f32.mrf.mxu0
      %v4522 = vadd.f32 0.0, %v4521
      %4523 = vmatmul.bf16.gmra.mxu0 %v4448
      %v4524 = vpop.f32.mrf.mxu0
      %v4525 = vadd.f32 0.0, %v4524
      %v4526 = vpop.f32.mrf.mxu0
      %v4527 = vadd.f32 0.0, %v4526
      %4528 = vmatmul.bf16.gmra.mxu0 %v4451
      %v4529 = vpop.f32.mrf.mxu0
      %v4530 = vadd.f32 0.0, %v4529
      %v4531 = vpop.f32.mrf.mxu0
      %v4532 = vadd.f32 0.0, %v4531
      %4533 = vmatmul.bf16.gmra.mxu0 %v4454
      %v4534 = vpop.f32.mrf.mxu0
      %v4535 = vadd.f32 0.0, %v4534
      %v4536 = vpop.f32.mrf.mxu0
      %v4537 = vadd.f32 0.0, %v4536
      %4538 = vmatmul.bf16.gmra.mxu0 %v4457
      %v4539 = vpop.f32.mrf.mxu0
      %v4540 = vadd.f32 0.0, %v4539
      %v4541 = vpop.f32.mrf.mxu0
      %v4542 = vadd.f32 0.0, %v4541
      %4543 = vmatmul.bf16.gmra.mxu0 %v4460
      %v4544 = vpop.f32.mrf.mxu0
      %v4545 = vadd.f32 0.0, %v4544
      %v4546 = vpop.f32.mrf.mxu0
      %v4547 = vadd.f32 0.0, %v4546
      %4548 = vmatmul.bf16.gmra.mxu0 %v4463
      %v4549 = vpop.f32.mrf.mxu0
      %v4550 = vadd.f32 0.0, %v4549
      %v4551 = vpop.f32.mrf.mxu0
      %v4552 = vadd.f32 0.0, %v4551
      %4553 = vdwg.mxu0
      %v4554 = vadd.f32 %v4255, %v4475
      %v4555 = vadd.f32 %v4256, %v4477
      %v4556 = vadd.f32 %v4257, %v4480
      %v4557 = vadd.f32 %v4258, %v4482
      %v4558 = vadd.f32 %v4259, %v4485
      %v4559 = vadd.f32 %v4260, %v4487
      %v4560 = vadd.f32 %v4261, %v4490
      %v4561 = vadd.f32 %v4262, %v4492
      %v4562 = vadd.f32 %v4263, %v4495
      %v4563 = vadd.f32 %v4264, %v4497
      %v4564 = vadd.f32 %v4265, %v4500
      %v4565 = vadd.f32 %v4266, %v4502
      %v4566 = vadd.f32 %v4267, %v4505
      %v4567 = vadd.f32 %v4268, %v4507
      %v4568 = vadd.f32 %v4269, %v4510
      %v4569 = vadd.f32 %v4270, %v4512
      %v4570 = vadd.f32 %v4271, %v4515
      %v4571 = vadd.f32 %v4272, %v4517
      %v4572 = vadd.f32 %v4273, %v4520
      %v4573 = vadd.f32 %v4274, %v4522
      %v4574 = vadd.f32 %v4275, %v4525
      %v4575 = vadd.f32 %v4276, %v4527
      %v4576 = vadd.f32 %v4277, %v4530
      %v4577 = vadd.f32 %v4278, %v4532
      %v4578 = vadd.f32 %v4279, %v4535
      %v4579 = vadd.f32 %v4280, %v4537
      %v4580 = vadd.f32 %v4281, %v4540
      %v4581 = vadd.f32 %v4282, %v4542
      %v4582 = vadd.f32 %v4283, %v4545
      %v4583 = vadd.f32 %v4284, %v4547
      %v4584 = vadd.f32 %v4285, %v4550
      %v4585 = vadd.f32 %v4286, %v4552
      %v4586 = vld [vmem:[%s4287] sm:$0xf]
      %v4587 = vld [vmem:[%s4287 + $0x4] sm:$0xf]
      %v4588 = vld [vmem:[%s4287 + $0x8] sm:$0x1]
      %v4589 = vld [vmem:[%s4287 + $0xc] sm:$0xf]
      %v4590 = vld [vmem:[%s4287 + $0x10] sm:$0xf]
      %v4591 = vld [vmem:[%s4287 + $0x14] sm:$0x1]
      %v4592 = vld [vmem:[%s4287 + $0x18] sm:$0xf]
      %v4593 = vld [vmem:[%s4287 + $0x1c] sm:$0xf]
      %v4594 = vld [vmem:[%s4287 + $0x20] sm:$0x1]
      %v4595 = vld [vmem:[%s4287 + $0x24] sm:$0xf]
      %v4596 = vld [vmem:[%s4287 + $0x28] sm:$0xf]
      %v4597 = vld [vmem:[%s4287 + $0x2c] sm:$0x1]
      %v4598 = vld [vmem:[%s4287 + $0x30] sm:$0xf]
      %v4599 = vld [vmem:[%s4287 + $0x34] sm:$0xf]
      %v4600 = vld [vmem:[%s4287 + $0x38] sm:$0x1]
      %v4601 = vld [vmem:[%s4287 + $0x3c] sm:$0xf]
      %v4602 = vld [vmem:[%s4287 + $0x40] sm:$0xf]
      %v4603 = vld [vmem:[%s4287 + $0x44] sm:$0x1]
      %v4604 = vld [vmem:[%s4287 + $0x48] sm:$0xf]
      %v4605 = vld [vmem:[%s4287 + $0x4c] sm:$0xf]
      %v4606 = vld [vmem:[%s4287 + $0x50] sm:$0x1]
      %v4607 = vld [vmem:[%s4287 + $0x54] sm:$0xf]
      %v4608 = vld [vmem:[%s4287 + $0x58] sm:$0xf]
      %v4609 = vld [vmem:[%s4287 + $0x5c] sm:$0x1]
      %v4610 = vld [vmem:[%s4287 + $0x60] sm:$0xf]
      %v4611 = vld [vmem:[%s4287 + $0x64] sm:$0xf]
      %v4612 = vld [vmem:[%s4287 + $0x68] sm:$0x1]
      %v4613 = vld [vmem:[%s4287 + $0x6c] sm:$0xf]
      %v4614 = vld [vmem:[%s4287 + $0x70] sm:$0xf]
      %v4615 = vld [vmem:[%s4287 + $0x74] sm:$0x1]
      %v4616 = vld [vmem:[%s4287 + $0x78] sm:$0xf]
      %v4617 = vld [vmem:[%s4287 + $0x7c] sm:$0xf]
      %v4618 = vld [vmem:[%s4287 + $0x80] sm:$0x1]
      %v4619 = vld [vmem:[%s4287 + $0x84] sm:$0xf]
      %v4620 = vld [vmem:[%s4287 + $0x88] sm:$0xf]
      %v4621 = vld [vmem:[%s4287 + $0x8c] sm:$0x1]
      %v4622 = vld [vmem:[%s4287 + $0x90] sm:$0xf]
      %v4623 = vld [vmem:[%s4287 + $0x94] sm:$0xf]
      %v4624 = vld [vmem:[%s4287 + $0x98] sm:$0x1]
      %v4625 = vld [vmem:[%s4287 + $0x9c] sm:$0xf]
      %v4626 = vld [vmem:[%s4287 + $0xa0] sm:$0xf]
      %v4627 = vld [vmem:[%s4287 + $0xa4] sm:$0x1]
      %v4628 = vld [vmem:[%s4287 + $0xa8] sm:$0xf]
      %v4629 = vld [vmem:[%s4287 + $0xac] sm:$0xf]
      %v4630 = vld [vmem:[%s4287 + $0xb0] sm:$0x1]
      %v4631 = vld [vmem:[%s4287 + $0xb4] sm:$0xf]
      %v4632 = vld [vmem:[%s4287 + $0xb8] sm:$0xf]
      %v4633 = vld [vmem:[%s4287 + $0xbc] sm:$0x1]
      %v4635 = vshrl.u32 %v4586, 16
      %v4637 = vrot.slane %v4635, 4
      %v4638 = vshll.u32 %v4586, 16
      %v4640 = vrot.slane %v4638, 5
      %v4641 = vor.u32 %v4637, %v4640
      %v4642 = vrot.slane %v4641, 4
      %v4644 = vshll.u32 %v4587, 16
      %v4646 = vrot.slane %v4644, 5
      %v4647 = vsel %vm1699, %v4642, %v4646
      %v4648 = vshrl.u32 %v4587, 16
      %v4650 = vrot.slane %v4648, 4
      %v4651 = vor.u32 %v4650, %v4646
      %v4652 = vrot.slane %v4651, 4
      %v4654 = vshll.u32 %v4588, 16
      %v4656 = vrot.slane %v4654, 5
      %v4657 = vsel %vm1699, %v4652, %v4656
      %v4659 = vshrl.u32 %v4589, 16
      %v4661 = vrot.slane %v4659, 4
      %v4662 = vshll.u32 %v4589, 16
      %v4664 = vrot.slane %v4662, 5
      %v4665 = vor.u32 %v4661, %v4664
      %v4666 = vrot.slane %v4665, 4
      %v4668 = vshll.u32 %v4590, 16
      %v4670 = vrot.slane %v4668, 5
      %v4671 = vsel %vm1699, %v4666, %v4670
      %v4672 = vshrl.u32 %v4590, 16
      %v4674 = vrot.slane %v4672, 4
      %v4675 = vor.u32 %v4674, %v4670
      %v4676 = vrot.slane %v4675, 4
      %v4678 = vshll.u32 %v4591, 16
      %v4680 = vrot.slane %v4678, 5
      %v4681 = vsel %vm1699, %v4676, %v4680
      %v4683 = vshrl.u32 %v4592, 16
      %v4685 = vrot.slane %v4683, 4
      %v4686 = vshll.u32 %v4592, 16
      %v4688 = vrot.slane %v4686, 5
      %v4689 = vor.u32 %v4685, %v4688
      %v4690 = vrot.slane %v4689, 4
      %v4692 = vshll.u32 %v4593, 16
      %v4694 = vrot.slane %v4692, 5
      %v4695 = vsel %vm1699, %v4690, %v4694
      %v4696 = vshrl.u32 %v4593, 16
      %v4698 = vrot.slane %v4696, 4
      %v4699 = vor.u32 %v4698, %v4694
      %v4700 = vrot.slane %v4699, 4
      %v4702 = vshll.u32 %v4594, 16
      %v4704 = vrot.slane %v4702, 5
      %v4705 = vsel %vm1699, %v4700, %v4704
      %v4707 = vshrl.u32 %v4595, 16
      %v4709 = vrot.slane %v4707, 4
      %v4710 = vshll.u32 %v4595, 16
      %v4712 = vrot.slane %v4710, 5
      %v4713 = vor.u32 %v4709, %v4712
      %v4714 = vrot.slane %v4713, 4
      %v4716 = vshll.u32 %v4596, 16
      %v4718 = vrot.slane %v4716, 5
      %v4719 = vsel %vm1699, %v4714, %v4718
      %v4720 = vshrl.u32 %v4596, 16
      %v4722 = vrot.slane %v4720, 4
      %v4723 = vor.u32 %v4722, %v4718
      %v4724 = vrot.slane %v4723, 4
      %v4726 = vshll.u32 %v4597, 16
      %v4728 = vrot.slane %v4726, 5
      %v4729 = vsel %vm1699, %v4724, %v4728
      %v4731 = vshrl.u32 %v4598, 16
      %v4733 = vrot.slane %v4731, 4
      %v4734 = vshll.u32 %v4598, 16
      %v4736 = vrot.slane %v4734, 5
      %v4737 = vor.u32 %v4733, %v4736
      %v4738 = vrot.slane %v4737, 4
      %v4740 = vshll.u32 %v4599, 16
      %v4742 = vrot.slane %v4740, 5
      %v4743 = vsel %vm1699, %v4738, %v4742
      %v4744 = vshrl.u32 %v4599, 16
      %v4746 = vrot.slane %v4744, 4
      %v4747 = vor.u32 %v4746, %v4742
      %v4748 = vrot.slane %v4747, 4
      %v4750 = vshll.u32 %v4600, 16
      %v4752 = vrot.slane %v4750, 5
      %v4753 = vsel %vm1699, %v4748, %v4752
      %v4755 = vshrl.u32 %v4601, 16
      %v4757 = vrot.slane %v4755, 4
      %v4758 = vshll.u32 %v4601, 16
      %v4760 = vrot.slane %v4758, 5
      %v4761 = vor.u32 %v4757, %v4760
      %v4762 = vrot.slane %v4761, 4
      %v4764 = vshll.u32 %v4602, 16
      %v4766 = vrot.slane %v4764, 5
      %v4767 = vsel %vm1699, %v4762, %v4766
      %v4768 = vshrl.u32 %v4602, 16
      %v4770 = vrot.slane %v4768, 4
      %v4771 = vor.u32 %v4770, %v4766
      %v4772 = vrot.slane %v4771, 4
      %v4774 = vshll.u32 %v4603, 16
      %v4776 = vrot.slane %v4774, 5
      %v4777 = vsel %vm1699, %v4772, %v4776
      %v4779 = vshrl.u32 %v4604, 16
      %v4781 = vrot.slane %v4779, 4
      %v4782 = vshll.u32 %v4604, 16
      %v4784 = vrot.slane %v4782, 5
      %v4785 = vor.u32 %v4781, %v4784
      %v4786 = vrot.slane %v4785, 4
      %v4788 = vshll.u32 %v4605, 16
      %v4790 = vrot.slane %v4788, 5
      %v4791 = vsel %vm1699, %v4786, %v4790
      %v4792 = vshrl.u32 %v4605, 16
      %v4794 = vrot.slane %v4792, 4
      %v4795 = vor.u32 %v4794, %v4790
      %v4796 = vrot.slane %v4795, 4
      %v4798 = vshll.u32 %v4606, 16
      %v4800 = vrot.slane %v4798, 5
      %v4801 = vsel %vm1699, %v4796, %v4800
      %v4803 = vshrl.u32 %v4607, 16
      %v4805 = vrot.slane %v4803, 4
      %v4806 = vshll.u32 %v4607, 16
      %v4808 = vrot.slane %v4806, 5
      %v4809 = vor.u32 %v4805, %v4808
      %v4810 = vrot.slane %v4809, 4
      %v4812 = vshll.u32 %v4608, 16
      %v4814 = vrot.slane %v4812, 5
      %v4815 = vsel %vm1699, %v4810, %v4814
      %v4816 = vshrl.u32 %v4608, 16
      %v4818 = vrot.slane %v4816, 4
      %v4819 = vor.u32 %v4818, %v4814
      %v4820 = vrot.slane %v4819, 4
      %v4822 = vshll.u32 %v4609, 16
      %v4824 = vrot.slane %v4822, 5
      %v4825 = vsel %vm1699, %v4820, %v4824
      %v4827 = vshrl.u32 %v4610, 16
      %v4829 = vrot.slane %v4827, 4
      %v4830 = vshll.u32 %v4610, 16
      %v4832 = vrot.slane %v4830, 5
      %v4833 = vor.u32 %v4829, %v4832
      %v4834 = vrot.slane %v4833, 4
      %v4836 = vshll.u32 %v4611, 16
      %v4838 = vrot.slane %v4836, 5
      %v4839 = vsel %vm1699, %v4834, %v4838
      %v4840 = vshrl.u32 %v4611, 16
      %v4842 = vrot.slane %v4840, 4
      %v4843 = vor.u32 %v4842, %v4838
      %v4844 = vrot.slane %v4843, 4
      %v4846 = vshll.u32 %v4612, 16
      %v4848 = vrot.slane %v4846, 5
      %v4849 = vsel %vm1699, %v4844, %v4848
      %v4851 = vshrl.u32 %v4613, 16
      %v4853 = vrot.slane %v4851, 4
      %v4854 = vshll.u32 %v4613, 16
      %v4856 = vrot.slane %v4854, 5
      %v4857 = vor.u32 %v4853, %v4856
      %v4858 = vrot.slane %v4857, 4
      %v4860 = vshll.u32 %v4614, 16
      %v4862 = vrot.slane %v4860, 5
      %v4863 = vsel %vm1699, %v4858, %v4862
      %v4864 = vshrl.u32 %v4614, 16
      %v4866 = vrot.slane %v4864, 4
      %v4867 = vor.u32 %v4866, %v4862
      %v4868 = vrot.slane %v4867, 4
      %v4870 = vshll.u32 %v4615, 16
      %v4872 = vrot.slane %v4870, 5
      %v4873 = vsel %vm1699, %v4868, %v4872
      %v4875 = vshrl.u32 %v4616, 16
      %v4877 = vrot.slane %v4875, 4
      %v4878 = vshll.u32 %v4616, 16
      %v4880 = vrot.slane %v4878, 5
      %v4881 = vor.u32 %v4877, %v4880
      %v4882 = vrot.slane %v4881, 4
      %v4884 = vshll.u32 %v4617, 16
      %v4886 = vrot.slane %v4884, 5
      %v4887 = vsel %vm1699, %v4882, %v4886
      %v4888 = vshrl.u32 %v4617, 16
      %v4890 = vrot.slane %v4888, 4
      %v4891 = vor.u32 %v4890, %v4886
      %v4892 = vrot.slane %v4891, 4
      %v4894 = vshll.u32 %v4618, 16
      %v4896 = vrot.slane %v4894, 5
      %v4897 = vsel %vm1699, %v4892, %v4896
      %v4899 = vshrl.u32 %v4619, 16
      %v4901 = vrot.slane %v4899, 4
      %v4902 = vshll.u32 %v4619, 16
      %v4904 = vrot.slane %v4902, 5
      %v4905 = vor.u32 %v4901, %v4904
      %v4906 = vrot.slane %v4905, 4
      %v4908 = vshll.u32 %v4620, 16
      %v4910 = vrot.slane %v4908, 5
      %v4911 = vsel %vm1699, %v4906, %v4910
      %v4912 = vshrl.u32 %v4620, 16
      %v4914 = vrot.slane %v4912, 4
      %v4915 = vor.u32 %v4914, %v4910
      %v4916 = vrot.slane %v4915, 4
      %v4918 = vshll.u32 %v4621, 16
      %v4920 = vrot.slane %v4918, 5
      %v4921 = vsel %vm1699, %v4916, %v4920
      %v4923 = vshrl.u32 %v4622, 16
      %v4925 = vrot.slane %v4923, 4
      %v4926 = vshll.u32 %v4622, 16
      %v4928 = vrot.slane %v4926, 5
      %v4929 = vor.u32 %v4925, %v4928
      %v4930 = vrot.slane %v4929, 4
      %v4932 = vshll.u32 %v4623, 16
      %v4934 = vrot.slane %v4932, 5
      %v4935 = vsel %vm1699, %v4930, %v4934
      %v4936 = vshrl.u32 %v4623, 16
      %v4938 = vrot.slane %v4936, 4
      %v4939 = vor.u32 %v4938, %v4934
      %v4940 = vrot.slane %v4939, 4
      %v4942 = vshll.u32 %v4624, 16
      %v4944 = vrot.slane %v4942, 5
      %v4945 = vsel %vm1699, %v4940, %v4944
      %v4947 = vshrl.u32 %v4625, 16
      %v4949 = vrot.slane %v4947, 4
      %v4950 = vshll.u32 %v4625, 16
      %v4952 = vrot.slane %v4950, 5
      %v4953 = vor.u32 %v4949, %v4952
      %v4954 = vrot.slane %v4953, 4
      %v4956 = vshll.u32 %v4626, 16
      %v4958 = vrot.slane %v4956, 5
      %v4959 = vsel %vm1699, %v4954, %v4958
      %v4960 = vshrl.u32 %v4626, 16
      %v4962 = vrot.slane %v4960, 4
      %v4963 = vor.u32 %v4962, %v4958
      %v4964 = vrot.slane %v4963, 4
      %v4966 = vshll.u32 %v4627, 16
      %v4968 = vrot.slane %v4966, 5
      %v4969 = vsel %vm1699, %v4964, %v4968
      %v4971 = vshrl.u32 %v4628, 16
      %v4973 = vrot.slane %v4971, 4
      %v4974 = vshll.u32 %v4628, 16
      %v4976 = vrot.slane %v4974, 5
      %v4977 = vor.u32 %v4973, %v4976
      %v4978 = vrot.slane %v4977, 4
      %v4980 = vshll.u32 %v4629, 16
      %v4982 = vrot.slane %v4980, 5
      %v4983 = vsel %vm1699, %v4978, %v4982
      %v4984 = vshrl.u32 %v4629, 16
      %v4986 = vrot.slane %v4984, 4
      %v4987 = vor.u32 %v4986, %v4982
      %v4988 = vrot.slane %v4987, 4
      %v4990 = vshll.u32 %v4630, 16
      %v4992 = vrot.slane %v4990, 5
      %v4993 = vsel %vm1699, %v4988, %v4992
      %v4995 = vshrl.u32 %v4631, 16
      %v4997 = vrot.slane %v4995, 4
      %v4998 = vshll.u32 %v4631, 16
      %v5000 = vrot.slane %v4998, 5
      %v5001 = vor.u32 %v4997, %v5000
      %v5002 = vrot.slane %v5001, 4
      %v5004 = vshll.u32 %v4632, 16
      %v5006 = vrot.slane %v5004, 5
      %v5007 = vsel %vm1699, %v5002, %v5006
      %v5008 = vshrl.u32 %v4632, 16
      %v5010 = vrot.slane %v5008, 4
      %v5011 = vor.u32 %v5010, %v5006
      %v5012 = vrot.slane %v5011, 4
      %v5014 = vshll.u32 %v4633, 16
      %v5016 = vrot.slane %v5014, 5
      %v5017 = vsel %vm1699, %v5012, %v5016
      %s5018 = scalar_lea.vmem %s8, 112
      %v5019 = vld [vmem:[%s5018] sm:$0xf]
      %v5020 = vld [vmem:[%s5018 + $0x4] sm:$0xf]
      %v5021 = vld [vmem:[%s5018 + $0x8] sm:$0xf]
      %v5022 = vld [vmem:[%s5018 + $0xc] sm:$0xf]
      %v5023 = vunpack.c.l.b16 %v4647
      %v5024 = vunpack.c.l.b16 %v4657
      %v5025 = vunpack.c.l.b16 %v4671
      %v5026 = vunpack.c.l.b16 %v4681
      %v5027 = vunpack.c.l.b16 %v4695
      %v5028 = vunpack.c.l.b16 %v4705
      %v5029 = vunpack.c.l.b16 %v4719
      %v5030 = vunpack.c.l.b16 %v4729
      %v5031 = vunpack.c.l.b16 %v4743
      %v5032 = vunpack.c.l.b16 %v4753
      %v5033 = vunpack.c.l.b16 %v4767
      %v5034 = vunpack.c.l.b16 %v4777
      %v5035 = vunpack.c.l.b16 %v4791
      %v5036 = vunpack.c.l.b16 %v4801
      %v5037 = vunpack.c.l.b16 %v4815
      %v5038 = vunpack.c.l.b16 %v4825
      %v5039 = vunpack.c.l.b16 %v4839
      %v5040 = vunpack.c.l.b16 %v4849
      %v5041 = vunpack.c.l.b16 %v4863
      %v5042 = vunpack.c.l.b16 %v4873
      %v5043 = vunpack.c.l.b16 %v4887
      %v5044 = vunpack.c.l.b16 %v4897
      %v5045 = vunpack.c.l.b16 %v4911
      %v5046 = vunpack.c.l.b16 %v4921
      %v5047 = vunpack.c.l.b16 %v4935
      %v5048 = vunpack.c.l.b16 %v4945
      %v5049 = vunpack.c.l.b16 %v4959
      %v5050 = vunpack.c.l.b16 %v4969
      %v5051 = vunpack.c.l.b16 %v4983
      %v5052 = vunpack.c.l.b16 %v4993
      %v5053 = vunpack.c.l.b16 %v5007
      %v5054 = vunpack.c.l.b16 %v5017
      %v5055 = vpack.c.b16 %v5024, %v5023
      %v5056 = vpack.c.b16 %v5026, %v5025
      %v5057 = vpack.c.b16 %v5028, %v5027
      %v5058 = vpack.c.b16 %v5030, %v5029
      %v5059 = vpack.c.b16 %v5032, %v5031
      %v5060 = vpack.c.b16 %v5034, %v5033
      %v5061 = vpack.c.b16 %v5036, %v5035
      %v5062 = vpack.c.b16 %v5038, %v5037
      %v5063 = vpack.c.b16 %v5040, %v5039
      %v5064 = vpack.c.b16 %v5042, %v5041
      %v5065 = vpack.c.b16 %v5044, %v5043
      %v5066 = vpack.c.b16 %v5046, %v5045
      %v5067 = vpack.c.b16 %v5048, %v5047
      %v5068 = vpack.c.b16 %v5050, %v5049
      %v5069 = vpack.c.b16 %v5052, %v5051
      %v5070 = vpack.c.b16 %v5054, %v5053
      %v5075 = vunpack.c.l.b16 %v5019
      %v5076 = vunpack.c.l.b16 %v5020
      %v5077 = vunpack.c.l.b16 %v5021
      %v5078 = vunpack.c.l.b16 %v5022
      %v5079 = vpack.c.b16 %v5076, %v5075
      %v5080 = vpack.c.b16 %v5078, %v5077
      %v5084 = vsel %vm2149, %v5055, 0
      %v5087 = vsel %vm2149, %v5056, 0
      %v5090 = vsel %vm2149, %v5057, 0
      %v5093 = vsel %vm2149, %v5058, 0
      %v5096 = vsel %vm2149, %v5059, 0
      %v5099 = vsel %vm2149, %v5060, 0
      %v5102 = vsel %vm2149, %v5061, 0
      %v5105 = vsel %vm2149, %v5062, 0
      %v5108 = vsel %vm2149, %v5063, 0
      %v5111 = vsel %vm2149, %v5064, 0
      %v5114 = vsel %vm2149, %v5065, 0
      %v5117 = vsel %vm2149, %v5066, 0
      %v5120 = vsel %vm2149, %v5067, 0
      %v5123 = vsel %vm2149, %v5068, 0
      %v5126 = vsel %vm2149, %v5069, 0
      %v5129 = vsel %vm2149, %v5070, 0
      %5131 = vmatpush.bf16.msra.mxu0 0
      %5132 = vmatpush.bf16.msra.mxu0 0
      %5133 = vmatpush.bf16.msra.mxu0 0
      %5134 = vmatpush.bf16.msra.mxu0 0
      %5135 = vmatpush.bf16.msra.mxu0 0
      %5136 = vmatpush.bf16.msra.mxu0 0
      %5137 = vmatpush.bf16.msra.mxu0 %v5080
      %5138 = vmatpush.bf16.msra.mxu0 %v5079
      %5139 = vmatmul.bf16.gmra.mxu0 %v5084
      %v5140 = vpop.f32.mrf.mxu0
      %v5141 = vadd.f32 0.0, %v5140
      %v5142 = vpop.f32.mrf.mxu0
      %v5143 = vadd.f32 0.0, %v5142
      %5144 = vmatmul.bf16.gmra.mxu0 %v5087
      %v5145 = vpop.f32.mrf.mxu0
      %v5146 = vadd.f32 0.0, %v5145
      %v5147 = vpop.f32.mrf.mxu0
      %v5148 = vadd.f32 0.0, %v5147
      %5149 = vmatmul.bf16.gmra.mxu0 %v5090
      %v5150 = vpop.f32.mrf.mxu0
      %v5151 = vadd.f32 0.0, %v5150
      %v5152 = vpop.f32.mrf.mxu0
      %v5153 = vadd.f32 0.0, %v5152
      %5154 = vmatmul.bf16.gmra.mxu0 %v5093
      %v5155 = vpop.f32.mrf.mxu0
      %v5156 = vadd.f32 0.0, %v5155
      %v5157 = vpop.f32.mrf.mxu0
      %v5158 = vadd.f32 0.0, %v5157
      %5159 = vmatmul.bf16.gmra.mxu0 %v5096
      %v5160 = vpop.f32.mrf.mxu0
      %v5161 = vadd.f32 0.0, %v5160
      %v5162 = vpop.f32.mrf.mxu0
      %v5163 = vadd.f32 0.0, %v5162
      %5164 = vmatmul.bf16.gmra.mxu0 %v5099
      %v5165 = vpop.f32.mrf.mxu0
      %v5166 = vadd.f32 0.0, %v5165
      %v5167 = vpop.f32.mrf.mxu0
      %v5168 = vadd.f32 0.0, %v5167
      %5169 = vmatmul.bf16.gmra.mxu0 %v5102
      %v5170 = vpop.f32.mrf.mxu0
      %v5171 = vadd.f32 0.0, %v5170
      %v5172 = vpop.f32.mrf.mxu0
      %v5173 = vadd.f32 0.0, %v5172
      %5174 = vmatmul.bf16.gmra.mxu0 %v5105
      %v5175 = vpop.f32.mrf.mxu0
      %v5176 = vadd.f32 0.0, %v5175
      %v5177 = vpop.f32.mrf.mxu0
      %v5178 = vadd.f32 0.0, %v5177
      %5179 = vmatmul.bf16.gmra.mxu0 %v5108
      %v5180 = vpop.f32.mrf.mxu0
      %v5181 = vadd.f32 0.0, %v5180
      %v5182 = vpop.f32.mrf.mxu0
      %v5183 = vadd.f32 0.0, %v5182
      %5184 = vmatmul.bf16.gmra.mxu0 %v5111
      %v5185 = vpop.f32.mrf.mxu0
      %v5186 = vadd.f32 0.0, %v5185
      %v5187 = vpop.f32.mrf.mxu0
      %v5188 = vadd.f32 0.0, %v5187
      %5189 = vmatmul.bf16.gmra.mxu0 %v5114
      %v5190 = vpop.f32.mrf.mxu0
      %v5191 = vadd.f32 0.0, %v5190
      %v5192 = vpop.f32.mrf.mxu0
      %v5193 = vadd.f32 0.0, %v5192
      %5194 = vmatmul.bf16.gmra.mxu0 %v5117
      %v5195 = vpop.f32.mrf.mxu0
      %v5196 = vadd.f32 0.0, %v5195
      %v5197 = vpop.f32.mrf.mxu0
      %v5198 = vadd.f32 0.0, %v5197
      %5199 = vmatmul.bf16.gmra.mxu0 %v5120
      %v5200 = vpop.f32.mrf.mxu0
      %v5201 = vadd.f32 0.0, %v5200
      %v5202 = vpop.f32.mrf.mxu0
      %v5203 = vadd.f32 0.0, %v5202
      %5204 = vmatmul.bf16.gmra.mxu0 %v5123
      %v5205 = vpop.f32.mrf.mxu0
      %v5206 = vadd.f32 0.0, %v5205
      %v5207 = vpop.f32.mrf.mxu0
      %v5208 = vadd.f32 0.0, %v5207
      %5209 = vmatmul.bf16.gmra.mxu0 %v5126
      %v5210 = vpop.f32.mrf.mxu0
      %v5211 = vadd.f32 0.0, %v5210
      %v5212 = vpop.f32.mrf.mxu0
      %v5213 = vadd.f32 0.0, %v5212
      %5214 = vmatmul.bf16.gmra.mxu0 %v5129
      %v5215 = vpop.f32.mrf.mxu0
      %v5216 = vadd.f32 0.0, %v5215
      %v5217 = vpop.f32.mrf.mxu0
      %v5218 = vadd.f32 0.0, %v5217
      %5219 = vdwg.mxu0
      %v5220 = vadd.f32 %v4554, %v5141
      %v5221 = vadd.f32 %v4555, %v5143
      %v5222 = vadd.f32 %v4556, %v5146
      %v5223 = vadd.f32 %v4557, %v5148
      %v5224 = vadd.f32 %v4558, %v5151
      %v5225 = vadd.f32 %v4559, %v5153
      %v5226 = vadd.f32 %v4560, %v5156
      %v5227 = vadd.f32 %v4561, %v5158
      %v5228 = vadd.f32 %v4562, %v5161
      %v5229 = vadd.f32 %v4563, %v5163
      %v5230 = vadd.f32 %v4564, %v5166
      %v5231 = vadd.f32 %v4565, %v5168
      %v5232 = vadd.f32 %v4566, %v5171
      %v5233 = vadd.f32 %v4567, %v5173
      %v5234 = vadd.f32 %v4568, %v5176
      %v5235 = vadd.f32 %v4569, %v5178
      %v5236 = vadd.f32 %v4570, %v5181
      %v5237 = vadd.f32 %v4571, %v5183
      %v5238 = vadd.f32 %v4572, %v5186
      %v5239 = vadd.f32 %v4573, %v5188
      %v5240 = vadd.f32 %v4574, %v5191
      %v5241 = vadd.f32 %v4575, %v5193
      %v5242 = vadd.f32 %v4576, %v5196
      %v5243 = vadd.f32 %v4577, %v5198
      %v5244 = vadd.f32 %v4578, %v5201
      %v5245 = vadd.f32 %v4579, %v5203
      %v5246 = vadd.f32 %v4580, %v5206
      %v5247 = vadd.f32 %v4581, %v5208
      %v5248 = vadd.f32 %v4582, %v5211
      %v5249 = vadd.f32 %v4583, %v5213
      %v5250 = vadd.f32 %v4584, %v5216
      %v5251 = vadd.f32 %v4585, %v5218
      %v5252 = vld [vmem:[%s4287] sm:$0xe]
      %v5253 = vld [vmem:[%s4287 + $0xc] sm:$0xe]
      %v5254 = vld [vmem:[%s4287 + $0x18] sm:$0xe]
      %v5255 = vld [vmem:[%s4287 + $0x24] sm:$0xe]
      %v5256 = vld [vmem:[%s4287 + $0x30] sm:$0xe]
      %v5257 = vld [vmem:[%s4287 + $0x3c] sm:$0xe]
      %v5258 = vld [vmem:[%s4287 + $0x48] sm:$0xe]
      %v5259 = vld [vmem:[%s4287 + $0x54] sm:$0xe]
      %v5260 = vld [vmem:[%s4287 + $0x60] sm:$0xe]
      %v5261 = vld [vmem:[%s4287 + $0x6c] sm:$0xe]
      %v5262 = vld [vmem:[%s4287 + $0x78] sm:$0xe]
      %v5263 = vld [vmem:[%s4287 + $0x84] sm:$0xe]
      %v5264 = vld [vmem:[%s4287 + $0x90] sm:$0xe]
      %v5265 = vld [vmem:[%s4287 + $0x9c] sm:$0xe]
      %v5266 = vld [vmem:[%s4287 + $0xa8] sm:$0xe]
      %v5267 = vld [vmem:[%s4287 + $0xb4] sm:$0xe]
      %v5316 = vrot.slane %v5252, 5
      %v5317 = vrot.slane %v5316, 4
      %v5318 = vrot.slane %v4587, 5
      %v5319 = vsel %vm2566, %v5317, %v5318
      %v5320 = vrot.slane %v5318, 4
      %v5321 = vrot.slane %v4588, 5
      %v5322 = vsel %vm2566, %v5320, %v5321
      %v5323 = vrot.slane %v5253, 5
      %v5324 = vrot.slane %v5323, 4
      %v5325 = vrot.slane %v4590, 5
      %v5326 = vsel %vm2566, %v5324, %v5325
      %v5327 = vrot.slane %v5325, 4
      %v5328 = vrot.slane %v4591, 5
      %v5329 = vsel %vm2566, %v5327, %v5328
      %v5330 = vrot.slane %v5254, 5
      %v5331 = vrot.slane %v5330, 4
      %v5332 = vrot.slane %v4593, 5
      %v5333 = vsel %vm2566, %v5331, %v5332
      %v5334 = vrot.slane %v5332, 4
      %v5335 = vrot.slane %v4594, 5
      %v5336 = vsel %vm2566, %v5334, %v5335
      %v5337 = vrot.slane %v5255, 5
      %v5338 = vrot.slane %v5337, 4
      %v5339 = vrot.slane %v4596, 5
      %v5340 = vsel %vm2566, %v5338, %v5339
      %v5341 = vrot.slane %v5339, 4
      %v5342 = vrot.slane %v4597, 5
      %v5343 = vsel %vm2566, %v5341, %v5342
      %v5344 = vrot.slane %v5256, 5
      %v5345 = vrot.slane %v5344, 4
      %v5346 = vrot.slane %v4599, 5
      %v5347 = vsel %vm2566, %v5345, %v5346
      %v5348 = vrot.slane %v5346, 4
      %v5349 = vrot.slane %v4600, 5
      %v5350 = vsel %vm2566, %v5348, %v5349
      %v5351 = vrot.slane %v5257, 5
      %v5352 = vrot.slane %v5351, 4
      %v5353 = vrot.slane %v4602, 5
      %v5354 = vsel %vm2566, %v5352, %v5353
      %v5355 = vrot.slane %v5353, 4
      %v5356 = vrot.slane %v4603, 5
      %v5357 = vsel %vm2566, %v5355, %v5356
      %v5358 = vrot.slane %v5258, 5
      %v5359 = vrot.slane %v5358, 4
      %v5360 = vrot.slane %v4605, 5
      %v5361 = vsel %vm2566, %v5359, %v5360
      %v5362 = vrot.slane %v5360, 4
      %v5363 = vrot.slane %v4606, 5
      %v5364 = vsel %vm2566, %v5362, %v5363
      %v5365 = vrot.slane %v5259, 5
      %v5366 = vrot.slane %v5365, 4
      %v5367 = vrot.slane %v4608, 5
      %v5368 = vsel %vm2566, %v5366, %v5367
      %v5369 = vrot.slane %v5367, 4
      %v5370 = vrot.slane %v4609, 5
      %v5371 = vsel %vm2566, %v5369, %v5370
      %v5372 = vrot.slane %v5260, 5
      %v5373 = vrot.slane %v5372, 4
      %v5374 = vrot.slane %v4611, 5
      %v5375 = vsel %vm2566, %v5373, %v5374
      %v5376 = vrot.slane %v5374, 4
      %v5377 = vrot.slane %v4612, 5
      %v5378 = vsel %vm2566, %v5376, %v5377
      %v5379 = vrot.slane %v5261, 5
      %v5380 = vrot.slane %v5379, 4
      %v5381 = vrot.slane %v4614, 5
      %v5382 = vsel %vm2566, %v5380, %v5381
      %v5383 = vrot.slane %v5381, 4
      %v5384 = vrot.slane %v4615, 5
      %v5385 = vsel %vm2566, %v5383, %v5384
      %v5386 = vrot.slane %v5262, 5
      %v5387 = vrot.slane %v5386, 4
      %v5388 = vrot.slane %v4617, 5
      %v5389 = vsel %vm2566, %v5387, %v5388
      %v5390 = vrot.slane %v5388, 4
      %v5391 = vrot.slane %v4618, 5
      %v5392 = vsel %vm2566, %v5390, %v5391
      %v5393 = vrot.slane %v5263, 5
      %v5394 = vrot.slane %v5393, 4
      %v5395 = vrot.slane %v4620, 5
      %v5396 = vsel %vm2566, %v5394, %v5395
      %v5397 = vrot.slane %v5395, 4
      %v5398 = vrot.slane %v4621, 5
      %v5399 = vsel %vm2566, %v5397, %v5398
      %v5400 = vrot.slane %v5264, 5
      %v5401 = vrot.slane %v5400, 4
      %v5402 = vrot.slane %v4623, 5
      %v5403 = vsel %vm2566, %v5401, %v5402
      %v5404 = vrot.slane %v5402, 4
      %v5405 = vrot.slane %v4624, 5
      %v5406 = vsel %vm2566, %v5404, %v5405
      %v5407 = vrot.slane %v5265, 5
      %v5408 = vrot.slane %v5407, 4
      %v5409 = vrot.slane %v4626, 5
      %v5410 = vsel %vm2566, %v5408, %v5409
      %v5411 = vrot.slane %v5409, 4
      %v5412 = vrot.slane %v4627, 5
      %v5413 = vsel %vm2566, %v5411, %v5412
      %v5414 = vrot.slane %v5266, 5
      %v5415 = vrot.slane %v5414, 4
      %v5416 = vrot.slane %v4629, 5
      %v5417 = vsel %vm2566, %v5415, %v5416
      %v5418 = vrot.slane %v5416, 4
      %v5419 = vrot.slane %v4630, 5
      %v5420 = vsel %vm2566, %v5418, %v5419
      %v5421 = vrot.slane %v5267, 5
      %v5422 = vrot.slane %v5421, 4
      %v5423 = vrot.slane %v4632, 5
      %v5424 = vsel %vm2566, %v5422, %v5423
      %v5425 = vrot.slane %v5423, 4
      %v5426 = vrot.slane %v4633, 5
      %v5427 = vsel %vm2566, %v5425, %v5426
      %s5428 = scalar_lea.vmem %s8, 128
      %v5429 = vld [vmem:[%s5428] sm:$0xf]
      %v5430 = vld [vmem:[%s5428 + $0x4] sm:$0xf]
      %v5431 = vld [vmem:[%s5428 + $0x8] sm:$0xf]
      %v5432 = vld [vmem:[%s5428 + $0xc] sm:$0xf]
      %v5433 = vunpack.c.l.b16 %v5319
      %v5434 = vunpack.c.l.b16 %v5322
      %v5435 = vunpack.c.l.b16 %v5326
      %v5436 = vunpack.c.l.b16 %v5329
      %v5437 = vunpack.c.l.b16 %v5333
      %v5438 = vunpack.c.l.b16 %v5336
      %v5439 = vunpack.c.l.b16 %v5340
      %v5440 = vunpack.c.l.b16 %v5343
      %v5441 = vunpack.c.l.b16 %v5347
      %v5442 = vunpack.c.l.b16 %v5350
      %v5443 = vunpack.c.l.b16 %v5354
      %v5444 = vunpack.c.l.b16 %v5357
      %v5445 = vunpack.c.l.b16 %v5361
      %v5446 = vunpack.c.l.b16 %v5364
      %v5447 = vunpack.c.l.b16 %v5368
      %v5448 = vunpack.c.l.b16 %v5371
      %v5449 = vunpack.c.l.b16 %v5375
      %v5450 = vunpack.c.l.b16 %v5378
      %v5451 = vunpack.c.l.b16 %v5382
      %v5452 = vunpack.c.l.b16 %v5385
      %v5453 = vunpack.c.l.b16 %v5389
      %v5454 = vunpack.c.l.b16 %v5392
      %v5455 = vunpack.c.l.b16 %v5396
      %v5456 = vunpack.c.l.b16 %v5399
      %v5457 = vunpack.c.l.b16 %v5403
      %v5458 = vunpack.c.l.b16 %v5406
      %v5459 = vunpack.c.l.b16 %v5410
      %v5460 = vunpack.c.l.b16 %v5413
      %v5461 = vunpack.c.l.b16 %v5417
      %v5462 = vunpack.c.l.b16 %v5420
      %v5463 = vunpack.c.l.b16 %v5424
      %v5464 = vunpack.c.l.b16 %v5427
      %v5465 = vpack.c.b16 %v5434, %v5433
      %v5466 = vpack.c.b16 %v5436, %v5435
      %v5467 = vpack.c.b16 %v5438, %v5437
      %v5468 = vpack.c.b16 %v5440, %v5439
      %v5469 = vpack.c.b16 %v5442, %v5441
      %v5470 = vpack.c.b16 %v5444, %v5443
      %v5471 = vpack.c.b16 %v5446, %v5445
      %v5472 = vpack.c.b16 %v5448, %v5447
      %v5473 = vpack.c.b16 %v5450, %v5449
      %v5474 = vpack.c.b16 %v5452, %v5451
      %v5475 = vpack.c.b16 %v5454, %v5453
      %v5476 = vpack.c.b16 %v5456, %v5455
      %v5477 = vpack.c.b16 %v5458, %v5457
      %v5478 = vpack.c.b16 %v5460, %v5459
      %v5479 = vpack.c.b16 %v5462, %v5461
      %v5480 = vpack.c.b16 %v5464, %v5463
      %v5485 = vunpack.c.l.b16 %v5429
      %v5486 = vunpack.c.l.b16 %v5430
      %v5487 = vunpack.c.l.b16 %v5431
      %v5488 = vunpack.c.l.b16 %v5432
      %v5489 = vpack.c.b16 %v5486, %v5485
      %v5490 = vpack.c.b16 %v5488, %v5487
      %v5494 = vsel %vm2149, %v5465, 0
      %v5497 = vsel %vm2149, %v5466, 0
      %v5500 = vsel %vm2149, %v5467, 0
      %v5503 = vsel %vm2149, %v5468, 0
      %v5506 = vsel %vm2149, %v5469, 0
      %v5509 = vsel %vm2149, %v5470, 0
      %v5512 = vsel %vm2149, %v5471, 0
      %v5515 = vsel %vm2149, %v5472, 0
      %v5518 = vsel %vm2149, %v5473, 0
      %v5521 = vsel %vm2149, %v5474, 0
      %v5524 = vsel %vm2149, %v5475, 0
      %v5527 = vsel %vm2149, %v5476, 0
      %v5530 = vsel %vm2149, %v5477, 0
      %v5533 = vsel %vm2149, %v5478, 0
      %v5536 = vsel %vm2149, %v5479, 0
      %v5539 = vsel %vm2149, %v5480, 0
      %5541 = vmatpush.bf16.msra.mxu0 0
      %5542 = vmatpush.bf16.msra.mxu0 0
      %5543 = vmatpush.bf16.msra.mxu0 0
      %5544 = vmatpush.bf16.msra.mxu0 0
      %5545 = vmatpush.bf16.msra.mxu0 0
      %5546 = vmatpush.bf16.msra.mxu0 0
      %5547 = vmatpush.bf16.msra.mxu0 %v5490
      %5548 = vmatpush.bf16.msra.mxu0 %v5489
      %5549 = vmatmul.bf16.gmra.mxu0 %v5494
      %v5550 = vpop.f32.mrf.mxu0
      %v5551 = vadd.f32 0.0, %v5550
      %v5552 = vpop.f32.mrf.mxu0
      %v5553 = vadd.f32 0.0, %v5552
      %5554 = vmatmul.bf16.gmra.mxu0 %v5497
      %v5555 = vpop.f32.mrf.mxu0
      %v5556 = vadd.f32 0.0, %v5555
      %v5557 = vpop.f32.mrf.mxu0
      %v5558 = vadd.f32 0.0, %v5557
      %5559 = vmatmul.bf16.gmra.mxu0 %v5500
      %v5560 = vpop.f32.mrf.mxu0
      %v5561 = vadd.f32 0.0, %v5560
      %v5562 = vpop.f32.mrf.mxu0
      %v5563 = vadd.f32 0.0, %v5562
      %5564 = vmatmul.bf16.gmra.mxu0 %v5503
      %v5565 = vpop.f32.mrf.mxu0
      %v5566 = vadd.f32 0.0, %v5565
      %v5567 = vpop.f32.mrf.mxu0
      %v5568 = vadd.f32 0.0, %v5567
      %5569 = vmatmul.bf16.gmra.mxu0 %v5506
      %v5570 = vpop.f32.mrf.mxu0
      %v5571 = vadd.f32 0.0, %v5570
      %v5572 = vpop.f32.mrf.mxu0
      %v5573 = vadd.f32 0.0, %v5572
      %5574 = vmatmul.bf16.gmra.mxu0 %v5509
      %v5575 = vpop.f32.mrf.mxu0
      %v5576 = vadd.f32 0.0, %v5575
      %v5577 = vpop.f32.mrf.mxu0
      %v5578 = vadd.f32 0.0, %v5577
      %5579 = vmatmul.bf16.gmra.mxu0 %v5512
      %v5580 = vpop.f32.mrf.mxu0
      %v5581 = vadd.f32 0.0, %v5580
      %v5582 = vpop.f32.mrf.mxu0
      %v5583 = vadd.f32 0.0, %v5582
      %5584 = vmatmul.bf16.gmra.mxu0 %v5515
      %v5585 = vpop.f32.mrf.mxu0
      %v5586 = vadd.f32 0.0, %v5585
      %v5587 = vpop.f32.mrf.mxu0
      %v5588 = vadd.f32 0.0, %v5587
      %5589 = vmatmul.bf16.gmra.mxu0 %v5518
      %v5590 = vpop.f32.mrf.mxu0
      %v5591 = vadd.f32 0.0, %v5590
      %v5592 = vpop.f32.mrf.mxu0
      %v5593 = vadd.f32 0.0, %v5592
      %5594 = vmatmul.bf16.gmra.mxu0 %v5521
      %v5595 = vpop.f32.mrf.mxu0
      %v5596 = vadd.f32 0.0, %v5595
      %v5597 = vpop.f32.mrf.mxu0
      %v5598 = vadd.f32 0.0, %v5597
      %5599 = vmatmul.bf16.gmra.mxu0 %v5524
      %v5600 = vpop.f32.mrf.mxu0
      %v5601 = vadd.f32 0.0, %v5600
      %v5602 = vpop.f32.mrf.mxu0
      %v5603 = vadd.f32 0.0, %v5602
      %5604 = vmatmul.bf16.gmra.mxu0 %v5527
      %v5605 = vpop.f32.mrf.mxu0
      %v5606 = vadd.f32 0.0, %v5605
      %v5607 = vpop.f32.mrf.mxu0
      %v5608 = vadd.f32 0.0, %v5607
      %5609 = vmatmul.bf16.gmra.mxu0 %v5530
      %v5610 = vpop.f32.mrf.mxu0
      %v5611 = vadd.f32 0.0, %v5610
      %v5612 = vpop.f32.mrf.mxu0
      %v5613 = vadd.f32 0.0, %v5612
      %5614 = vmatmul.bf16.gmra.mxu0 %v5533
      %v5615 = vpop.f32.mrf.mxu0
      %v5616 = vadd.f32 0.0, %v5615
      %v5617 = vpop.f32.mrf.mxu0
      %v5618 = vadd.f32 0.0, %v5617
      %5619 = vmatmul.bf16.gmra.mxu0 %v5536
      %v5620 = vpop.f32.mrf.mxu0
      %v5621 = vadd.f32 0.0, %v5620
      %v5622 = vpop.f32.mrf.mxu0
      %v5623 = vadd.f32 0.0, %v5622
      %5624 = vmatmul.bf16.gmra.mxu0 %v5539
      %v5625 = vpop.f32.mrf.mxu0
      %v5626 = vadd.f32 0.0, %v5625
      %v5627 = vpop.f32.mrf.mxu0
      %v5628 = vadd.f32 0.0, %v5627
      %5629 = vdwg.mxu0
      %v5630 = vadd.f32 %v5220, %v5551
      %v5631 = vadd.f32 %v5221, %v5553
      %v5632 = vadd.f32 %v5222, %v5556
      %v5633 = vadd.f32 %v5223, %v5558
      %v5634 = vadd.f32 %v5224, %v5561
      %v5635 = vadd.f32 %v5225, %v5563
      %v5636 = vadd.f32 %v5226, %v5566
      %v5637 = vadd.f32 %v5227, %v5568
      %v5638 = vadd.f32 %v5228, %v5571
      %v5639 = vadd.f32 %v5229, %v5573
      %v5640 = vadd.f32 %v5230, %v5576
      %v5641 = vadd.f32 %v5231, %v5578
      %v5642 = vadd.f32 %v5232, %v5581
      %v5643 = vadd.f32 %v5233, %v5583
      %v5644 = vadd.f32 %v5234, %v5586
      %v5645 = vadd.f32 %v5235, %v5588
      %v5646 = vadd.f32 %v5236, %v5591
      %v5647 = vadd.f32 %v5237, %v5593
      %v5648 = vadd.f32 %v5238, %v5596
      %v5649 = vadd.f32 %v5239, %v5598
      %v5650 = vadd.f32 %v5240, %v5601
      %v5651 = vadd.f32 %v5241, %v5603
      %v5652 = vadd.f32 %v5242, %v5606
      %v5653 = vadd.f32 %v5243, %v5608
      %v5654 = vadd.f32 %v5244, %v5611
      %v5655 = vadd.f32 %v5245, %v5613
      %v5656 = vadd.f32 %v5246, %v5616
      %v5657 = vadd.f32 %v5247, %v5618
      %v5658 = vadd.f32 %v5248, %v5621
      %v5659 = vadd.f32 %v5249, %v5623
      %v5660 = vadd.f32 %v5250, %v5626
      %v5661 = vadd.f32 %v5251, %v5628
      %v5662 = vld [vmem:[%s9] sm:$0x1]
      %v5664 = vperm.slane %v5662, 0
      %v5666 = vadd.f32 %v5630, %v5664
      %v5667 = vadd.f32 %v5631, %v5664
      %v5668 = vadd.f32 %v5632, %v5664
      %v5669 = vadd.f32 %v5633, %v5664
      %v5670 = vadd.f32 %v5634, %v5664
      %v5671 = vadd.f32 %v5635, %v5664
      %v5672 = vadd.f32 %v5636, %v5664
      %v5673 = vadd.f32 %v5637, %v5664
      %v5674 = vadd.f32 %v5638, %v5664
      %v5675 = vadd.f32 %v5639, %v5664
      %v5676 = vadd.f32 %v5640, %v5664
      %v5677 = vadd.f32 %v5641, %v5664
      %v5678 = vadd.f32 %v5642, %v5664
      %v5679 = vadd.f32 %v5643, %v5664
      %v5680 = vadd.f32 %v5644, %v5664
      %v5681 = vadd.f32 %v5645, %v5664
      %v5682 = vadd.f32 %v5646, %v5664
      %v5683 = vadd.f32 %v5647, %v5664
      %v5684 = vadd.f32 %v5648, %v5664
      %v5685 = vadd.f32 %v5649, %v5664
      %v5686 = vadd.f32 %v5650, %v5664
      %v5687 = vadd.f32 %v5651, %v5664
      %v5688 = vadd.f32 %v5652, %v5664
      %v5689 = vadd.f32 %v5653, %v5664
      %v5690 = vadd.f32 %v5654, %v5664
      %v5691 = vadd.f32 %v5655, %v5664
      %v5692 = vadd.f32 %v5656, %v5664
      %v5693 = vadd.f32 %v5657, %v5664
      %v5694 = vadd.f32 %v5658, %v5664
      %v5695 = vadd.f32 %v5659, %v5664
      %v5696 = vadd.f32 %v5660, %v5664
      %v5697 = vadd.f32 %v5661, %v5664
      %5730 = vrot.lane.b32.xlu0 %v5666, 4
      %v5731 = vpop.permute.xlu0 %5730
      %5732 = vrot.lane.b32.xlu0 %v5667, 4
      %v5733 = vpop.permute.xlu0 %5732
      %5734 = vrot.lane.b32.xlu0 %v5668, 4
      %v5735 = vpop.permute.xlu0 %5734
      %5736 = vrot.lane.b32.xlu0 %v5669, 4
      %v5737 = vpop.permute.xlu0 %5736
      %5738 = vrot.lane.b32.xlu0 %v5670, 4
      %v5739 = vpop.permute.xlu0 %5738
      %5740 = vrot.lane.b32.xlu0 %v5671, 4
      %v5741 = vpop.permute.xlu0 %5740
      %5742 = vrot.lane.b32.xlu0 %v5672, 4
      %v5743 = vpop.permute.xlu0 %5742
      %5744 = vrot.lane.b32.xlu0 %v5673, 4
      %v5745 = vpop.permute.xlu0 %5744
      %5746 = vrot.lane.b32.xlu0 %v5674, 4
      %v5747 = vpop.permute.xlu0 %5746
      %5748 = vrot.lane.b32.xlu0 %v5675, 4
      %v5749 = vpop.permute.xlu0 %5748
      %5750 = vrot.lane.b32.xlu0 %v5676, 4
      %v5751 = vpop.permute.xlu0 %5750
      %5752 = vrot.lane.b32.xlu0 %v5677, 4
      %v5753 = vpop.permute.xlu0 %5752
      %5754 = vrot.lane.b32.xlu0 %v5678, 4
      %v5755 = vpop.permute.xlu0 %5754
      %5756 = vrot.lane.b32.xlu0 %v5679, 4
      %v5757 = vpop.permute.xlu0 %5756
      %5758 = vrot.lane.b32.xlu0 %v5680, 4
      %v5759 = vpop.permute.xlu0 %5758
      %5760 = vrot.lane.b32.xlu0 %v5681, 4
      %v5761 = vpop.permute.xlu0 %5760
      %5762 = vrot.lane.b32.xlu0 %v5682, 4
      %v5763 = vpop.permute.xlu0 %5762
      %5764 = vrot.lane.b32.xlu0 %v5683, 4
      %v5765 = vpop.permute.xlu0 %5764
      %5766 = vrot.lane.b32.xlu0 %v5684, 4
      %v5767 = vpop.permute.xlu0 %5766
      %5768 = vrot.lane.b32.xlu0 %v5685, 4
      %v5769 = vpop.permute.xlu0 %5768
      %5770 = vrot.lane.b32.xlu0 %v5686, 4
      %v5771 = vpop.permute.xlu0 %5770
      %5772 = vrot.lane.b32.xlu0 %v5687, 4
      %v5773 = vpop.permute.xlu0 %5772
      %5774 = vrot.lane.b32.xlu0 %v5688, 4
      %v5775 = vpop.permute.xlu0 %5774
      %5776 = vrot.lane.b32.xlu0 %v5689, 4
      %v5777 = vpop.permute.xlu0 %5776
      %5778 = vrot.lane.b32.xlu0 %v5690, 4
      %v5779 = vpop.permute.xlu0 %5778
      %5780 = vrot.lane.b32.xlu0 %v5691, 4
      %v5781 = vpop.permute.xlu0 %5780
      %5782 = vrot.lane.b32.xlu0 %v5692, 4
      %v5783 = vpop.permute.xlu0 %5782
      %5784 = vrot.lane.b32.xlu0 %v5693, 4
      %v5785 = vpop.permute.xlu0 %5784
      %5786 = vrot.lane.b32.xlu0 %v5694, 4
      %v5787 = vpop.permute.xlu0 %5786
      %5788 = vrot.lane.b32.xlu0 %v5695, 4
      %v5789 = vpop.permute.xlu0 %5788
      %5790 = vrot.lane.b32.xlu0 %v5696, 4
      %v5791 = vpop.permute.xlu0 %5790
      %5792 = vrot.lane.b32.xlu0 %v5697, 4
      %v5793 = vpop.permute.xlu0 %5792
      %v5826 = vsel %vm797, %v647, %v5731
      %v5827 = vsel %vm797, %v648, %v5733
      %v5828 = vsel %vm797, %v649, %v5735
      %v5829 = vsel %vm797, %v650, %v5737
      %v5830 = vsel %vm797, %v651, %v5739
      %v5831 = vsel %vm797, %v652, %v5741
      %v5832 = vsel %vm797, %v653, %v5743
      %v5833 = vsel %vm797, %v654, %v5745
      %v5834 = vsel %vm797, %v655, %v5747
      %v5835 = vsel %vm797, %v656, %v5749
      %v5836 = vsel %vm797, %v657, %v5751
      %v5837 = vsel %vm797, %v658, %v5753
      %v5838 = vsel %vm797, %v659, %v5755
      %v5839 = vsel %vm797, %v660, %v5757
      %v5840 = vsel %vm797, %v661, %v5759
      %v5841 = vsel %vm797, %v662, %v5761
      %v5842 = vsel %vm797, %v663, %v5763
      %v5843 = vsel %vm797, %v664, %v5765
      %v5844 = vsel %vm797, %v665, %v5767
      %v5845 = vsel %vm797, %v666, %v5769
      %v5846 = vsel %vm797, %v667, %v5771
      %v5847 = vsel %vm797, %v668, %v5773
      %v5848 = vsel %vm797, %v669, %v5775
      %v5849 = vsel %vm797, %v670, %v5777
      %v5850 = vsel %vm797, %v671, %v5779
      %v5851 = vsel %vm797, %v672, %v5781
      %v5852 = vsel %vm797, %v673, %v5783
      %v5853 = vsel %vm797, %v674, %v5785
      %v5854 = vsel %vm797, %v675, %v5787
      %v5855 = vsel %vm797, %v676, %v5789
      %v5856 = vsel %vm797, %v677, %v5791
      %v5857 = vsel %vm797, %v678, %v5793
      %vm5858 = vcmask 97280
      %5859 = vst.msk [vmem:[%s526] sm:$0xff] %vm5858, %v5826
      %5860 = vst.msk [vmem:[%s526 + $0x8] sm:$0xff] %vm5858, %v5827
      %5861 = vst.msk [vmem:[%s526 + $0x10] sm:$0xff] %vm5858, %v5828
      %5862 = vst.msk [vmem:[%s526 + $0x18] sm:$0xff] %vm5858, %v5829
      %5863 = vst.msk [vmem:[%s526 + $0x20] sm:$0xff] %vm5858, %v5830
      %5864 = vst.msk [vmem:[%s526 + $0x28] sm:$0xff] %vm5858, %v5831
      %5865 = vst.msk [vmem:[%s526 + $0x30] sm:$0xff] %vm5858, %v5832
      %5866 = vst.msk [vmem:[%s526 + $0x38] sm:$0xff] %vm5858, %v5833
      %5867 = vst.msk [vmem:[%s526 + $0x40] sm:$0xff] %vm5858, %v5834
      %5868 = vst.msk [vmem:[%s526 + $0x48] sm:$0xff] %vm5858, %v5835
      %5869 = vst.msk [vmem:[%s526 + $0x50] sm:$0xff] %vm5858, %v5836
      %5870 = vst.msk [vmem:[%s526 + $0x58] sm:$0xff] %vm5858, %v5837
      %5871 = vst.msk [vmem:[%s526 + $0x60] sm:$0xff] %vm5858, %v5838
      %5872 = vst.msk [vmem:[%s526 + $0x68] sm:$0xff] %vm5858, %v5839
      %5873 = vst.msk [vmem:[%s526 + $0x70] sm:$0xff] %vm5858, %v5840
      %5874 = vst.msk [vmem:[%s526 + $0x78] sm:$0xff] %vm5858, %v5841
      %5875 = vst.msk [vmem:[%s526 + $0x80] sm:$0xff] %vm5858, %v5842
      %5876 = vst.msk [vmem:[%s526 + $0x88] sm:$0xff] %vm5858, %v5843
      %5877 = vst.msk [vmem:[%s526 + $0x90] sm:$0xff] %vm5858, %v5844
      %5878 = vst.msk [vmem:[%s526 + $0x98] sm:$0xff] %vm5858, %v5845
      %5879 = vst.msk [vmem:[%s526 + $0xa0] sm:$0xff] %vm5858, %v5846
      %5880 = vst.msk [vmem:[%s526 + $0xa8] sm:$0xff] %vm5858, %v5847
      %5881 = vst.msk [vmem:[%s526 + $0xb0] sm:$0xff] %vm5858, %v5848
      %5882 = vst.msk [vmem:[%s526 + $0xb8] sm:$0xff] %vm5858, %v5849
      %5883 = vst.msk [vmem:[%s526 + $0xc0] sm:$0xff] %vm5858, %v5850
      %5884 = vst.msk [vmem:[%s526 + $0xc8] sm:$0xff] %vm5858, %v5851
      %5885 = vst.msk [vmem:[%s526 + $0xd0] sm:$0xff] %vm5858, %v5852
      %5886 = vst.msk [vmem:[%s526 + $0xd8] sm:$0xff] %vm5858, %v5853
      %5887 = vst.msk [vmem:[%s526 + $0xe0] sm:$0xff] %vm5858, %v5854
      %5888 = vst.msk [vmem:[%s526 + $0xe8] sm:$0xff] %vm5858, %v5855
      %5889 = vst.msk [vmem:[%s526 + $0xf0] sm:$0xff] %vm5858, %v5856
      %5890 = vst.msk [vmem:[%s526 + $0xf8] sm:$0xff] %vm5858, %v5857
      %s5891 = smul.u32 16, %s26
      %p5892 = scmp.lt.s32.totalorder %s25, 1
      %s5893 = scalar_select %p5892, %s25, 1
      %p5894 = scmp.lt.s32.totalorder %s5891, 15
      %s5895 = scalar_select %p5894, %s5891, 15
      %s5896 = smul.addr %s5895, 2
      %s5897 = smul.addr %s5893, 32
      %s5898 = sadd.s32 %s5896, %s5897
      %s5899 = smul.addr %s5898, 8
      %s5900 = scalar_lea.vmem %s10, %s5899
      // Predicated region
      $region65: #{bottleneck_forward.1} parent=59 // pred_check
        %p5901 = pneg %p300
      $region66: #{bottleneck_forward.1} parent=59 // pred_check_branch
        %5903 = sbr.rel (%p5901) target = $region68
      $region67: #{bottleneck_forward.1} parent=59 // pred_region
        %s5904 = smul.u32 16, %s26
      $region68: #{bottleneck_forward.1} parent=59 // pred_fallthru
        _
    $region60: #{bottleneck_forward.1} parent=5 // pred_fallthru
      _
    %p5905 = scmp.le.s32.totalorder 2, %s16
    // Predicated region
    $region69: #{bottleneck_forward.1} parent=5 // pred_check
      %p5906 = pneg %p5905
    $region70: #{bottleneck_forward.1} parent=5 // pred_check_branch
      %5908 = sbr.rel (%p5906) target = $region72
    $region71: #{bottleneck_forward.1} parent=5 // pred_region
      %s5909 = ssub.s32 %s16, 2
      // Predicated region
      $region73: #{bottleneck_forward.1} parent=71 // pred_check
        %p5910 = pneg %p306
      $region74: #{bottleneck_forward.1} parent=71 // pred_check_branch
        %5912 = sbr.rel (%p5910) target = $region76
      $region75: #{bottleneck_forward.1} parent=71 // pred_region
        %s5913 = smul.u32 16, %s28
        %p5914 = scmp.lt.s32.totalorder %s27, 1
        %s5915 = scalar_select %p5914, %s27, 1
        %p5916 = scmp.lt.s32.totalorder %s5913, 15
        %s5917 = scalar_select %p5916, %s5913, 15
        %s5918 = smul.addr %s5917, 2
        %s5919 = smul.addr %s5915, 32
        %s5920 = sadd.s32 %s5918, %s5919
        %s5921 = smul.addr %s5920, 8
        %s5922 = scalar_lea.vmem %s10, %s5921
      $region76: #{bottleneck_forward.1} parent=71 // pred_fallthru
        _
    $region72: #{bottleneck_forward.1} parent=5 // pred_fallthru
      _
  $region6: #{bottleneck_forward.1} parent=0 // loop_footer
    %s20 = sadd.s32 1, %s16
  $region7: #{bottleneck_forward.1} parent=0 // loop_footer_branch
    %15 = sbr.rel target = $region3
  $region8: #{bottleneck_forward.1} parent=0 // loop_exit
    _

</llo_original>
